<compile_context>
chip_gen: v7x
topology: tpu7x:2x2x1
jax: 0.10.0
libtpu: 0.0.40
codegen_flags: <defaults>
</compile_context>

<pallas_src>
import numpy as np

import jax
import jax.numpy as jnp
from jax import lax
from jax.experimental import pallas as pl
from jax.experimental.pallas import tpu as pltpu

BN_EPS = 1e-5


def _expand_convT_weight(w, L, stride):
    """Fold ConvTranspose1d's static overlap-add (col2im) into the weight.

    w: (Cin, Cout, K) PyTorch ConvTranspose1d weight (padding=0, out_pad=0).
    Returns W_big (L*Cin, Lout*Cout) such that for x_flat (N, L*Cin) indexed by
    l*Cin+ci, y_flat = x_flat @ W_big (indexed by p*Cout+co) equals the
    transposed-conv output.
    """
    Cin, Cout, K = w.shape
    Lout = (L - 1) * stride + K
    w_np = np.asarray(w, dtype=np.float32)
    Wb = np.zeros((L * Cin, Lout * Cout), dtype=np.float32)
    for l in range(L):
        for k in range(K):
            p = l * stride + k
            Wb[l * Cin:(l + 1) * Cin, p * Cout:(p + 1) * Cout] += w_np[:, :, k]
    return Wb, Lout


def _make_pool(Lout, Cout):
    """Pool matrix P (Lout*Cout, Cout): P[p*Cout+c, c] = 1.

    cs(1, Lout*Cout) @ P      -> per-channel sum over positions.
    sc(1, Cout)      @ P^T    -> broadcast back to the flat layout.
    Values are exactly representable in bf16.
    """
    eye = np.eye(Cout, dtype=np.float32)
    return np.concatenate([eye] * Lout, axis=0)


def init_generator_params(key, z_dim=32, im_chan=1, hidden_dim=64):
    """Parameters matching the PyTorch module's layer shapes.

    Weight expansion (col2im folding), bf16 casting, bias tiling, gamma/beta
    shaping and pool-matrix construction are all done ONCE here.
    """
    cfg = [
        # (Cin,            Cout,           K, stride, final)
        (z_dim,            hidden_dim * 4, 3, 2, False),
        (hidden_dim * 4,   hidden_dim * 2, 4, 1, False),
        (hidden_dim * 2,   hidden_dim,     3, 2, False),
        (hidden_dim,       im_chan,        4, 2, True),
    ]
    params = []
    L = 1  # PyTorch: noise.view(N, z_dim, 1, 1) -> spatial length 1
    for (cin, cout, k, stride, final) in cfg:
        key, kw, kb = jax.random.split(key, 3)
        scale = 1.0 / float(np.sqrt(cin * k))
        w = scale * jax.random.normal(kw, (cin, cout, k), dtype=jnp.float32)
        b = scale * jax.random.normal(kb, (cout,), dtype=jnp.float32)
        Wb_np, Lout = _expand_convT_weight(w, L, stride)
        bn = not final
        # Cout multiple of 128 -> per-position slices are lane-aligned & cheap;
        # otherwise (Cout=64 block) route the reduce/broadcast through the MXU.
        use_pool = bn and (cout % 128 != 0)
        p = dict(
            # bf16 weights: halves HBM->VMEM DMA and uses the bf16 MXU path.
            Wb=jnp.asarray(Wb_np, dtype=jnp.bfloat16),
            # bias pre-tiled to the flat (position*channel) layout, f32.
            b=jnp.tile(b.reshape(1, cout), (1, Lout)),
            Lout=Lout, Cout=cout, bn=bn, use_pool=use_pool,
        )
        if bn:
            p["gamma"] = jnp.ones((1, cout), jnp.float32)   # BatchNorm1d defaults
            p["beta"] = jnp.zeros((1, cout), jnp.float32)
        if use_pool:
            P = _make_pool(Lout, cout)
            p["pool"] = jnp.asarray(P, dtype=jnp.bfloat16)      # (Lout*Cout, Cout)
            p["pool_t"] = jnp.asarray(P.T, dtype=jnp.bfloat16)  # (Cout, Lout*Cout)
        params.append(p)
        L = Lout
    return params


def _tree_sum(parts):
    """Pairwise tree reduce of a list of equal-shape arrays (trace-time)."""
    while len(parts) > 1:
        nxt = []
        for j in range(0, len(parts) - 1, 2):
            nxt.append(parts[j] + parts[j + 1])
        if len(parts) % 2:
            nxt.append(parts[-1])
        parts = nxt
    return parts[0]


def _make_fused_generator_kernel(N, block_cfg):
    """block_cfg: list of (Lout, Cout, bn, use_pool).  One kernel for the whole
    generator; intermediate activations stay resident in VMEM/vregs."""

    def kernel(x_ref, *refs):
        y_ref = refs[-1]
        prefs = refs[:-1]
        i = 0
        x = x_ref[...].astype(jnp.float32)                       # (N, L*Cin) flat
        for (Lout, Cout, bn, use_pool) in block_cfg:
            Wb = prefs[i][...]; i += 1                           # (L*Cin, W) bf16
            b = prefs[i][...]; i += 1                            # (1, W) f32
            # ConvTranspose1d == single bf16 MXU matmul (col2im folded into Wb)
            # with f32 accumulation, + bias.
            y = jnp.dot(x.astype(jnp.bfloat16), Wb,
                        preferred_element_type=jnp.float32) + b  # (N, W) f32
            if bn:
                gamma = prefs[i][...]; i += 1                    # (1, Cout) f32
                beta = prefs[i][...]; i += 1                     # (1, Cout) f32
                inv_cnt = 1.0 / float(N * Lout)
                # BatchNorm1d, training-mode batch stats over (N, Lout) per
                # channel; single fused pass (E[x], E[x^2]), all stats in f32.
                cs = jnp.sum(y, axis=0, keepdims=True)           # (1, W)
                sqs = jnp.sum(y * y, axis=0, keepdims=True)      # (1, W)
                if use_pool:
                    # Lane-misaligned Cout: do the per-channel reduce and the
                    # flat-layout broadcast as tiny MXU matmuls (MXU is idle).
                    pool = prefs[i][...].astype(jnp.float32); i += 1    # (W, Cout)
                    pool_t = prefs[i][...].astype(jnp.float32); i += 1  # (Cout, W)
                    stats = jnp.concatenate([cs, sqs], axis=0)          # (2, W)
                    st_ch = jnp.dot(stats, pool,
                                    preferred_element_type=jnp.float32)  # (2, Cout)
                    mean = st_ch[0:1, :] * inv_cnt
                    var = st_ch[1:2, :] * inv_cnt - mean * mean   # biased, as PT fwd
                    sc = gamma * lax.rsqrt(var + BN_EPS)
                    sh = beta - mean * sc
                    aff = jnp.concatenate([sc, sh], axis=0)       # (2, Cout)
                    aff_f = jnp.dot(aff, pool_t,
                                    preferred_element_type=jnp.float32)  # (2, W)
                    y = jnp.maximum(y * aff_f[0:1, :] + aff_f[1:2, :], 0.0)
                else:
                    # Lane-aligned Cout (multiple of 128): cheap slices, but use
                    # a pairwise tree reduce to shorten the dependent-add chain.
                    s_ch = _tree_sum([cs[:, p * Cout:(p + 1) * Cout]
                                      for p in range(Lout)])
                    sq_ch = _tree_sum([sqs[:, p * Cout:(p + 1) * Cout]
                                       for p in range(Lout)])
                    mean = s_ch * inv_cnt                         # (1, Cout)
                    var = sq_ch * inv_cnt - mean * mean
                    sc = gamma * lax.rsqrt(var + BN_EPS)          # (1, Cout)
                    sh = beta - mean * sc                         # (1, Cout)
                    sc_f = jnp.concatenate([sc] * Lout, axis=1)   # (1, W) aligned
                    sh_f = jnp.concatenate([sh] * Lout, axis=1)   # (1, W) aligned
                    y = jnp.maximum(y * sc_f + sh_f, 0.0)         # BN affine + ReLU
            x = y                                                 # stays (N, W)
        y_ref[...] = x.astype(y_ref.dtype)                        # lane-dense (N, 28)

    return kernel


def generator_forward(noise, params, z_dim=32):
    # PyTorch: noise.view(N, z_dim, 1, 1) -> interpreted as (N, z_dim, L=1);
    # flat channels-last input is therefore simply (N, z_dim).
    N = noise.shape[0]
    x = noise.reshape(N, z_dim).astype(jnp.float32)

    block_cfg = [(p["Lout"], p["Cout"], p["bn"], p["use_pool"]) for p in params]
    inputs = [x]
    for p in params:
        inputs.append(p["Wb"])
        inputs.append(p["b"])
        if p["bn"]:
            inputs.append(p["gamma"])
            inputs.append(p["beta"])
        if p["use_pool"]:
            inputs.append(p["pool"])
            inputs.append(p["pool_t"])

    Lout_f, Cout_f = params[-1]["Lout"], params[-1]["Cout"]
    kernel = _make_fused_generator_kernel(N, block_cfg)
    vmem = pl.BlockSpec(memory_space=pltpu.MemorySpace.VMEM)

    # Advisory cost estimate so XLA can schedule around the call.
    flops = sum(2 * N * int(p["Wb"].shape[0]) * int(p["Wb"].shape[1])
                for p in params)
    transcendentals = sum(int(p["Cout"]) for p in params if p["bn"])   # rsqrt
    bytes_accessed = (sum(int(np.prod(a.shape)) * a.dtype.itemsize for a in inputs)
                      + N * Lout_f * Cout_f * 4)

    y = pl.pallas_call(
        kernel,
        out_shape=jax.ShapeDtypeStruct((N, Lout_f * Cout_f), jnp.float32),
        in_specs=[vmem] * len(inputs),
        out_specs=vmem,
        cost_estimate=pl.CostEstimate(flops=flops,
                                      transcendentals=transcendentals,
                                      bytes_accessed=bytes_accessed),
    )(*inputs)
    # Back to PyTorch NCL layout (N, C_out, L_out); trivial since Cout_f == 1.
    return jnp.transpose(y.reshape(N, Lout_f, Cout_f), (0, 2, 1))


if __name__ == "__main__":
    key = jax.random.PRNGKey(0)
    kp, kn = jax.random.split(key)
    z_dim, im_chan, hidden_dim = 32, 1, 64
    batch = 2

    params = init_generator_params(kp, z_dim=z_dim, im_chan=im_chan,
                                   hidden_dim=hidden_dim)
    noise = jax.random.normal(kn, (batch, z_dim), dtype=jnp.float32)

    out = generator_forward(noise, params, z_dim=z_dim)
    out = jax.block_until_ready(out)

    # expected: (2, 1, 28)  [L: 1 -> 3 -> 6 -> 13 -> 28]
    assert out.shape == (batch, im_chan, 28), out.shape
    assert bool(jnp.all(jnp.isfinite(out)))
    print("KERNEL_OK")
</pallas_src>

<mosaic_0001>
module attributes {stable_mosaic.version = 11 : i64} {
  func.func @kernel(%arg0: memref<2x32xf32, #tpu.memory_space<vmem>>, %arg1: memref<32x768xbf16, #tpu.memory_space<vmem>>, %arg2: memref<1x768xf32, #tpu.memory_space<vmem>>, %arg3: memref<1x256xf32, #tpu.memory_space<vmem>>, %arg4: memref<1x256xf32, #tpu.memory_space<vmem>>, %arg5: memref<768x768xbf16, #tpu.memory_space<vmem>>, %arg6: memref<1x768xf32, #tpu.memory_space<vmem>>, %arg7: memref<1x128xf32, #tpu.memory_space<vmem>>, %arg8: memref<1x128xf32, #tpu.memory_space<vmem>>, %arg9: memref<768x832xbf16, #tpu.memory_space<vmem>>, %arg10: memref<1x832xf32, #tpu.memory_space<vmem>>, %arg11: memref<1x64xf32, #tpu.memory_space<vmem>>, %arg12: memref<1x64xf32, #tpu.memory_space<vmem>>, %arg13: memref<832x64xbf16, #tpu.memory_space<vmem>>, %arg14: memref<64x832xbf16, #tpu.memory_space<vmem>>, %arg15: memref<832x28xbf16, #tpu.memory_space<vmem>>, %arg16: memref<1x28xf32, #tpu.memory_space<vmem>>, %arg17: memref<2x28xf32, #tpu.memory_space<vmem>>) attributes {dimension_semantics = [], scalar_prefetch = 0 : i64, scratch_operands = 0 : i64, tpu.core_type = #tpu.core_type<tc>} {
    %c0 = arith.constant 0 : index
    %c0_0 = arith.constant 0 : index
    %0 = vector.load %arg0[%c0, %c0_0] : memref<2x32xf32, #tpu.memory_space<vmem>>, vector<2x32xf32>
    %c0_1 = arith.constant 0 : index
    %c0_2 = arith.constant 0 : index
    %1 = vector.load %arg1[%c0_1, %c0_2] : memref<32x768xbf16, #tpu.memory_space<vmem>>, vector<32x768xbf16>
    %c0_3 = arith.constant 0 : index
    %c0_4 = arith.constant 0 : index
    %2 = vector.load %arg2[%c0_3, %c0_4] : memref<1x768xf32, #tpu.memory_space<vmem>>, vector<1x768xf32>
    %3 = arith.truncf %0 : vector<2x32xf32> to vector<2x32xbf16>
    %cst = arith.constant dense<0.000000e+00> : vector<2x768xf32>
    %4 = tpu.matmul %3, %1, %cst {dimension_numbers = #tpu.dot_dimension_numbers<[1], [0], [0], [1], [0, 0, 1, 1], [], []>} : vector<2x32xbf16>, vector<32x768xbf16>, vector<2x768xf32> -> vector<2x768xf32>
    %5 = vector.broadcast %2 : vector<1x768xf32> to vector<2x768xf32>
    %6 = arith.addf %4, %5 : vector<2x768xf32>
    %c0_5 = arith.constant 0 : index
    %c0_6 = arith.constant 0 : index
    %7 = vector.load %arg3[%c0_5, %c0_6] : memref<1x256xf32, #tpu.memory_space<vmem>>, vector<1x256xf32>
    %c0_7 = arith.constant 0 : index
    %c0_8 = arith.constant 0 : index
    %8 = vector.load %arg4[%c0_7, %c0_8] : memref<1x256xf32, #tpu.memory_space<vmem>>, vector<1x256xf32>
    %cst_9 = arith.constant dense<0.000000e+00> : vector<768xf32>
    %9 = vector.multi_reduction <add>, %6, %cst_9 [0] : vector<2x768xf32> to vector<768xf32>
    %10 = vector.shape_cast %9 : vector<768xf32> to vector<1x768xf32>
    %11 = arith.mulf %6, %6 : vector<2x768xf32>
    %cst_10 = arith.constant dense<0.000000e+00> : vector<768xf32>
    %12 = vector.multi_reduction <add>, %11, %cst_10 [0] : vector<2x768xf32> to vector<768xf32>
    %13 = vector.shape_cast %12 : vector<768xf32> to vector<1x768xf32>
    %14 = vector.extract_strided_slice %10 {offsets = [0, 0], sizes = [1, 256], strides = [1, 1]} : vector<1x768xf32> to vector<1x256xf32>
    %15 = vector.extract_strided_slice %10 {offsets = [0, 256], sizes = [1, 256], strides = [1, 1]} : vector<1x768xf32> to vector<1x256xf32>
    %16 = vector.extract_strided_slice %10 {offsets = [0, 512], sizes = [1, 256], strides = [1, 1]} : vector<1x768xf32> to vector<1x256xf32>
    %17 = arith.addf %14, %15 : vector<1x256xf32>
    %18 = arith.addf %17, %16 : vector<1x256xf32>
    %19 = vector.extract_strided_slice %13 {offsets = [0, 0], sizes = [1, 256], strides = [1, 1]} : vector<1x768xf32> to vector<1x256xf32>
    %20 = vector.extract_strided_slice %13 {offsets = [0, 256], sizes = [1, 256], strides = [1, 1]} : vector<1x768xf32> to vector<1x256xf32>
    %21 = vector.extract_strided_slice %13 {offsets = [0, 512], sizes = [1, 256], strides = [1, 1]} : vector<1x768xf32> to vector<1x256xf32>
    %22 = arith.addf %19, %20 : vector<1x256xf32>
    %23 = arith.addf %22, %21 : vector<1x256xf32>
    %cst_11 = arith.constant 0.166666672 : f32
    %24 = vector.broadcast %cst_11 : f32 to vector<1x256xf32>
    %25 = arith.mulf %18, %24 : vector<1x256xf32>
    %cst_12 = arith.constant 0.166666672 : f32
    %26 = vector.broadcast %cst_12 : f32 to vector<1x256xf32>
    %27 = arith.mulf %23, %26 : vector<1x256xf32>
    %28 = arith.mulf %25, %25 : vector<1x256xf32>
    %29 = arith.subf %27, %28 : vector<1x256xf32>
    %cst_13 = arith.constant 9.99999974E-6 : f32
    %30 = vector.broadcast %cst_13 : f32 to vector<1x256xf32>
    %31 = arith.addf %29, %30 : vector<1x256xf32>
    %32 = math.rsqrt %31 : vector<1x256xf32>
    %33 = arith.mulf %7, %32 : vector<1x256xf32>
    %34 = arith.mulf %25, %33 : vector<1x256xf32>
    %35 = arith.subf %8, %34 : vector<1x256xf32>
    %36 = tpu.concatenate %33, %33, %33 in 1 : vector<1x256xf32>, vector<1x256xf32>, vector<1x256xf32> -> vector<1x768xf32>
    %37 = tpu.concatenate %35, %35, %35 in 1 : vector<1x256xf32>, vector<1x256xf32>, vector<1x256xf32> -> vector<1x768xf32>
    %38 = vector.broadcast %36 : vector<1x768xf32> to vector<2x768xf32>
    %39 = arith.mulf %6, %38 : vector<2x768xf32>
    %40 = vector.broadcast %37 : vector<1x768xf32> to vector<2x768xf32>
    %41 = arith.addf %39, %40 : vector<2x768xf32>
    %cst_14 = arith.constant 0.000000e+00 : f32
    %42 = vector.broadcast %cst_14 : f32 to vector<2x768xf32>
    %43 = arith.maximumf %41, %42 : vector<2x768xf32>
    %c0_15 = arith.constant 0 : index
    %c0_16 = arith.constant 0 : index
    %44 = vector.load %arg5[%c0_15, %c0_16] : memref<768x768xbf16, #tpu.memory_space<vmem>>, vector<768x768xbf16>
    %c0_17 = arith.constant 0 : index
    %c0_18 = arith.constant 0 : index
    %45 = vector.load %arg6[%c0_17, %c0_18] : memref<1x768xf32, #tpu.memory_space<vmem>>, vector<1x768xf32>
    %46 = arith.truncf %43 : vector<2x768xf32> to vector<2x768xbf16>
    %cst_19 = arith.constant dense<0.000000e+00> : vector<2x768xf32>
    %47 = tpu.matmul %46, %44, %cst_19 {dimension_numbers = #tpu.dot_dimension_numbers<[1], [0], [0], [1], [0, 0, 1, 1], [], []>} : vector<2x768xbf16>, vector<768x768xbf16>, vector<2x768xf32> -> vector<2x768xf32>
    %48 = vector.broadcast %45 : vector<1x768xf32> to vector<2x768xf32>
    %49 = arith.addf %47, %48 : vector<2x768xf32>
    %c0_20 = arith.constant 0 : index
    %c0_21 = arith.constant 0 : index
    %50 = vector.load %arg7[%c0_20, %c0_21] : memref<1x128xf32, #tpu.memory_space<vmem>>, vector<1x128xf32>
    %c0_22 = arith.constant 0 : index
    %c0_23 = arith.constant 0 : index
    %51 = vector.load %arg8[%c0_22, %c0_23] : memref<1x128xf32, #tpu.memory_space<vmem>>, vector<1x128xf32>
    %cst_24 = arith.constant dense<0.000000e+00> : vector<768xf32>
    %52 = vector.multi_reduction <add>, %49, %cst_24 [0] : vector<2x768xf32> to vector<768xf32>
    %53 = vector.shape_cast %52 : vector<768xf32> to vector<1x768xf32>
    %54 = arith.mulf %49, %49 : vector<2x768xf32>
    %cst_25 = arith.constant dense<0.000000e+00> : vector<768xf32>
    %55 = vector.multi_reduction <add>, %54, %cst_25 [0] : vector<2x768xf32> to vector<768xf32>
    %56 = vector.shape_cast %55 : vector<768xf32> to vector<1x768xf32>
    %57 = vector.extract_strided_slice %53 {offsets = [0, 0], sizes = [1, 128], strides = [1, 1]} : vector<1x768xf32> to vector<1x128xf32>
    %58 = vector.extract_strided_slice %53 {offsets = [0, 128], sizes = [1, 128], strides = [1, 1]} : vector<1x768xf32> to vector<1x128xf32>
    %59 = vector.extract_strided_slice %53 {offsets = [0, 256], sizes = [1, 128], strides = [1, 1]} : vector<1x768xf32> to vector<1x128xf32>
    %60 = vector.extract_strided_slice %53 {offsets = [0, 384], sizes = [1, 128], strides = [1, 1]} : vector<1x768xf32> to vector<1x128xf32>
    %61 = vector.extract_strided_slice %53 {offsets = [0, 512], sizes = [1, 128], strides = [1, 1]} : vector<1x768xf32> to vector<1x128xf32>
    %62 = vector.extract_strided_slice %53 {offsets = [0, 640], sizes = [1, 128], strides = [1, 1]} : vector<1x768xf32> to vector<1x128xf32>
    %63 = arith.addf %57, %58 : vector<1x128xf32>
    %64 = arith.addf %59, %60 : vector<1x128xf32>
    %65 = arith.addf %61, %62 : vector<1x128xf32>
    %66 = arith.addf %63, %64 : vector<1x128xf32>
    %67 = arith.addf %66, %65 : vector<1x128xf32>
    %68 = vector.extract_strided_slice %56 {offsets = [0, 0], sizes = [1, 128], strides = [1, 1]} : vector<1x768xf32> to vector<1x128xf32>
    %69 = vector.extract_strided_slice %56 {offsets = [0, 128], sizes = [1, 128], strides = [1, 1]} : vector<1x768xf32> to vector<1x128xf32>
    %70 = vector.extract_strided_slice %56 {offsets = [0, 256], sizes = [1, 128], strides = [1, 1]} : vector<1x768xf32> to vector<1x128xf32>
    %71 = vector.extract_strided_slice %56 {offsets = [0, 384], sizes = [1, 128], strides = [1, 1]} : vector<1x768xf32> to vector<1x128xf32>
    %72 = vector.extract_strided_slice %56 {offsets = [0, 512], sizes = [1, 128], strides = [1, 1]} : vector<1x768xf32> to vector<1x128xf32>
    %73 = vector.extract_strided_slice %56 {offsets = [0, 640], sizes = [1, 128], strides = [1, 1]} : vector<1x768xf32> to vector<1x128xf32>
    %74 = arith.addf %68, %69 : vector<1x128xf32>
    %75 = arith.addf %70, %71 : vector<1x128xf32>
    %76 = arith.addf %72, %73 : vector<1x128xf32>
    %77 = arith.addf %74, %75 : vector<1x128xf32>
    %78 = arith.addf %77, %76 : vector<1x128xf32>
    %cst_26 = arith.constant 0.0833333358 : f32
    %79 = vector.broadcast %cst_26 : f32 to vector<1x128xf32>
    %80 = arith.mulf %67, %79 : vector<1x128xf32>
    %cst_27 = arith.constant 0.0833333358 : f32
    %81 = vector.broadcast %cst_27 : f32 to vector<1x128xf32>
    %82 = arith.mulf %78, %81 : vector<1x128xf32>
    %83 = arith.mulf %80, %80 : vector<1x128xf32>
    %84 = arith.subf %82, %83 : vector<1x128xf32>
    %cst_28 = arith.constant 9.99999974E-6 : f32
    %85 = vector.broadcast %cst_28 : f32 to vector<1x128xf32>
    %86 = arith.addf %84, %85 : vector<1x128xf32>
    %87 = math.rsqrt %86 : vector<1x128xf32>
    %88 = arith.mulf %50, %87 : vector<1x128xf32>
    %89 = arith.mulf %80, %88 : vector<1x128xf32>
    %90 = arith.subf %51, %89 : vector<1x128xf32>
    %91 = tpu.concatenate %88, %88, %88, %88, %88, %88 in 1 : vector<1x128xf32>, vector<1x128xf32>, vector<1x128xf32>, vector<1x128xf32>, vector<1x128xf32>, vector<1x128xf32> -> vector<1x768xf32>
    %92 = tpu.concatenate %90, %90, %90, %90, %90, %90 in 1 : vector<1x128xf32>, vector<1x128xf32>, vector<1x128xf32>, vector<1x128xf32>, vector<1x128xf32>, vector<1x128xf32> -> vector<1x768xf32>
    %93 = vector.broadcast %91 : vector<1x768xf32> to vector<2x768xf32>
    %94 = arith.mulf %49, %93 : vector<2x768xf32>
    %95 = vector.broadcast %92 : vector<1x768xf32> to vector<2x768xf32>
    %96 = arith.addf %94, %95 : vector<2x768xf32>
    %cst_29 = arith.constant 0.000000e+00 : f32
    %97 = vector.broadcast %cst_29 : f32 to vector<2x768xf32>
    %98 = arith.maximumf %96, %97 : vector<2x768xf32>
    %c0_30 = arith.constant 0 : index
    %c0_31 = arith.constant 0 : index
    %99 = vector.load %arg9[%c0_30, %c0_31] : memref<768x832xbf16, #tpu.memory_space<vmem>>, vector<768x832xbf16>
    %c0_32 = arith.constant 0 : index
    %c0_33 = arith.constant 0 : index
    %100 = vector.load %arg10[%c0_32, %c0_33] : memref<1x832xf32, #tpu.memory_space<vmem>>, vector<1x832xf32>
    %101 = arith.truncf %98 : vector<2x768xf32> to vector<2x768xbf16>
    %cst_34 = arith.constant dense<0.000000e+00> : vector<2x832xf32>
    %102 = tpu.matmul %101, %99, %cst_34 {dimension_numbers = #tpu.dot_dimension_numbers<[1], [0], [0], [1], [0, 0, 1, 1], [], []>} : vector<2x768xbf16>, vector<768x832xbf16>, vector<2x832xf32> -> vector<2x832xf32>
    %103 = vector.broadcast %100 : vector<1x832xf32> to vector<2x832xf32>
    %104 = arith.addf %102, %103 : vector<2x832xf32>
    %c0_35 = arith.constant 0 : index
    %c0_36 = arith.constant 0 : index
    %105 = vector.load %arg11[%c0_35, %c0_36] : memref<1x64xf32, #tpu.memory_space<vmem>>, vector<1x64xf32>
    %c0_37 = arith.constant 0 : index
    %c0_38 = arith.constant 0 : index
    %106 = vector.load %arg12[%c0_37, %c0_38] : memref<1x64xf32, #tpu.memory_space<vmem>>, vector<1x64xf32>
    %cst_39 = arith.constant dense<0.000000e+00> : vector<832xf32>
    %107 = vector.multi_reduction <add>, %104, %cst_39 [0] : vector<2x832xf32> to vector<832xf32>
    %108 = vector.shape_cast %107 : vector<832xf32> to vector<1x832xf32>
    %109 = arith.mulf %104, %104 : vector<2x832xf32>
    %cst_40 = arith.constant dense<0.000000e+00> : vector<832xf32>
    %110 = vector.multi_reduction <add>, %109, %cst_40 [0] : vector<2x832xf32> to vector<832xf32>
    %111 = vector.shape_cast %110 : vector<832xf32> to vector<1x832xf32>
    %c0_41 = arith.constant 0 : index
    %c0_42 = arith.constant 0 : index
    %112 = vector.load %arg13[%c0_41, %c0_42] : memref<832x64xbf16, #tpu.memory_space<vmem>>, vector<832x64xbf16>
    %113 = arith.extf %112 : vector<832x64xbf16> to vector<832x64xf32>
    %c0_43 = arith.constant 0 : index
    %c0_44 = arith.constant 0 : index
    %114 = vector.load %arg14[%c0_43, %c0_44] : memref<64x832xbf16, #tpu.memory_space<vmem>>, vector<64x832xbf16>
    %115 = arith.extf %114 : vector<64x832xbf16> to vector<64x832xf32>
    %116 = tpu.concatenate %108, %111 in 0 : vector<1x832xf32>, vector<1x832xf32> -> vector<2x832xf32>
    %cst_45 = arith.constant dense<0.000000e+00> : vector<2x64xf32>
    %117 = tpu.matmul %116, %113, %cst_45 {dimension_numbers = #tpu.dot_dimension_numbers<[1], [0], [0], [1], [0, 0, 1, 1], [], []>} : vector<2x832xf32>, vector<832x64xf32>, vector<2x64xf32> -> vector<2x64xf32>
    %118 = vector.extract_strided_slice %117 {offsets = [0, 0], sizes = [1, 64], strides = [1, 1]} : vector<2x64xf32> to vector<1x64xf32>
    %cst_46 = arith.constant 0.0384615399 : f32
    %119 = vector.broadcast %cst_46 : f32 to vector<1x64xf32>
    %120 = arith.mulf %118, %119 : vector<1x64xf32>
    %121 = vector.extract_strided_slice %117 {offsets = [1, 0], sizes = [1, 64], strides = [1, 1]} : vector<2x64xf32> to vector<1x64xf32>
    %cst_47 = arith.constant 0.0384615399 : f32
    %122 = vector.broadcast %cst_47 : f32 to vector<1x64xf32>
    %123 = arith.mulf %121, %122 : vector<1x64xf32>
    %124 = arith.mulf %120, %120 : vector<1x64xf32>
    %125 = arith.subf %123, %124 : vector<1x64xf32>
    %cst_48 = arith.constant 9.99999974E-6 : f32
    %126 = vector.broadcast %cst_48 : f32 to vector<1x64xf32>
    %127 = arith.addf %125, %126 : vector<1x64xf32>
    %128 = math.rsqrt %127 : vector<1x64xf32>
    %129 = arith.mulf %105, %128 : vector<1x64xf32>
    %130 = arith.mulf %120, %129 : vector<1x64xf32>
    %131 = arith.subf %106, %130 : vector<1x64xf32>
    %132 = tpu.concatenate %129, %131 in 0 : vector<1x64xf32>, vector<1x64xf32> -> vector<2x64xf32>
    %cst_49 = arith.constant dense<0.000000e+00> : vector<2x832xf32>
    %133 = tpu.matmul %132, %115, %cst_49 {dimension_numbers = #tpu.dot_dimension_numbers<[1], [0], [0], [1], [0, 0, 1, 1], [], []>} : vector<2x64xf32>, vector<64x832xf32>, vector<2x832xf32> -> vector<2x832xf32>
    %134 = vector.extract_strided_slice %133 {offsets = [0, 0], sizes = [1, 832], strides = [1, 1]} : vector<2x832xf32> to vector<1x832xf32>
    %135 = vector.broadcast %134 : vector<1x832xf32> to vector<2x832xf32>
    %136 = arith.mulf %104, %135 : vector<2x832xf32>
    %137 = vector.extract_strided_slice %133 {offsets = [1, 0], sizes = [1, 832], strides = [1, 1]} : vector<2x832xf32> to vector<1x832xf32>
    %138 = vector.broadcast %137 : vector<1x832xf32> to vector<2x832xf32>
    %139 = arith.addf %136, %138 : vector<2x832xf32>
    %cst_50 = arith.constant 0.000000e+00 : f32
    %140 = vector.broadcast %cst_50 : f32 to vector<2x832xf32>
    %141 = arith.maximumf %139, %140 : vector<2x832xf32>
    %c0_51 = arith.constant 0 : index
    %c0_52 = arith.constant 0 : index
    %142 = vector.load %arg15[%c0_51, %c0_52] : memref<832x28xbf16, #tpu.memory_space<vmem>>, vector<832x28xbf16>
    %c0_53 = arith.constant 0 : index
    %c0_54 = arith.constant 0 : index
    %143 = vector.load %arg16[%c0_53, %c0_54] : memref<1x28xf32, #tpu.memory_space<vmem>>, vector<1x28xf32>
    %144 = arith.truncf %141 : vector<2x832xf32> to vector<2x832xbf16>
    %cst_55 = arith.constant dense<0.000000e+00> : vector<2x28xf32>
    %145 = tpu.matmul %144, %142, %cst_55 {dimension_numbers = #tpu.dot_dimension_numbers<[1], [0], [0], [1], [0, 0, 1, 1], [], []>} : vector<2x832xbf16>, vector<832x28xbf16>, vector<2x28xf32> -> vector<2x28xf32>
    %146 = vector.broadcast %143 : vector<1x28xf32> to vector<2x28xf32>
    %147 = arith.addf %145, %146 : vector<2x28xf32>
    %c0_56 = arith.constant 0 : index
    %c0_57 = arith.constant 0 : index
    %148 = vector.load %arg17[%c0_56, %c0_57] : memref<2x28xf32, #tpu.memory_space<vmem>>, vector<2x28xf32>
    tpu.vector_store %arg17[%c0_56, %c0_57], %147 {strides = array<i32>} : memref<2x28xf32, #tpu.memory_space<vmem>>, vector<2x28xf32>,
    return
  }
}

</mosaic_0001>

<llo_original>
// kernel: tpu_custom_call.1
$region0: #{tpu_custom_call.1}
  #allocation0 [shape = 'u32[]', space=smem, size = 0x4, offset = 0x4, fixed_abs, tag = 'smem constant byte address 0x4 - core index']
  #allocation1 [shape = 'u32[144,128]{1,0:T(1,128)}', space=vmem, size = 0x12000, scoped, tag = 'internal scratch']
  %s0 = inlined_call_operand.vmem [shape: f32[2,32], index: 0, kind: input, shape index: {}]
  %s1 = inlined_call_operand.vmem [shape: bf16[32,768], index: 1, kind: input, shape index: {}]
  %s2 = inlined_call_operand.vmem [shape: f32[1,768], index: 2, kind: input, shape index: {}]
  %s3 = inlined_call_operand.vmem [shape: f32[1,256], index: 3, kind: input, shape index: {}]
  %s4 = inlined_call_operand.vmem [shape: f32[1,256], index: 4, kind: input, shape index: {}]
  %s5 = inlined_call_operand.vmem [shape: bf16[768,768], index: 5, kind: input, shape index: {}]
  %s6 = inlined_call_operand.vmem [shape: f32[1,768], index: 6, kind: input, shape index: {}]
  %s7 = inlined_call_operand.vmem [shape: f32[1,128], index: 7, kind: input, shape index: {}]
  %s8 = inlined_call_operand.vmem [shape: f32[1,128], index: 8, kind: input, shape index: {}]
  %s9 = inlined_call_operand.vmem [shape: bf16[768,832], index: 9, kind: input, shape index: {}]
  %s10 = inlined_call_operand.vmem [shape: f32[1,832], index: 10, kind: input, shape index: {}]
  %s11 = inlined_call_operand.vmem [shape: f32[1,64], index: 11, kind: input, shape index: {}]
  %s12 = inlined_call_operand.vmem [shape: f32[1,64], index: 12, kind: input, shape index: {}]
  %s13 = inlined_call_operand.vmem [shape: bf16[832,64], index: 13, kind: input, shape index: {}]
  %s14 = inlined_call_operand.vmem [shape: bf16[64,832], index: 14, kind: input, shape index: {}]
  %s15 = inlined_call_operand.vmem [shape: bf16[832,28], index: 15, kind: input, shape index: {}]
  %s16 = inlined_call_operand.vmem [shape: f32[1,28], index: 16, kind: input, shape index: {}]
  %s17 = inlined_call_operand.hbm [shape: f32[2,28], index: 17, kind: output, shape index: {}]
  %s18 = sld [smem:[#allocation0]]
  $region78: #{tpu_custom_call.1} parent=0
    _
  %s20 = ssub.s32 1, %s18
  %s21 = scalar_select 0, %s20, %s18
  $region1: #{tpu_custom_call.1} parent=0
    #allocation2 [shape = 'u8[1024]{0}', space=vmem, size = 0x400, scoped, tag = 'output window, operand 0, single buffered']
    #allocation3 [shape = 's32[1]{0}', space=sflag, size = 0x4, scoped, tag = 'scoped memory for tpu_custom_call.1']
    %22 = vsyncpa [#allocation3], 0
    // Predicated region
    $region2: #{tpu_custom_call.1} parent=1 // pred_check
      _
    $region3: #{tpu_custom_call.1} parent=1 // pred_check_branch
      %24 = sbr.rel (0) target = $region5
    $region4: #{tpu_custom_call.1} parent=1 // pred_region
      _
    $region5: #{tpu_custom_call.1} parent=1 // pred_fallthru
      _
    // Predicated region
    $region6: #{tpu_custom_call.1} parent=1 // pred_check
      _
    $region7: #{tpu_custom_call.1} parent=1 // pred_check_branch
      %26 = sbr.rel (0) target = $region9
    $region8: #{tpu_custom_call.1} parent=1 // pred_region
      _
    $region9: #{tpu_custom_call.1} parent=1 // pred_fallthru
      _
    // Predicated region
    $region10: #{tpu_custom_call.1} parent=1 // pred_check
      _
    $region11: #{tpu_custom_call.1} parent=1 // pred_check_branch
      %28 = sbr.rel (0) target = $region13
    $region12: #{tpu_custom_call.1} parent=1 // pred_region
      _
    $region13: #{tpu_custom_call.1} parent=1 // pred_fallthru
      _
    // Predicated region
    $region14: #{tpu_custom_call.1} parent=1 // pred_check
      _
    $region15: #{tpu_custom_call.1} parent=1 // pred_check_branch
      %30 = sbr.rel (0) target = $region17
    $region16: #{tpu_custom_call.1} parent=1 // pred_region
      _
    $region17: #{tpu_custom_call.1} parent=1 // pred_fallthru
      _
    // Predicated region
    $region18: #{tpu_custom_call.1} parent=1 // pred_check
      _
    $region19: #{tpu_custom_call.1} parent=1 // pred_check_branch
      %32 = sbr.rel (0) target = $region21
    $region20: #{tpu_custom_call.1} parent=1 // pred_region
      _
    $region21: #{tpu_custom_call.1} parent=1 // pred_fallthru
      _
    // Predicated region
    $region22: #{tpu_custom_call.1} parent=1 // pred_check
      _
    $region23: #{tpu_custom_call.1} parent=1 // pred_check_branch
      %34 = sbr.rel (0) target = $region25
    $region24: #{tpu_custom_call.1} parent=1 // pred_region
      _
    $region25: #{tpu_custom_call.1} parent=1 // pred_fallthru
      _
    // Predicated region
    $region26: #{tpu_custom_call.1} parent=1 // pred_check
      _
    $region27: #{tpu_custom_call.1} parent=1 // pred_check_branch
      %36 = sbr.rel (0) target = $region29
    $region28: #{tpu_custom_call.1} parent=1 // pred_region
      _
    $region29: #{tpu_custom_call.1} parent=1 // pred_fallthru
      _
    // Predicated region
    $region30: #{tpu_custom_call.1} parent=1 // pred_check
      _
    $region31: #{tpu_custom_call.1} parent=1 // pred_check_branch
      %38 = sbr.rel (0) target = $region33
    $region32: #{tpu_custom_call.1} parent=1 // pred_region
      _
    $region33: #{tpu_custom_call.1} parent=1 // pred_fallthru
      _
    // Predicated region
    $region34: #{tpu_custom_call.1} parent=1 // pred_check
      _
    $region35: #{tpu_custom_call.1} parent=1 // pred_check_branch
      %40 = sbr.rel (0) target = $region37
    $region36: #{tpu_custom_call.1} parent=1 // pred_region
      _
    $region37: #{tpu_custom_call.1} parent=1 // pred_fallthru
      _
    // Predicated region
    $region38: #{tpu_custom_call.1} parent=1 // pred_check
      _
    $region39: #{tpu_custom_call.1} parent=1 // pred_check_branch
      %42 = sbr.rel (0) target = $region41
    $region40: #{tpu_custom_call.1} parent=1 // pred_region
      _
    $region41: #{tpu_custom_call.1} parent=1 // pred_fallthru
      _
    // Predicated region
    $region42: #{tpu_custom_call.1} parent=1 // pred_check
      _
    $region43: #{tpu_custom_call.1} parent=1 // pred_check_branch
      %44 = sbr.rel (0) target = $region45
    $region44: #{tpu_custom_call.1} parent=1 // pred_region
      _
    $region45: #{tpu_custom_call.1} parent=1 // pred_fallthru
      _
    // Predicated region
    $region46: #{tpu_custom_call.1} parent=1 // pred_check
      _
    $region47: #{tpu_custom_call.1} parent=1 // pred_check_branch
      %46 = sbr.rel (0) target = $region49
    $region48: #{tpu_custom_call.1} parent=1 // pred_region
      _
    $region49: #{tpu_custom_call.1} parent=1 // pred_fallthru
      _
    // Predicated region
    $region50: #{tpu_custom_call.1} parent=1 // pred_check
      _
    $region51: #{tpu_custom_call.1} parent=1 // pred_check_branch
      %48 = sbr.rel (0) target = $region53
    $region52: #{tpu_custom_call.1} parent=1 // pred_region
      _
    $region53: #{tpu_custom_call.1} parent=1 // pred_fallthru
      _
    // Predicated region
    $region54: #{tpu_custom_call.1} parent=1 // pred_check
      _
    $region55: #{tpu_custom_call.1} parent=1 // pred_check_branch
      %50 = sbr.rel (0) target = $region57
    $region56: #{tpu_custom_call.1} parent=1 // pred_region
      _
    $region57: #{tpu_custom_call.1} parent=1 // pred_fallthru
      _
    // Predicated region
    $region58: #{tpu_custom_call.1} parent=1 // pred_check
      _
    $region59: #{tpu_custom_call.1} parent=1 // pred_check_branch
      %52 = sbr.rel (0) target = $region61
    $region60: #{tpu_custom_call.1} parent=1 // pred_region
      _
    $region61: #{tpu_custom_call.1} parent=1 // pred_fallthru
      _
    // Predicated region
    $region62: #{tpu_custom_call.1} parent=1 // pred_check
      _
    $region63: #{tpu_custom_call.1} parent=1 // pred_check_branch
      %54 = sbr.rel (0) target = $region65
    $region64: #{tpu_custom_call.1} parent=1 // pred_region
      _
    $region65: #{tpu_custom_call.1} parent=1 // pred_fallthru
      _
    // Predicated region
    $region66: #{tpu_custom_call.1} parent=1 // pred_check
      _
    $region67: #{tpu_custom_call.1} parent=1 // pred_check_branch
      %56 = sbr.rel (0) target = $region69
    $region68: #{tpu_custom_call.1} parent=1 // pred_region
      _
    $region69: #{tpu_custom_call.1} parent=1 // pred_fallthru
      _
    %v58 = vld [vmem:[%s0] sm:$0x3]
    %v59 = vld [vmem:[%s1] sm:$0xff]
    %v60 = vld [vmem:[%s1 + $0x8] sm:$0xff]
    %v61 = vld [vmem:[%s1 + $0x10] sm:$0xff]
    %v62 = vld [vmem:[%s1 + $0x18] sm:$0xff]
    %v63 = vld [vmem:[%s1 + $0x20] sm:$0xff]
    %v64 = vld [vmem:[%s1 + $0x28] sm:$0xff]
    %v65 = vld [vmem:[%s1 + $0x30] sm:$0xff]
    %v66 = vld [vmem:[%s1 + $0x38] sm:$0xff]
    %v67 = vld [vmem:[%s1 + $0x40] sm:$0xff]
    %v68 = vld [vmem:[%s1 + $0x48] sm:$0xff]
    %v69 = vld [vmem:[%s1 + $0x50] sm:$0xff]
    %v70 = vld [vmem:[%s1 + $0x58] sm:$0xff]
    %v71 = vld [vmem:[%s2] sm:$0x3f]
    %v72 = vpack.c.bf16 %v58, %v58
    %v74 = vlaneseq
    %v75 = vshrl.u32 %v74, 7
    %v76 = vsub.s32 0, %v75
    %v77 = vrot.slane %v71, %v76
    %v78 = vlaneseq
    %v79 = vshrl.u32 %v78, 7
    %v80 = vsub.s32 1, %v79
    %v81 = vrot.slane %v71, %v80
    %v82 = vlaneseq
    %v83 = vshrl.u32 %v82, 7
    %v84 = vsub.s32 2, %v83
    %v85 = vrot.slane %v71, %v84
    %v86 = vlaneseq
    %v87 = vshrl.u32 %v86, 7
    %v88 = vsub.s32 3, %v87
    %v89 = vrot.slane %v71, %v88
    %v90 = vlaneseq
    %v91 = vshrl.u32 %v90, 7
    %v92 = vsub.s32 4, %v91
    %v93 = vrot.slane %v71, %v92
    %v94 = vlaneseq
    %v95 = vshrl.u32 %v94, 7
    %v96 = vsub.s32 5, %v95
    %v97 = vrot.slane %v71, %v96
    %v116 = vunpack.c.l.b16 %v59
    %v117 = vunpack.c.h.b16 %v59
    %v118 = vunpack.c.l.b16 %v60
    %v119 = vunpack.c.h.b16 %v60
    %v120 = vunpack.c.l.b16 %v61
    %v121 = vunpack.c.h.b16 %v61
    %v122 = vunpack.c.l.b16 %v62
    %v123 = vunpack.c.h.b16 %v62
    %v124 = vunpack.c.l.b16 %v63
    %v125 = vunpack.c.h.b16 %v63
    %v126 = vunpack.c.l.b16 %v64
    %v127 = vunpack.c.h.b16 %v64
    %v128 = vunpack.c.l.b16 %v65
    %v129 = vunpack.c.h.b16 %v65
    %v130 = vunpack.c.l.b16 %v66
    %v131 = vunpack.c.h.b16 %v66
    %v132 = vunpack.c.l.b16 %v67
    %v133 = vunpack.c.h.b16 %v67
    %v134 = vunpack.c.l.b16 %v68
    %v135 = vunpack.c.h.b16 %v68
    %v136 = vunpack.c.l.b16 %v69
    %v137 = vunpack.c.h.b16 %v69
    %v138 = vunpack.c.l.b16 %v70
    %v139 = vunpack.c.h.b16 %v70
    %v140 = vpack.c.b16 %v122, %v116
    %v141 = vpack.c.b16 %v123, %v117
    %v142 = vpack.c.b16 %v124, %v118
    %v143 = vpack.c.b16 %v125, %v119
    %v144 = vpack.c.b16 %v126, %v120
    %v145 = vpack.c.b16 %v127, %v121
    %v146 = vpack.c.b16 %v134, %v128
    %v147 = vpack.c.b16 %v135, %v129
    %v148 = vpack.c.b16 %v136, %v130
    %v149 = vpack.c.b16 %v137, %v131
    %v150 = vpack.c.b16 %v138, %v132
    %v151 = vpack.c.b16 %v139, %v133
    %vm164 = vcmask 261120
    %v166 = vsel %vm164, %v72, 0
    %168 = vmatprep.subr.bf16.mxu0 %v141
    %169 = vmatpush1.bf16.msra.mxu0 %v140
    %170 = vmatprep.subr.bf16.mxu0 %v147
    %171 = vmatpush1.bf16.msra.mxu0 %v146
    %172 = vmatprep.subr.bf16.mxu0 0
    %173 = vmatpush1.bf16.msra.mxu0 0
    %174 = vmatprep.subr.bf16.mxu0 0
    %175 = vmatpush1.bf16.msra.mxu0 0
    %176 = vmatprep.subr.bf16.mxu0 0
    %177 = vmatpush1.bf16.msra.mxu0 0
    %178 = vmatprep.subr.bf16.mxu0 0
    %179 = vmatpush1.bf16.msra.mxu0 0
    %180 = vmatprep.subr.bf16.mxu0 0
    %181 = vmatpush1.bf16.msra.mxu0 0
    %182 = vmatprep.subr.bf16.mxu0 0
    %183 = vmatpush1.bf16.msra.mxu0 0
    %184 = vmatprep.subr.bf16.mxu0 0
    %185 = vmatpush1.bf16.msra.mxu0 0
    %186 = vmatprep.subr.bf16.mxu0 0
    %187 = vmatpush1.bf16.msra.mxu0 0
    %188 = vmatprep.subr.bf16.mxu0 0
    %189 = vmatpush1.bf16.msra.mxu0 0
    %190 = vmatprep.subr.bf16.mxu0 0
    %191 = vmatpush1.bf16.msra.mxu0 0
    %192 = vmatprep.subr.bf16.mxu0 0
    %193 = vmatpush1.bf16.msra.mxu0 0
    %194 = vmatprep.subr.bf16.mxu0 0
    %195 = vmatpush1.bf16.msra.mxu0 0
    %196 = vmatprep.subr.bf16.mxu0 0
    %197 = vmatpush1.bf16.msra.mxu0 0
    %198 = vmatprep.subr.bf16.mxu0 0
    %199 = vmatpush1.bf16.msra.mxu0 0
    %200 = vmatprep.mubr.bf16.mxu0 0
    %201 = vmatmul.mubr.bf16.gmra.mrb[0].mxu0 %v166
    %v202 = vpop.f32.mrb[0].mxu0
    %v203 = vadd.f32 %v77, %v202
    %v204 = vpop.f32.mrb[0].mxu0
    %v205 = vadd.f32 %v81, %v204
    %v206 = vpop.f32.mrb[0].mxu0
    %v207 = vpop.f32.mrb[0].mxu0
    %208 = vdwg.mxu0
    %209 = vmatprep.subr.bf16.mxu0 %v143
    %210 = vmatpush1.bf16.msra.mxu0 %v142
    %211 = vmatprep.subr.bf16.mxu0 %v149
    %212 = vmatpush1.bf16.msra.mxu0 %v148
    %213 = vmatprep.subr.bf16.mxu0 0
    %214 = vmatpush1.bf16.msra.mxu0 0
    %215 = vmatprep.subr.bf16.mxu0 0
    %216 = vmatpush1.bf16.msra.mxu0 0
    %217 = vmatprep.subr.bf16.mxu0 0
    %218 = vmatpush1.bf16.msra.mxu0 0
    %219 = vmatprep.subr.bf16.mxu0 0
    %220 = vmatpush1.bf16.msra.mxu0 0
    %221 = vmatprep.subr.bf16.mxu0 0
    %222 = vmatpush1.bf16.msra.mxu0 0
    %223 = vmatprep.subr.bf16.mxu0 0
    %224 = vmatpush1.bf16.msra.mxu0 0
    %225 = vmatprep.subr.bf16.mxu0 0
    %226 = vmatpush1.bf16.msra.mxu0 0
    %227 = vmatprep.subr.bf16.mxu0 0
    %228 = vmatpush1.bf16.msra.mxu0 0
    %229 = vmatprep.subr.bf16.mxu0 0
    %230 = vmatpush1.bf16.msra.mxu0 0
    %231 = vmatprep.subr.bf16.mxu0 0
    %232 = vmatpush1.bf16.msra.mxu0 0
    %233 = vmatprep.subr.bf16.mxu0 0
    %234 = vmatpush1.bf16.msra.mxu0 0
    %235 = vmatprep.subr.bf16.mxu0 0
    %236 = vmatpush1.bf16.msra.mxu0 0
    %237 = vmatprep.subr.bf16.mxu0 0
    %238 = vmatpush1.bf16.msra.mxu0 0
    %239 = vmatprep.subr.bf16.mxu0 0
    %240 = vmatpush1.bf16.msra.mxu0 0
    %241 = vmatprep.mubr.bf16.mxu0 0
    %242 = vmatmul.mubr.bf16.gmra.mrb[0].mxu0 %v166
    %v243 = vpop.f32.mrb[0].mxu0
    %v244 = vadd.f32 %v85, %v243
    %v245 = vpop.f32.mrb[0].mxu0
    %v246 = vadd.f32 %v89, %v245
    %v247 = vpop.f32.mrb[0].mxu0
    %v248 = vpop.f32.mrb[0].mxu0
    %249 = vdwg.mxu0
    %250 = vmatprep.subr.bf16.mxu0 %v145
    %251 = vmatpush1.bf16.msra.mxu0 %v144
    %252 = vmatprep.subr.bf16.mxu0 %v151
    %253 = vmatpush1.bf16.msra.mxu0 %v150
    %254 = vmatprep.subr.bf16.mxu0 0
    %255 = vmatpush1.bf16.msra.mxu0 0
    %256 = vmatprep.subr.bf16.mxu0 0
    %257 = vmatpush1.bf16.msra.mxu0 0
    %258 = vmatprep.subr.bf16.mxu0 0
    %259 = vmatpush1.bf16.msra.mxu0 0
    %260 = vmatprep.subr.bf16.mxu0 0
    %261 = vmatpush1.bf16.msra.mxu0 0
    %262 = vmatprep.subr.bf16.mxu0 0
    %263 = vmatpush1.bf16.msra.mxu0 0
    %264 = vmatprep.subr.bf16.mxu0 0
    %265 = vmatpush1.bf16.msra.mxu0 0
    %266 = vmatprep.subr.bf16.mxu0 0
    %267 = vmatpush1.bf16.msra.mxu0 0
    %268 = vmatprep.subr.bf16.mxu0 0
    %269 = vmatpush1.bf16.msra.mxu0 0
    %270 = vmatprep.subr.bf16.mxu0 0
    %271 = vmatpush1.bf16.msra.mxu0 0
    %272 = vmatprep.subr.bf16.mxu0 0
    %273 = vmatpush1.bf16.msra.mxu0 0
    %274 = vmatprep.subr.bf16.mxu0 0
    %275 = vmatpush1.bf16.msra.mxu0 0
    %276 = vmatprep.subr.bf16.mxu0 0
    %277 = vmatpush1.bf16.msra.mxu0 0
    %278 = vmatprep.subr.bf16.mxu0 0
    %279 = vmatpush1.bf16.msra.mxu0 0
    %280 = vmatprep.subr.bf16.mxu0 0
    %281 = vmatpush1.bf16.msra.mxu0 0
    %282 = vmatprep.mubr.bf16.mxu0 0
    %283 = vmatmul.mubr.bf16.gmra.mrb[0].mxu0 %v166
    %v284 = vpop.f32.mrb[0].mxu0
    %v285 = vadd.f32 %v93, %v284
    %v286 = vpop.f32.mrb[0].mxu0
    %v287 = vadd.f32 %v97, %v286
    %v288 = vpop.f32.mrb[0].mxu0
    %v289 = vpop.f32.mrb[0].mxu0
    %290 = vdwg.mxu0
    %v291 = vld [vmem:[%s3] sm:$0x3]
    %v292 = vld [vmem:[%s4] sm:$0x3]
    %vm293 = vcmask 1041408
    %v294 = vsel %vm293, %v203, 0.0
    %v295 = vrot.slane %v294, 4
    %v296 = vadd.f32 %v294, %v295
    %v297 = vrot.slane %v296, 2
    %v298 = vadd.f32 %v296, %v297
    %v299 = vrot.slane %v298, 1
    %v300 = vadd.f32 %v298, %v299
    %v301 = vsel %vm293, %v205, 0.0
    %v302 = vrot.slane %v301, 4
    %v303 = vadd.f32 %v301, %v302
    %v304 = vrot.slane %v303, 2
    %v305 = vadd.f32 %v303, %v304
    %v306 = vrot.slane %v305, 1
    %v307 = vadd.f32 %v305, %v306
    %v308 = vsel %vm293, %v244, 0.0
    %v309 = vrot.slane %v308, 4
    %v310 = vadd.f32 %v308, %v309
    %v311 = vrot.slane %v310, 2
    %v312 = vadd.f32 %v310, %v311
    %v313 = vrot.slane %v312, 1
    %v314 = vadd.f32 %v312, %v313
    %v315 = vsel %vm293, %v246, 0.0
    %v316 = vrot.slane %v315, 4
    %v317 = vadd.f32 %v315, %v316
    %v318 = vrot.slane %v317, 2
    %v319 = vadd.f32 %v317, %v318
    %v320 = vrot.slane %v319, 1
    %v321 = vadd.f32 %v319, %v320
    %v322 = vsel %vm293, %v285, 0.0
    %v323 = vrot.slane %v322, 4
    %v324 = vadd.f32 %v322, %v323
    %v325 = vrot.slane %v324, 2
    %v326 = vadd.f32 %v324, %v325
    %v327 = vrot.slane %v326, 1
    %v328 = vadd.f32 %v326, %v327
    %v329 = vsel %vm293, %v287, 0.0
    %v330 = vrot.slane %v329, 4
    %v331 = vadd.f32 %v329, %v330
    %v332 = vrot.slane %v331, 2
    %v333 = vadd.f32 %v331, %v332
    %v334 = vrot.slane %v333, 1
    %v335 = vadd.f32 %v333, %v334
    %v336 = vmul.f32 %v203, %v203
    %v337 = vmul.f32 %v205, %v205
    %v338 = vmul.f32 %v244, %v244
    %v339 = vmul.f32 %v246, %v246
    %v340 = vmul.f32 %v285, %v285
    %v341 = vmul.f32 %v287, %v287
    %v342 = vsel %vm293, %v336, 0.0
    %v343 = vrot.slane %v342, 4
    %v344 = vadd.f32 %v342, %v343
    %v345 = vrot.slane %v344, 2
    %v346 = vadd.f32 %v344, %v345
    %v347 = vrot.slane %v346, 1
    %v348 = vadd.f32 %v346, %v347
    %v349 = vsel %vm293, %v337, 0.0
    %v350 = vrot.slane %v349, 4
    %v351 = vadd.f32 %v349, %v350
    %v352 = vrot.slane %v351, 2
    %v353 = vadd.f32 %v351, %v352
    %v354 = vrot.slane %v353, 1
    %v355 = vadd.f32 %v353, %v354
    %v356 = vsel %vm293, %v338, 0.0
    %v357 = vrot.slane %v356, 4
    %v358 = vadd.f32 %v356, %v357
    %v359 = vrot.slane %v358, 2
    %v360 = vadd.f32 %v358, %v359
    %v361 = vrot.slane %v360, 1
    %v362 = vadd.f32 %v360, %v361
    %v363 = vsel %vm293, %v339, 0.0
    %v364 = vrot.slane %v363, 4
    %v365 = vadd.f32 %v363, %v364
    %v366 = vrot.slane %v365, 2
    %v367 = vadd.f32 %v365, %v366
    %v368 = vrot.slane %v367, 1
    %v369 = vadd.f32 %v367, %v368
    %v370 = vsel %vm293, %v340, 0.0
    %v371 = vrot.slane %v370, 4
    %v372 = vadd.f32 %v370, %v371
    %v373 = vrot.slane %v372, 2
    %v374 = vadd.f32 %v372, %v373
    %v375 = vrot.slane %v374, 1
    %v376 = vadd.f32 %v374, %v375
    %v377 = vsel %vm293, %v341, 0.0
    %v378 = vrot.slane %v377, 4
    %v379 = vadd.f32 %v377, %v378
    %v380 = vrot.slane %v379, 2
    %v381 = vadd.f32 %v379, %v380
    %v382 = vrot.slane %v381, 1
    %v383 = vadd.f32 %v381, %v382
    %v384 = vadd.f32 %v300, %v314
    %v385 = vadd.f32 %v307, %v321
    %v386 = vadd.f32 %v384, %v328
    %v387 = vadd.f32 %v385, %v335
    %v388 = vadd.f32 %v348, %v362
    %v389 = vadd.f32 %v355, %v369
    %v390 = vadd.f32 %v388, %v376
    %v391 = vadd.f32 %v389, %v383
    %v392 = vmul.f32 %v386, 0.16666667
    %v393 = vmul.f32 %v387, 0.16666667
    %v394 = vmul.f32 %v390, 0.16666667
    %v395 = vmul.f32 %v391, 0.16666667
    %v396 = vmul.f32 %v392, %v392
    %v397 = vmul.f32 %v393, %v393
    %v398 = vsub.f32 %v394, %v396
    %v399 = vsub.f32 %v395, %v397
    %v400 = vadd.f32 %v398, 1e-05
    %v401 = vadd.f32 %v399, 1e-05
    %v402 = vrsqrt.pop %v400
    %v403 = vrsqrt.pop %v401
    %v406 = vcombine.low %v402, %v403
    %v408 = vunpack.c.l.s4 1966171168
    %v409 = vunpack.c.0.s8 %v408
    %v410 = vlaneseq
    %v411 = vshrl.u32 %v410, 7
    %v412 = vsub.s32 %v409, %v411
    %v413 = vrot.slane %v406, %v412
    %v415 = vunpack.c.l.s4 1966171168
    %v416 = vunpack.c.0.s8 %v415
    %v417 = vlaneseq
    %v418 = vshrl.u32 %v417, 7
    %v419 = vsub.s32 %v416, %v418
    %v420 = vrot.slane %v413, %v419
    %v422 = vmul.f32 %v291, %v420
    %v424 = vlaneseq
    %v425 = vshrl.u32 %v424, 7
    %v426 = vsub.s32 0, %v425
    %v427 = vrot.slane %v422, %v426
    %v428 = vlaneseq
    %v429 = vshrl.u32 %v428, 7
    %v430 = vsub.s32 1, %v429
    %v431 = vrot.slane %v422, %v430
    %v434 = vmul.f32 %v392, %v427
    %v435 = vmul.f32 %v393, %v431
    %v438 = vcombine.low %v434, %v435
    %v440 = vunpack.c.l.s4 1966171168
    %v441 = vunpack.c.0.s8 %v440
    %v442 = vlaneseq
    %v443 = vshrl.u32 %v442, 7
    %v444 = vsub.s32 %v441, %v443
    %v445 = vrot.slane %v438, %v444
    %v447 = vunpack.c.l.s4 1966171168
    %v448 = vunpack.c.0.s8 %v447
    %v449 = vlaneseq
    %v450 = vshrl.u32 %v449, 7
    %v451 = vsub.s32 %v448, %v450
    %v452 = vrot.slane %v445, %v451
    %v454 = vsub.f32 %v292, %v452
    %v456 = vlaneseq
    %v457 = vshrl.u32 %v456, 7
    %v458 = vsub.s32 0, %v457
    %v459 = vrot.slane %v454, %v458
    %v460 = vlaneseq
    %v461 = vshrl.u32 %v460, 7
    %v462 = vsub.s32 1, %v461
    %v463 = vrot.slane %v454, %v462
    %v466 = vlaneseq
    %v467 = vshrl.u32 %v466, 7
    %v468 = vsub.s32 0, %v467
    %v469 = vrot.slane %v427, %v468
    %v470 = vlaneseq
    %v471 = vshrl.u32 %v470, 7
    %v472 = vsub.s32 0, %v471
    %v473 = vrot.slane %v431, %v472
    %v474 = vmul.f32 %v203, %v469
    %v475 = vmul.f32 %v205, %v473
    %v476 = vmul.f32 %v244, %v469
    %v477 = vmul.f32 %v246, %v473
    %v478 = vmul.f32 %v285, %v469
    %v479 = vmul.f32 %v287, %v473
    %v480 = vlaneseq
    %v481 = vshrl.u32 %v480, 7
    %v482 = vsub.s32 0, %v481
    %v483 = vrot.slane %v459, %v482
    %v484 = vlaneseq
    %v485 = vshrl.u32 %v484, 7
    %v486 = vsub.s32 0, %v485
    %v487 = vrot.slane %v463, %v486
    %v488 = vadd.f32 %v474, %v483
    %v489 = vadd.f32 %v475, %v487
    %v490 = vadd.f32 %v476, %v483
    %v491 = vadd.f32 %v477, %v487
    %v492 = vadd.f32 %v478, %v483
    %v493 = vadd.f32 %v479, %v487
    %v494 = vmax.f32 %v488, 0.0
    %v495 = vmax.f32 %v489, 0.0
    %v496 = vmax.f32 %v490, 0.0
    %v497 = vmax.f32 %v491, 0.0
    %v498 = vmax.f32 %v492, 0.0
    %v499 = vmax.f32 %v493, 0.0
    %v500 = vld [vmem:[%s5] sm:$0xff]
    %v501 = vld [vmem:[%s5 + $0x8] sm:$0xff]
    %v502 = vld [vmem:[%s5 + $0x10] sm:$0xff]
    %v503 = vld [vmem:[%s5 + $0x18] sm:$0xff]
    %v504 = vld [vmem:[%s5 + $0x20] sm:$0xff]
    %v505 = vld [vmem:[%s5 + $0x28] sm:$0xff]
    %v506 = vld [vmem:[%s5 + $0x30] sm:$0xff]
    %v507 = vld [vmem:[%s5 + $0x38] sm:$0xff]
    %v508 = vld [vmem:[%s5 + $0x40] sm:$0xff]
    %v509 = vld [vmem:[%s5 + $0x48] sm:$0xff]
    %v510 = vld [vmem:[%s5 + $0x50] sm:$0xff]
    %v511 = vld [vmem:[%s5 + $0x58] sm:$0xff]
    %v512 = vld [vmem:[%s5 + $0x60] sm:$0xff]
    %v513 = vld [vmem:[%s5 + $0x68] sm:$0xff]
    %v514 = vld [vmem:[%s5 + $0x70] sm:$0xff]
    %v515 = vld [vmem:[%s5 + $0x78] sm:$0xff]
    %v516 = vld [vmem:[%s5 + $0x80] sm:$0xff]
    %v517 = vld [vmem:[%s5 + $0x88] sm:$0xff]
    %v518 = vld [vmem:[%s5 + $0x90] sm:$0xff]
    %v519 = vld [vmem:[%s5 + $0x98] sm:$0xff]
    %v520 = vld [vmem:[%s5 + $0xa0] sm:$0xff]
    %v521 = vld [vmem:[%s5 + $0xa8] sm:$0xff]
    %v522 = vld [vmem:[%s5 + $0xb0] sm:$0xff]
    %v523 = vld [vmem:[%s5 + $0xb8] sm:$0xff]
    %v524 = vld [vmem:[%s5 + $0xc0] sm:$0xff]
    %v525 = vld [vmem:[%s5 + $0xc8] sm:$0xff]
    %v526 = vld [vmem:[%s5 + $0xd0] sm:$0xff]
    %v527 = vld [vmem:[%s5 + $0xd8] sm:$0xff]
    %v528 = vld [vmem:[%s5 + $0xe0] sm:$0xff]
    %v529 = vld [vmem:[%s5 + $0xe8] sm:$0xff]
    %v530 = vld [vmem:[%s5 + $0xf0] sm:$0xff]
    %v531 = vld [vmem:[%s5 + $0xf8] sm:$0xff]
    %v532 = vld [vmem:[%s5 + $0x100] sm:$0xff]
    %v533 = vld [vmem:[%s5 + $0x108] sm:$0xff]
    %v534 = vld [vmem:[%s5 + $0x110] sm:$0xff]
    %v535 = vld [vmem:[%s5 + $0x118] sm:$0xff]
    %v536 = vld [vmem:[%s5 + $0x120] sm:$0xff]
    %v537 = vld [vmem:[%s5 + $0x128] sm:$0xff]
    %v538 = vld [vmem:[%s5 + $0x130] sm:$0xff]
    %v539 = vld [vmem:[%s5 + $0x138] sm:$0xff]
    %v540 = vld [vmem:[%s5 + $0x140] sm:$0xff]
    %v541 = vld [vmem:[%s5 + $0x148] sm:$0xff]
    %v542 = vld [vmem:[%s5 + $0x150] sm:$0xff]
    %v543 = vld [vmem:[%s5 + $0x158] sm:$0xff]
    %v544 = vld [vmem:[%s5 + $0x160] sm:$0xff]
    %v545 = vld [vmem:[%s5 + $0x168] sm:$0xff]
    %v546 = vld [vmem:[%s5 + $0x170] sm:$0xff]
    %v547 = vld [vmem:[%s5 + $0x178] sm:$0xff]
    %v548 = vld [vmem:[%s5 + $0x180] sm:$0xff]
    %v549 = vld [vmem:[%s5 + $0x188] sm:$0xff]
    %v550 = vld [vmem:[%s5 + $0x190] sm:$0xff]
    %v551 = vld [vmem:[%s5 + $0x198] sm:$0xff]
    %v552 = vld [vmem:[%s5 + $0x1a0] sm:$0xff]
    %v553 = vld [vmem:[%s5 + $0x1a8] sm:$0xff]
    %v554 = vld [vmem:[%s5 + $0x1b0] sm:$0xff]
    %v555 = vld [vmem:[%s5 + $0x1b8] sm:$0xff]
    %v556 = vld [vmem:[%s5 + $0x1c0] sm:$0xff]
    %v557 = vld [vmem:[%s5 + $0x1c8] sm:$0xff]
    %v558 = vld [vmem:[%s5 + $0x1d0] sm:$0xff]
    %v559 = vld [vmem:[%s5 + $0x1d8] sm:$0xff]
    %v560 = vld [vmem:[%s5 + $0x1e0] sm:$0xff]
    %v561 = vld [vmem:[%s5 + $0x1e8] sm:$0xff]
    %v562 = vld [vmem:[%s5 + $0x1f0] sm:$0xff]
    %v563 = vld [vmem:[%s5 + $0x1f8] sm:$0xff]
    %v564 = vld [vmem:[%s5 + $0x200] sm:$0xff]
    %v565 = vld [vmem:[%s5 + $0x208] sm:$0xff]
    %v566 = vld [vmem:[%s5 + $0x210] sm:$0xff]
    %v567 = vld [vmem:[%s5 + $0x218] sm:$0xff]
    %v568 = vld [vmem:[%s5 + $0x220] sm:$0xff]
    %v569 = vld [vmem:[%s5 + $0x228] sm:$0xff]
    %v570 = vld [vmem:[%s5 + $0x230] sm:$0xff]
    %v571 = vld [vmem:[%s5 + $0x238] sm:$0xff]
    %v572 = vld [vmem:[%s5 + $0x240] sm:$0xff]
    %v573 = vld [vmem:[%s5 + $0x248] sm:$0xff]
    %v574 = vld [vmem:[%s5 + $0x250] sm:$0xff]
    %v575 = vld [vmem:[%s5 + $0x258] sm:$0xff]
    %v576 = vld [vmem:[%s5 + $0x260] sm:$0xff]
    %v577 = vld [vmem:[%s5 + $0x268] sm:$0xff]
    %v578 = vld [vmem:[%s5 + $0x270] sm:$0xff]
    %v579 = vld [vmem:[%s5 + $0x278] sm:$0xff]
    %v580 = vld [vmem:[%s5 + $0x280] sm:$0xff]
    %v581 = vld [vmem:[%s5 + $0x288] sm:$0xff]
    %v582 = vld [vmem:[%s5 + $0x290] sm:$0xff]
    %v583 = vld [vmem:[%s5 + $0x298] sm:$0xff]
    %v584 = vld [vmem:[%s5 + $0x2a0] sm:$0xff]
    %v585 = vld [vmem:[%s5 + $0x2a8] sm:$0xff]
    %v586 = vld [vmem:[%s5 + $0x2b0] sm:$0xff]
    %v587 = vld [vmem:[%s5 + $0x2b8] sm:$0xff]
    %v588 = vld [vmem:[%s5 + $0x2c0] sm:$0xff]
    %v589 = vld [vmem:[%s5 + $0x2c8] sm:$0xff]
    %v590 = vld [vmem:[%s5 + $0x2d0] sm:$0xff]
    %v591 = vld [vmem:[%s5 + $0x2d8] sm:$0xff]
    %v592 = vld [vmem:[%s5 + $0x2e0] sm:$0xff]
    %v593 = vld [vmem:[%s5 + $0x2e8] sm:$0xff]
    %v594 = vld [vmem:[%s5 + $0x2f0] sm:$0xff]
    %v595 = vld [vmem:[%s5 + $0x2f8] sm:$0xff]
    %v596 = vld [vmem:[%s5 + $0x300] sm:$0xff]
    %v597 = vld [vmem:[%s5 + $0x308] sm:$0xff]
    %v598 = vld [vmem:[%s5 + $0x310] sm:$0xff]
    %v599 = vld [vmem:[%s5 + $0x318] sm:$0xff]
    %v600 = vld [vmem:[%s5 + $0x320] sm:$0xff]
    %v601 = vld [vmem:[%s5 + $0x328] sm:$0xff]
    %v602 = vld [vmem:[%s5 + $0x330] sm:$0xff]
    %v603 = vld [vmem:[%s5 + $0x338] sm:$0xff]
    %v604 = vld [vmem:[%s5 + $0x340] sm:$0xff]
    %v605 = vld [vmem:[%s5 + $0x348] sm:$0xff]
    %v606 = vld [vmem:[%s5 + $0x350] sm:$0xff]
    %v607 = vld [vmem:[%s5 + $0x358] sm:$0xff]
    %v608 = vld [vmem:[%s5 + $0x360] sm:$0xff]
    %v609 = vld [vmem:[%s5 + $0x368] sm:$0xff]
    %v610 = vld [vmem:[%s5 + $0x370] sm:$0xff]
    %v611 = vld [vmem:[%s5 + $0x378] sm:$0xff]
    %v612 = vld [vmem:[%s5 + $0x380] sm:$0xff]
    %v613 = vld [vmem:[%s5 + $0x388] sm:$0xff]
    %v614 = vld [vmem:[%s5 + $0x390] sm:$0xff]
    %v615 = vld [vmem:[%s5 + $0x398] sm:$0xff]
    %v616 = vld [vmem:[%s5 + $0x3a0] sm:$0xff]
    %v617 = vld [vmem:[%s5 + $0x3a8] sm:$0xff]
    %v618 = vld [vmem:[%s5 + $0x3b0] sm:$0xff]
    %v619 = vld [vmem:[%s5 + $0x3b8] sm:$0xff]
    %v620 = vld [vmem:[%s5 + $0x3c0] sm:$0xff]
    %v621 = vld [vmem:[%s5 + $0x3c8] sm:$0xff]
    %v622 = vld [vmem:[%s5 + $0x3d0] sm:$0xff]
    %v623 = vld [vmem:[%s5 + $0x3d8] sm:$0xff]
    %v624 = vld [vmem:[%s5 + $0x3e0] sm:$0xff]
    %v625 = vld [vmem:[%s5 + $0x3e8] sm:$0xff]
    %v626 = vld [vmem:[%s5 + $0x3f0] sm:$0xff]
    %v627 = vld [vmem:[%s5 + $0x3f8] sm:$0xff]
    %v628 = vld [vmem:[%s5 + $0x400] sm:$0xff]
    %v629 = vld [vmem:[%s5 + $0x408] sm:$0xff]
    %v630 = vld [vmem:[%s5 + $0x410] sm:$0xff]
    %v631 = vld [vmem:[%s5 + $0x418] sm:$0xff]
    %v632 = vld [vmem:[%s5 + $0x420] sm:$0xff]
    %v633 = vld [vmem:[%s5 + $0x428] sm:$0xff]
    %v634 = vld [vmem:[%s5 + $0x430] sm:$0xff]
    %v635 = vld [vmem:[%s5 + $0x438] sm:$0xff]
    %v636 = vld [vmem:[%s5 + $0x440] sm:$0xff]
    %v637 = vld [vmem:[%s5 + $0x448] sm:$0xff]
    %v638 = vld [vmem:[%s5 + $0x450] sm:$0xff]
    %v639 = vld [vmem:[%s5 + $0x458] sm:$0xff]
    %v640 = vld [vmem:[%s5 + $0x460] sm:$0xff]
    %v641 = vld [vmem:[%s5 + $0x468] sm:$0xff]
    %v642 = vld [vmem:[%s5 + $0x470] sm:$0xff]
    %v643 = vld [vmem:[%s5 + $0x478] sm:$0xff]
    %v644 = vld [vmem:[%s5 + $0x480] sm:$0xff]
    %v645 = vld [vmem:[%s5 + $0x488] sm:$0xff]
    %v646 = vld [vmem:[%s5 + $0x490] sm:$0xff]
    %v647 = vld [vmem:[%s5 + $0x498] sm:$0xff]
    %v648 = vld [vmem:[%s5 + $0x4a0] sm:$0xff]
    %v649 = vld [vmem:[%s5 + $0x4a8] sm:$0xff]
    %v650 = vld [vmem:[%s5 + $0x4b0] sm:$0xff]
    %v651 = vld [vmem:[%s5 + $0x4b8] sm:$0xff]
    %v652 = vld [vmem:[%s5 + $0x4c0] sm:$0xff]
    %v653 = vld [vmem:[%s5 + $0x4c8] sm:$0xff]
    %v654 = vld [vmem:[%s5 + $0x4d0] sm:$0xff]
    %v655 = vld [vmem:[%s5 + $0x4d8] sm:$0xff]
    %v656 = vld [vmem:[%s5 + $0x4e0] sm:$0xff]
    %v657 = vld [vmem:[%s5 + $0x4e8] sm:$0xff]
    %v658 = vld [vmem:[%s5 + $0x4f0] sm:$0xff]
    %v659 = vld [vmem:[%s5 + $0x4f8] sm:$0xff]
    %v660 = vld [vmem:[%s5 + $0x500] sm:$0xff]
    %v661 = vld [vmem:[%s5 + $0x508] sm:$0xff]
    %v662 = vld [vmem:[%s5 + $0x510] sm:$0xff]
    %v663 = vld [vmem:[%s5 + $0x518] sm:$0xff]
    %v664 = vld [vmem:[%s5 + $0x520] sm:$0xff]
    %v665 = vld [vmem:[%s5 + $0x528] sm:$0xff]
    %v666 = vld [vmem:[%s5 + $0x530] sm:$0xff]
    %v667 = vld [vmem:[%s5 + $0x538] sm:$0xff]
    %v668 = vld [vmem:[%s5 + $0x540] sm:$0xff]
    %v669 = vld [vmem:[%s5 + $0x548] sm:$0xff]
    %v670 = vld [vmem:[%s5 + $0x550] sm:$0xff]
    %v671 = vld [vmem:[%s5 + $0x558] sm:$0xff]
    %v672 = vld [vmem:[%s5 + $0x560] sm:$0xff]
    %v673 = vld [vmem:[%s5 + $0x568] sm:$0xff]
    %v674 = vld [vmem:[%s5 + $0x570] sm:$0xff]
    %v675 = vld [vmem:[%s5 + $0x578] sm:$0xff]
    %v676 = vld [vmem:[%s5 + $0x580] sm:$0xff]
    %v677 = vld [vmem:[%s5 + $0x588] sm:$0xff]
    %v678 = vld [vmem:[%s5 + $0x590] sm:$0xff]
    %v679 = vld [vmem:[%s5 + $0x598] sm:$0xff]
    %v680 = vld [vmem:[%s5 + $0x5a0] sm:$0xff]
    %v681 = vld [vmem:[%s5 + $0x5a8] sm:$0xff]
    %v682 = vld [vmem:[%s5 + $0x5b0] sm:$0xff]
    %v683 = vld [vmem:[%s5 + $0x5b8] sm:$0xff]
    %v684 = vld [vmem:[%s5 + $0x5c0] sm:$0xff]
    %v685 = vld [vmem:[%s5 + $0x5c8] sm:$0xff]
    %v686 = vld [vmem:[%s5 + $0x5d0] sm:$0xff]
    %v687 = vld [vmem:[%s5 + $0x5d8] sm:$0xff]
    %v688 = vld [vmem:[%s5 + $0x5e0] sm:$0xff]
    %v689 = vld [vmem:[%s5 + $0x5e8] sm:$0xff]
    %v690 = vld [vmem:[%s5 + $0x5f0] sm:$0xff]
    %v691 = vld [vmem:[%s5 + $0x5f8] sm:$0xff]
    %v692 = vld [vmem:[%s5 + $0x600] sm:$0xff]
    %v693 = vld [vmem:[%s5 + $0x608] sm:$0xff]
    %v694 = vld [vmem:[%s5 + $0x610] sm:$0xff]
    %v695 = vld [vmem:[%s5 + $0x618] sm:$0xff]
    %v696 = vld [vmem:[%s5 + $0x620] sm:$0xff]
    %v697 = vld [vmem:[%s5 + $0x628] sm:$0xff]
    %v698 = vld [vmem:[%s5 + $0x630] sm:$0xff]
    %v699 = vld [vmem:[%s5 + $0x638] sm:$0xff]
    %v700 = vld [vmem:[%s5 + $0x640] sm:$0xff]
    %v701 = vld [vmem:[%s5 + $0x648] sm:$0xff]
    %v702 = vld [vmem:[%s5 + $0x650] sm:$0xff]
    %v703 = vld [vmem:[%s5 + $0x658] sm:$0xff]
    %v704 = vld [vmem:[%s5 + $0x660] sm:$0xff]
    %v705 = vld [vmem:[%s5 + $0x668] sm:$0xff]
    %v706 = vld [vmem:[%s5 + $0x670] sm:$0xff]
    %v707 = vld [vmem:[%s5 + $0x678] sm:$0xff]
    %v708 = vld [vmem:[%s5 + $0x680] sm:$0xff]
    %v709 = vld [vmem:[%s5 + $0x688] sm:$0xff]
    %v710 = vld [vmem:[%s5 + $0x690] sm:$0xff]
    %v711 = vld [vmem:[%s5 + $0x698] sm:$0xff]
    %v712 = vld [vmem:[%s5 + $0x6a0] sm:$0xff]
    %v713 = vld [vmem:[%s5 + $0x6a8] sm:$0xff]
    %v714 = vld [vmem:[%s5 + $0x6b0] sm:$0xff]
    %v715 = vld [vmem:[%s5 + $0x6b8] sm:$0xff]
    %v716 = vld [vmem:[%s5 + $0x6c0] sm:$0xff]
    %v717 = vld [vmem:[%s5 + $0x6c8] sm:$0xff]
    %v718 = vld [vmem:[%s5 + $0x6d0] sm:$0xff]
    %v719 = vld [vmem:[%s5 + $0x6d8] sm:$0xff]
    %v720 = vld [vmem:[%s5 + $0x6e0] sm:$0xff]
    %v721 = vld [vmem:[%s5 + $0x6e8] sm:$0xff]
    %v722 = vld [vmem:[%s5 + $0x6f0] sm:$0xff]
    %v723 = vld [vmem:[%s5 + $0x6f8] sm:$0xff]
    %v724 = vld [vmem:[%s5 + $0x700] sm:$0xff]
    %v725 = vld [vmem:[%s5 + $0x708] sm:$0xff]
    %v726 = vld [vmem:[%s5 + $0x710] sm:$0xff]
    %v727 = vld [vmem:[%s5 + $0x718] sm:$0xff]
    %v728 = vld [vmem:[%s5 + $0x720] sm:$0xff]
    %v729 = vld [vmem:[%s5 + $0x728] sm:$0xff]
    %v730 = vld [vmem:[%s5 + $0x730] sm:$0xff]
    %v731 = vld [vmem:[%s5 + $0x738] sm:$0xff]
    %v732 = vld [vmem:[%s5 + $0x740] sm:$0xff]
    %v733 = vld [vmem:[%s5 + $0x748] sm:$0xff]
    %v734 = vld [vmem:[%s5 + $0x750] sm:$0xff]
    %v735 = vld [vmem:[%s5 + $0x758] sm:$0xff]
    %v736 = vld [vmem:[%s5 + $0x760] sm:$0xff]
    %v737 = vld [vmem:[%s5 + $0x768] sm:$0xff]
    %v738 = vld [vmem:[%s5 + $0x770] sm:$0xff]
    %v739 = vld [vmem:[%s5 + $0x778] sm:$0xff]
    %v740 = vld [vmem:[%s5 + $0x780] sm:$0xff]
    %v741 = vld [vmem:[%s5 + $0x788] sm:$0xff]
    %v742 = vld [vmem:[%s5 + $0x790] sm:$0xff]
    %v743 = vld [vmem:[%s5 + $0x798] sm:$0xff]
    %v744 = vld [vmem:[%s5 + $0x7a0] sm:$0xff]
    %v745 = vld [vmem:[%s5 + $0x7a8] sm:$0xff]
    %v746 = vld [vmem:[%s5 + $0x7b0] sm:$0xff]
    %v747 = vld [vmem:[%s5 + $0x7b8] sm:$0xff]
    %v748 = vld [vmem:[%s5 + $0x7c0] sm:$0xff]
    %v749 = vld [vmem:[%s5 + $0x7c8] sm:$0xff]
    %v750 = vld [vmem:[%s5 + $0x7d0] sm:$0xff]
    %v751 = vld [vmem:[%s5 + $0x7d8] sm:$0xff]
    %v752 = vld [vmem:[%s5 + $0x7e0] sm:$0xff]
    %v753 = vld [vmem:[%s5 + $0x7e8] sm:$0xff]
    %v754 = vld [vmem:[%s5 + $0x7f0] sm:$0xff]
    %v755 = vld [vmem:[%s5 + $0x7f8] sm:$0xff]
    %v756 = vld [vmem:[%s5 + $0x800] sm:$0xff]
    %v757 = vld [vmem:[%s5 + $0x808] sm:$0xff]
    %v758 = vld [vmem:[%s5 + $0x810] sm:$0xff]
    %v759 = vld [vmem:[%s5 + $0x818] sm:$0xff]
    %v760 = vld [vmem:[%s5 + $0x820] sm:$0xff]
    %v761 = vld [vmem:[%s5 + $0x828] sm:$0xff]
    %v762 = vld [vmem:[%s5 + $0x830] sm:$0xff]
    %v763 = vld [vmem:[%s5 + $0x838] sm:$0xff]
    %v764 = vld [vmem:[%s5 + $0x840] sm:$0xff]
    %v765 = vld [vmem:[%s5 + $0x848] sm:$0xff]
    %v766 = vld [vmem:[%s5 + $0x850] sm:$0xff]
    %v767 = vld [vmem:[%s5 + $0x858] sm:$0xff]
    %v768 = vld [vmem:[%s5 + $0x860] sm:$0xff]
    %v769 = vld [vmem:[%s5 + $0x868] sm:$0xff]
    %v770 = vld [vmem:[%s5 + $0x870] sm:$0xff]
    %v771 = vld [vmem:[%s5 + $0x878] sm:$0xff]
    %v772 = vld [vmem:[%s5 + $0x880] sm:$0xff]
    %v773 = vld [vmem:[%s5 + $0x888] sm:$0xff]
    %v774 = vld [vmem:[%s5 + $0x890] sm:$0xff]
    %v775 = vld [vmem:[%s5 + $0x898] sm:$0xff]
    %v776 = vld [vmem:[%s5 + $0x8a0] sm:$0xff]
    %v777 = vld [vmem:[%s5 + $0x8a8] sm:$0xff]
    %v778 = vld [vmem:[%s5 + $0x8b0] sm:$0xff]
    %v779 = vld [vmem:[%s5 + $0x8b8] sm:$0xff]
    %v780 = vld [vmem:[%s5 + $0x8c0] sm:$0xff]
    %v781 = vld [vmem:[%s5 + $0x8c8] sm:$0xff]
    %v782 = vld [vmem:[%s5 + $0x8d0] sm:$0xff]
    %v783 = vld [vmem:[%s5 + $0x8d8] sm:$0xff]
    %v784 = vld [vmem:[%s5 + $0x8e0] sm:$0xff]
    %v785 = vld [vmem:[%s5 + $0x8e8] sm:$0xff]
    %v786 = vld [vmem:[%s5 + $0x8f0] sm:$0xff]
    %v787 = vld [vmem:[%s5 + $0x8f8] sm:$0xff]
    %v788 = vld [vmem:[%s6] sm:$0x3f]
    %v789 = vpack.c.bf16 %v494, %v494
    %v790 = vpack.c.bf16 %v495, %v495
    %v791 = vpack.c.bf16 %v496, %v496
    %v792 = vpack.c.bf16 %v497, %v497
    %v793 = vpack.c.bf16 %v498, %v498
    %v794 = vpack.c.bf16 %v499, %v499
    %v796 = vlaneseq
    %v797 = vshrl.u32 %v796, 7
    %v798 = vsub.s32 0, %v797
    %v799 = vrot.slane %v788, %v798
    %v800 = vlaneseq
    %v801 = vshrl.u32 %v800, 7
    %v802 = vsub.s32 1, %v801
    %v803 = vrot.slane %v788, %v802
    %v804 = vlaneseq
    %v805 = vshrl.u32 %v804, 7
    %v806 = vsub.s32 2, %v805
    %v807 = vrot.slane %v788, %v806
    %v808 = vlaneseq
    %v809 = vshrl.u32 %v808, 7
    %v810 = vsub.s32 3, %v809
    %v811 = vrot.slane %v788, %v810
    %v812 = vlaneseq
    %v813 = vshrl.u32 %v812, 7
    %v814 = vsub.s32 4, %v813
    %v815 = vrot.slane %v788, %v814
    %v816 = vlaneseq
    %v817 = vshrl.u32 %v816, 7
    %v818 = vsub.s32 5, %v817
    %v819 = vrot.slane %v788, %v818
    %v1114 = vunpack.c.l.b16 %v500
    %v1115 = vunpack.c.h.b16 %v500
    %v1116 = vunpack.c.l.b16 %v501
    %v1117 = vunpack.c.h.b16 %v501
    %v1118 = vunpack.c.l.b16 %v502
    %v1119 = vunpack.c.h.b16 %v502
    %v1120 = vunpack.c.l.b16 %v503
    %v1121 = vunpack.c.h.b16 %v503
    %v1122 = vunpack.c.l.b16 %v504
    %v1123 = vunpack.c.h.b16 %v504
    %v1124 = vunpack.c.l.b16 %v505
    %v1125 = vunpack.c.h.b16 %v505
    %v1126 = vunpack.c.l.b16 %v506
    %v1127 = vunpack.c.h.b16 %v506
    %v1128 = vunpack.c.l.b16 %v507
    %v1129 = vunpack.c.h.b16 %v507
    %v1130 = vunpack.c.l.b16 %v508
    %v1131 = vunpack.c.h.b16 %v508
    %v1132 = vunpack.c.l.b16 %v509
    %v1133 = vunpack.c.h.b16 %v509
    %v1134 = vunpack.c.l.b16 %v510
    %v1135 = vunpack.c.h.b16 %v510
    %v1136 = vunpack.c.l.b16 %v511
    %v1137 = vunpack.c.h.b16 %v511
    %v1138 = vunpack.c.l.b16 %v512
    %v1139 = vunpack.c.h.b16 %v512
    %v1140 = vunpack.c.l.b16 %v513
    %v1141 = vunpack.c.h.b16 %v513
    %v1142 = vunpack.c.l.b16 %v514
    %v1143 = vunpack.c.h.b16 %v514
    %v1144 = vunpack.c.l.b16 %v515
    %v1145 = vunpack.c.h.b16 %v515
    %v1146 = vunpack.c.l.b16 %v516
    %v1147 = vunpack.c.h.b16 %v516
    %v1148 = vunpack.c.l.b16 %v517
    %v1149 = vunpack.c.h.b16 %v517
    %v1150 = vunpack.c.l.b16 %v518
    %v1151 = vunpack.c.h.b16 %v518
    %v1152 = vunpack.c.l.b16 %v519
    %v1153 = vunpack.c.h.b16 %v519
    %v1154 = vunpack.c.l.b16 %v520
    %v1155 = vunpack.c.h.b16 %v520
    %v1156 = vunpack.c.l.b16 %v521
    %v1157 = vunpack.c.h.b16 %v521
    %v1158 = vunpack.c.l.b16 %v522
    %v1159 = vunpack.c.h.b16 %v522
    %v1160 = vunpack.c.l.b16 %v523
    %v1161 = vunpack.c.h.b16 %v523
    %v1162 = vunpack.c.l.b16 %v524
    %v1163 = vunpack.c.h.b16 %v524
    %v1164 = vunpack.c.l.b16 %v525
    %v1165 = vunpack.c.h.b16 %v525
    %v1166 = vunpack.c.l.b16 %v526
    %v1167 = vunpack.c.h.b16 %v526
    %v1168 = vunpack.c.l.b16 %v527
    %v1169 = vunpack.c.h.b16 %v527
    %v1170 = vunpack.c.l.b16 %v528
    %v1171 = vunpack.c.h.b16 %v528
    %v1172 = vunpack.c.l.b16 %v529
    %v1173 = vunpack.c.h.b16 %v529
    %v1174 = vunpack.c.l.b16 %v530
    %v1175 = vunpack.c.h.b16 %v530
    %v1176 = vunpack.c.l.b16 %v531
    %v1177 = vunpack.c.h.b16 %v531
    %v1178 = vunpack.c.l.b16 %v532
    %v1179 = vunpack.c.h.b16 %v532
    %v1180 = vunpack.c.l.b16 %v533
    %v1181 = vunpack.c.h.b16 %v533
    %v1182 = vunpack.c.l.b16 %v534
    %v1183 = vunpack.c.h.b16 %v534
    %v1184 = vunpack.c.l.b16 %v535
    %v1185 = vunpack.c.h.b16 %v535
    %v1186 = vunpack.c.l.b16 %v536
    %v1187 = vunpack.c.h.b16 %v536
    %v1188 = vunpack.c.l.b16 %v537
    %v1189 = vunpack.c.h.b16 %v537
    %v1190 = vunpack.c.l.b16 %v538
    %v1191 = vunpack.c.h.b16 %v538
    %v1192 = vunpack.c.l.b16 %v539
    %v1193 = vunpack.c.h.b16 %v539
    %v1194 = vunpack.c.l.b16 %v540
    %v1195 = vunpack.c.h.b16 %v540
    %v1196 = vunpack.c.l.b16 %v541
    %v1197 = vunpack.c.h.b16 %v541
    %v1198 = vunpack.c.l.b16 %v542
    %v1199 = vunpack.c.h.b16 %v542
    %v1200 = vunpack.c.l.b16 %v543
    %v1201 = vunpack.c.h.b16 %v543
    %v1202 = vunpack.c.l.b16 %v544
    %v1203 = vunpack.c.h.b16 %v544
    %v1204 = vunpack.c.l.b16 %v545
    %v1205 = vunpack.c.h.b16 %v545
    %v1206 = vunpack.c.l.b16 %v546
    %v1207 = vunpack.c.h.b16 %v546
    %v1208 = vunpack.c.l.b16 %v547
    %v1209 = vunpack.c.h.b16 %v547
    %v1210 = vunpack.c.l.b16 %v548
    %v1211 = vunpack.c.h.b16 %v548
    %v1212 = vunpack.c.l.b16 %v549
    %v1213 = vunpack.c.h.b16 %v549
    %v1214 = vunpack.c.l.b16 %v550
    %v1215 = vunpack.c.h.b16 %v550
    %v1216 = vunpack.c.l.b16 %v551
    %v1217 = vunpack.c.h.b16 %v551
    %v1218 = vunpack.c.l.b16 %v552
    %v1219 = vunpack.c.h.b16 %v552
    %v1220 = vunpack.c.l.b16 %v553
    %v1221 = vunpack.c.h.b16 %v553
    %v1222 = vunpack.c.l.b16 %v554
    %v1223 = vunpack.c.h.b16 %v554
    %v1224 = vunpack.c.l.b16 %v555
    %v1225 = vunpack.c.h.b16 %v555
    %v1226 = vunpack.c.l.b16 %v556
    %v1227 = vunpack.c.h.b16 %v556
    %v1228 = vunpack.c.l.b16 %v557
    %v1229 = vunpack.c.h.b16 %v557
    %v1230 = vunpack.c.l.b16 %v558
    %v1231 = vunpack.c.h.b16 %v558
    %v1232 = vunpack.c.l.b16 %v559
    %v1233 = vunpack.c.h.b16 %v559
    %v1234 = vunpack.c.l.b16 %v560
    %v1235 = vunpack.c.h.b16 %v560
    %v1236 = vunpack.c.l.b16 %v561
    %v1237 = vunpack.c.h.b16 %v561
    %v1238 = vunpack.c.l.b16 %v562
    %v1239 = vunpack.c.h.b16 %v562
    %v1240 = vunpack.c.l.b16 %v563
    %v1241 = vunpack.c.h.b16 %v563
    %v1242 = vunpack.c.l.b16 %v564
    %v1243 = vunpack.c.h.b16 %v564
    %v1244 = vunpack.c.l.b16 %v565
    %v1245 = vunpack.c.h.b16 %v565
    %v1246 = vunpack.c.l.b16 %v566
    %v1247 = vunpack.c.h.b16 %v566
    %v1248 = vunpack.c.l.b16 %v567
    %v1249 = vunpack.c.h.b16 %v567
    %v1250 = vunpack.c.l.b16 %v568
    %v1251 = vunpack.c.h.b16 %v568
    %v1252 = vunpack.c.l.b16 %v569
    %v1253 = vunpack.c.h.b16 %v569
    %v1254 = vunpack.c.l.b16 %v570
    %v1255 = vunpack.c.h.b16 %v570
    %v1256 = vunpack.c.l.b16 %v571
    %v1257 = vunpack.c.h.b16 %v571
    %v1258 = vunpack.c.l.b16 %v572
    %v1259 = vunpack.c.h.b16 %v572
    %v1260 = vunpack.c.l.b16 %v573
    %v1261 = vunpack.c.h.b16 %v573
    %v1262 = vunpack.c.l.b16 %v574
    %v1263 = vunpack.c.h.b16 %v574
    %v1264 = vunpack.c.l.b16 %v575
    %v1265 = vunpack.c.h.b16 %v575
    %v1266 = vunpack.c.l.b16 %v576
    %v1267 = vunpack.c.h.b16 %v576
    %v1268 = vunpack.c.l.b16 %v577
    %v1269 = vunpack.c.h.b16 %v577
    %v1270 = vunpack.c.l.b16 %v578
    %v1271 = vunpack.c.h.b16 %v578
    %v1272 = vunpack.c.l.b16 %v579
    %v1273 = vunpack.c.h.b16 %v579
    %v1274 = vunpack.c.l.b16 %v580
    %v1275 = vunpack.c.h.b16 %v580
    %v1276 = vunpack.c.l.b16 %v581
    %v1277 = vunpack.c.h.b16 %v581
    %v1278 = vunpack.c.l.b16 %v582
    %v1279 = vunpack.c.h.b16 %v582
    %v1280 = vunpack.c.l.b16 %v583
    %v1281 = vunpack.c.h.b16 %v583
    %v1282 = vunpack.c.l.b16 %v584
    %v1283 = vunpack.c.h.b16 %v584
    %v1284 = vunpack.c.l.b16 %v585
    %v1285 = vunpack.c.h.b16 %v585
    %v1286 = vunpack.c.l.b16 %v586
    %v1287 = vunpack.c.h.b16 %v586
    %v1288 = vunpack.c.l.b16 %v587
    %v1289 = vunpack.c.h.b16 %v587
    %v1290 = vunpack.c.l.b16 %v588
    %v1291 = vunpack.c.h.b16 %v588
    %v1292 = vunpack.c.l.b16 %v589
    %v1293 = vunpack.c.h.b16 %v589
    %v1294 = vunpack.c.l.b16 %v590
    %v1295 = vunpack.c.h.b16 %v590
    %v1296 = vunpack.c.l.b16 %v591
    %v1297 = vunpack.c.h.b16 %v591
    %v1298 = vunpack.c.l.b16 %v592
    %v1299 = vunpack.c.h.b16 %v592
    %v1300 = vunpack.c.l.b16 %v593
    %v1301 = vunpack.c.h.b16 %v593
    %v1302 = vunpack.c.l.b16 %v594
    %v1303 = vunpack.c.h.b16 %v594
    %v1304 = vunpack.c.l.b16 %v595
    %v1305 = vunpack.c.h.b16 %v595
    %v1306 = vunpack.c.l.b16 %v596
    %v1307 = vunpack.c.h.b16 %v596
    %v1308 = vunpack.c.l.b16 %v597
    %v1309 = vunpack.c.h.b16 %v597
    %v1310 = vunpack.c.l.b16 %v598
    %v1311 = vunpack.c.h.b16 %v598
    %v1312 = vunpack.c.l.b16 %v599
    %v1313 = vunpack.c.h.b16 %v599
    %v1314 = vunpack.c.l.b16 %v600
    %v1315 = vunpack.c.h.b16 %v600
    %v1316 = vunpack.c.l.b16 %v601
    %v1317 = vunpack.c.h.b16 %v601
    %v1318 = vunpack.c.l.b16 %v602
    %v1319 = vunpack.c.h.b16 %v602
    %v1320 = vunpack.c.l.b16 %v603
    %v1321 = vunpack.c.h.b16 %v603
    %v1322 = vunpack.c.l.b16 %v604
    %v1323 = vunpack.c.h.b16 %v604
    %v1324 = vunpack.c.l.b16 %v605
    %v1325 = vunpack.c.h.b16 %v605
    %v1326 = vunpack.c.l.b16 %v606
    %v1327 = vunpack.c.h.b16 %v606
    %v1328 = vunpack.c.l.b16 %v607
    %v1329 = vunpack.c.h.b16 %v607
    %v1330 = vunpack.c.l.b16 %v608
    %v1331 = vunpack.c.h.b16 %v608
    %v1332 = vunpack.c.l.b16 %v609
    %v1333 = vunpack.c.h.b16 %v609
    %v1334 = vunpack.c.l.b16 %v610
    %v1335 = vunpack.c.h.b16 %v610
    %v1336 = vunpack.c.l.b16 %v611
    %v1337 = vunpack.c.h.b16 %v611
    %v1338 = vunpack.c.l.b16 %v612
    %v1339 = vunpack.c.h.b16 %v612
    %v1340 = vunpack.c.l.b16 %v613
    %v1341 = vunpack.c.h.b16 %v613
    %v1342 = vunpack.c.l.b16 %v614
    %v1343 = vunpack.c.h.b16 %v614
    %v1344 = vunpack.c.l.b16 %v615
    %v1345 = vunpack.c.h.b16 %v615
    %v1346 = vunpack.c.l.b16 %v616
    %v1347 = vunpack.c.h.b16 %v616
    %v1348 = vunpack.c.l.b16 %v617
    %v1349 = vunpack.c.h.b16 %v617
    %v1350 = vunpack.c.l.b16 %v618
    %v1351 = vunpack.c.h.b16 %v618
    %v1352 = vunpack.c.l.b16 %v619
    %v1353 = vunpack.c.h.b16 %v619
    %v1354 = vunpack.c.l.b16 %v620
    %v1355 = vunpack.c.h.b16 %v620
    %v1356 = vunpack.c.l.b16 %v621
    %v1357 = vunpack.c.h.b16 %v621
    %v1358 = vunpack.c.l.b16 %v622
    %v1359 = vunpack.c.h.b16 %v622
    %v1360 = vunpack.c.l.b16 %v623
    %v1361 = vunpack.c.h.b16 %v623
    %v1362 = vunpack.c.l.b16 %v624
    %v1363 = vunpack.c.h.b16 %v624
    %v1364 = vunpack.c.l.b16 %v625
    %v1365 = vunpack.c.h.b16 %v625
    %v1366 = vunpack.c.l.b16 %v626
    %v1367 = vunpack.c.h.b16 %v626
    %v1368 = vunpack.c.l.b16 %v627
    %v1369 = vunpack.c.h.b16 %v627
    %v1370 = vunpack.c.l.b16 %v628
    %v1371 = vunpack.c.h.b16 %v628
    %v1372 = vunpack.c.l.b16 %v629
    %v1373 = vunpack.c.h.b16 %v629
    %v1374 = vunpack.c.l.b16 %v630
    %v1375 = vunpack.c.h.b16 %v630
    %v1376 = vunpack.c.l.b16 %v631
    %v1377 = vunpack.c.h.b16 %v631
    %v1378 = vunpack.c.l.b16 %v632
    %v1379 = vunpack.c.h.b16 %v632
    %v1380 = vunpack.c.l.b16 %v633
    %v1381 = vunpack.c.h.b16 %v633
    %v1382 = vunpack.c.l.b16 %v634
    %v1383 = vunpack.c.h.b16 %v634
    %v1384 = vunpack.c.l.b16 %v635
    %v1385 = vunpack.c.h.b16 %v635
    %v1386 = vunpack.c.l.b16 %v636
    %v1387 = vunpack.c.h.b16 %v636
    %v1388 = vunpack.c.l.b16 %v637
    %v1389 = vunpack.c.h.b16 %v637
    %v1390 = vunpack.c.l.b16 %v638
    %v1391 = vunpack.c.h.b16 %v638
    %v1392 = vunpack.c.l.b16 %v639
    %v1393 = vunpack.c.h.b16 %v639
    %v1394 = vunpack.c.l.b16 %v640
    %v1395 = vunpack.c.h.b16 %v640
    %v1396 = vunpack.c.l.b16 %v641
    %v1397 = vunpack.c.h.b16 %v641
    %v1398 = vunpack.c.l.b16 %v642
    %v1399 = vunpack.c.h.b16 %v642
    %v1400 = vunpack.c.l.b16 %v643
    %v1401 = vunpack.c.h.b16 %v643
    %v1402 = vunpack.c.l.b16 %v644
    %v1403 = vunpack.c.h.b16 %v644
    %v1404 = vunpack.c.l.b16 %v645
    %v1405 = vunpack.c.h.b16 %v645
    %v1406 = vunpack.c.l.b16 %v646
    %v1407 = vunpack.c.h.b16 %v646
    %v1408 = vunpack.c.l.b16 %v647
    %v1409 = vunpack.c.h.b16 %v647
    %v1410 = vunpack.c.l.b16 %v648
    %v1411 = vunpack.c.h.b16 %v648
    %v1412 = vunpack.c.l.b16 %v649
    %v1413 = vunpack.c.h.b16 %v649
    %v1414 = vunpack.c.l.b16 %v650
    %v1415 = vunpack.c.h.b16 %v650
    %v1416 = vunpack.c.l.b16 %v651
    %v1417 = vunpack.c.h.b16 %v651
    %v1418 = vunpack.c.l.b16 %v652
    %v1419 = vunpack.c.h.b16 %v652
    %v1420 = vunpack.c.l.b16 %v653
    %v1421 = vunpack.c.h.b16 %v653
    %v1422 = vunpack.c.l.b16 %v654
    %v1423 = vunpack.c.h.b16 %v654
    %v1424 = vunpack.c.l.b16 %v655
    %v1425 = vunpack.c.h.b16 %v655
    %v1426 = vunpack.c.l.b16 %v656
    %v1427 = vunpack.c.h.b16 %v656
    %v1428 = vunpack.c.l.b16 %v657
    %v1429 = vunpack.c.h.b16 %v657
    %v1430 = vunpack.c.l.b16 %v658
    %v1431 = vunpack.c.h.b16 %v658
    %v1432 = vunpack.c.l.b16 %v659
    %v1433 = vunpack.c.h.b16 %v659
    %v1434 = vunpack.c.l.b16 %v660
    %v1435 = vunpack.c.h.b16 %v660
    %v1436 = vunpack.c.l.b16 %v661
    %v1437 = vunpack.c.h.b16 %v661
    %v1438 = vunpack.c.l.b16 %v662
    %v1439 = vunpack.c.h.b16 %v662
    %v1440 = vunpack.c.l.b16 %v663
    %v1441 = vunpack.c.h.b16 %v663
    %v1442 = vunpack.c.l.b16 %v664
    %v1443 = vunpack.c.h.b16 %v664
    %v1444 = vunpack.c.l.b16 %v665
    %v1445 = vunpack.c.h.b16 %v665
    %v1446 = vunpack.c.l.b16 %v666
    %v1447 = vunpack.c.h.b16 %v666
    %v1448 = vunpack.c.l.b16 %v667
    %v1449 = vunpack.c.h.b16 %v667
    %v1450 = vunpack.c.l.b16 %v668
    %v1451 = vunpack.c.h.b16 %v668
    %v1452 = vunpack.c.l.b16 %v669
    %v1453 = vunpack.c.h.b16 %v669
    %v1454 = vunpack.c.l.b16 %v670
    %v1455 = vunpack.c.h.b16 %v670
    %v1456 = vunpack.c.l.b16 %v671
    %v1457 = vunpack.c.h.b16 %v671
    %v1458 = vunpack.c.l.b16 %v672
    %v1459 = vunpack.c.h.b16 %v672
    %v1460 = vunpack.c.l.b16 %v673
    %v1461 = vunpack.c.h.b16 %v673
    %v1462 = vunpack.c.l.b16 %v674
    %v1463 = vunpack.c.h.b16 %v674
    %v1464 = vunpack.c.l.b16 %v675
    %v1465 = vunpack.c.h.b16 %v675
    %v1466 = vunpack.c.l.b16 %v676
    %v1467 = vunpack.c.h.b16 %v676
    %v1468 = vunpack.c.l.b16 %v677
    %v1469 = vunpack.c.h.b16 %v677
    %v1470 = vunpack.c.l.b16 %v678
    %v1471 = vunpack.c.h.b16 %v678
    %v1472 = vunpack.c.l.b16 %v679
    %v1473 = vunpack.c.h.b16 %v679
    %v1474 = vunpack.c.l.b16 %v680
    %v1475 = vunpack.c.h.b16 %v680
    %v1476 = vunpack.c.l.b16 %v681
    %v1477 = vunpack.c.h.b16 %v681
    %v1478 = vunpack.c.l.b16 %v682
    %v1479 = vunpack.c.h.b16 %v682
    %v1480 = vunpack.c.l.b16 %v683
    %v1481 = vunpack.c.h.b16 %v683
    %v1482 = vunpack.c.l.b16 %v684
    %v1483 = vunpack.c.h.b16 %v684
    %v1484 = vunpack.c.l.b16 %v685
    %v1485 = vunpack.c.h.b16 %v685
    %v1486 = vunpack.c.l.b16 %v686
    %v1487 = vunpack.c.h.b16 %v686
    %v1488 = vunpack.c.l.b16 %v687
    %v1489 = vunpack.c.h.b16 %v687
    %v1490 = vunpack.c.l.b16 %v688
    %v1491 = vunpack.c.h.b16 %v688
    %v1492 = vunpack.c.l.b16 %v689
    %v1493 = vunpack.c.h.b16 %v689
    %v1494 = vunpack.c.l.b16 %v690
    %v1495 = vunpack.c.h.b16 %v690
    %v1496 = vunpack.c.l.b16 %v691
    %v1497 = vunpack.c.h.b16 %v691
    %v1498 = vunpack.c.l.b16 %v692
    %v1499 = vunpack.c.h.b16 %v692
    %v1500 = vunpack.c.l.b16 %v693
    %v1501 = vunpack.c.h.b16 %v693
    %v1502 = vunpack.c.l.b16 %v694
    %v1503 = vunpack.c.h.b16 %v694
    %v1504 = vunpack.c.l.b16 %v695
    %v1505 = vunpack.c.h.b16 %v695
    %v1506 = vunpack.c.l.b16 %v696
    %v1507 = vunpack.c.h.b16 %v696
    %v1508 = vunpack.c.l.b16 %v697
    %v1509 = vunpack.c.h.b16 %v697
    %v1510 = vunpack.c.l.b16 %v698
    %v1511 = vunpack.c.h.b16 %v698
    %v1512 = vunpack.c.l.b16 %v699
    %v1513 = vunpack.c.h.b16 %v699
    %v1514 = vunpack.c.l.b16 %v700
    %v1515 = vunpack.c.h.b16 %v700
    %v1516 = vunpack.c.l.b16 %v701
    %v1517 = vunpack.c.h.b16 %v701
    %v1518 = vunpack.c.l.b16 %v702
    %v1519 = vunpack.c.h.b16 %v702
    %v1520 = vunpack.c.l.b16 %v703
    %v1521 = vunpack.c.h.b16 %v703
    %v1522 = vunpack.c.l.b16 %v704
    %v1523 = vunpack.c.h.b16 %v704
    %v1524 = vunpack.c.l.b16 %v705
    %v1525 = vunpack.c.h.b16 %v705
    %v1526 = vunpack.c.l.b16 %v706
    %v1527 = vunpack.c.h.b16 %v706
    %v1528 = vunpack.c.l.b16 %v707
    %v1529 = vunpack.c.h.b16 %v707
    %v1530 = vunpack.c.l.b16 %v708
    %v1531 = vunpack.c.h.b16 %v708
    %v1532 = vunpack.c.l.b16 %v709
    %v1533 = vunpack.c.h.b16 %v709
    %v1534 = vunpack.c.l.b16 %v710
    %v1535 = vunpack.c.h.b16 %v710
    %v1536 = vunpack.c.l.b16 %v711
    %v1537 = vunpack.c.h.b16 %v711
    %v1538 = vunpack.c.l.b16 %v712
    %v1539 = vunpack.c.h.b16 %v712
    %v1540 = vunpack.c.l.b16 %v713
    %v1541 = vunpack.c.h.b16 %v713
    %v1542 = vunpack.c.l.b16 %v714
    %v1543 = vunpack.c.h.b16 %v714
    %v1544 = vunpack.c.l.b16 %v715
    %v1545 = vunpack.c.h.b16 %v715
    %v1546 = vunpack.c.l.b16 %v716
    %v1547 = vunpack.c.h.b16 %v716
    %v1548 = vunpack.c.l.b16 %v717
    %v1549 = vunpack.c.h.b16 %v717
    %v1550 = vunpack.c.l.b16 %v718
    %v1551 = vunpack.c.h.b16 %v718
    %v1552 = vunpack.c.l.b16 %v719
    %v1553 = vunpack.c.h.b16 %v719
    %v1554 = vunpack.c.l.b16 %v720
    %v1555 = vunpack.c.h.b16 %v720
    %v1556 = vunpack.c.l.b16 %v721
    %v1557 = vunpack.c.h.b16 %v721
    %v1558 = vunpack.c.l.b16 %v722
    %v1559 = vunpack.c.h.b16 %v722
    %v1560 = vunpack.c.l.b16 %v723
    %v1561 = vunpack.c.h.b16 %v723
    %v1562 = vunpack.c.l.b16 %v724
    %v1563 = vunpack.c.h.b16 %v724
    %v1564 = vunpack.c.l.b16 %v725
    %v1565 = vunpack.c.h.b16 %v725
    %v1566 = vunpack.c.l.b16 %v726
    %v1567 = vunpack.c.h.b16 %v726
    %v1568 = vunpack.c.l.b16 %v727
    %v1569 = vunpack.c.h.b16 %v727
    %v1570 = vunpack.c.l.b16 %v728
    %v1571 = vunpack.c.h.b16 %v728
    %v1572 = vunpack.c.l.b16 %v729
    %v1573 = vunpack.c.h.b16 %v729
    %v1574 = vunpack.c.l.b16 %v730
    %v1575 = vunpack.c.h.b16 %v730
    %v1576 = vunpack.c.l.b16 %v731
    %v1577 = vunpack.c.h.b16 %v731
    %v1578 = vunpack.c.l.b16 %v732
    %v1579 = vunpack.c.h.b16 %v732
    %v1580 = vunpack.c.l.b16 %v733
    %v1581 = vunpack.c.h.b16 %v733
    %v1582 = vunpack.c.l.b16 %v734
    %v1583 = vunpack.c.h.b16 %v734
    %v1584 = vunpack.c.l.b16 %v735
    %v1585 = vunpack.c.h.b16 %v735
    %v1586 = vunpack.c.l.b16 %v736
    %v1587 = vunpack.c.h.b16 %v736
    %v1588 = vunpack.c.l.b16 %v737
    %v1589 = vunpack.c.h.b16 %v737
    %v1590 = vunpack.c.l.b16 %v738
    %v1591 = vunpack.c.h.b16 %v738
    %v1592 = vunpack.c.l.b16 %v739
    %v1593 = vunpack.c.h.b16 %v739
    %v1594 = vunpack.c.l.b16 %v740
    %v1595 = vunpack.c.h.b16 %v740
    %v1596 = vunpack.c.l.b16 %v741
    %v1597 = vunpack.c.h.b16 %v741
    %v1598 = vunpack.c.l.b16 %v742
    %v1599 = vunpack.c.h.b16 %v742
    %v1600 = vunpack.c.l.b16 %v743
    %v1601 = vunpack.c.h.b16 %v743
    %v1602 = vunpack.c.l.b16 %v744
    %v1603 = vunpack.c.h.b16 %v744
    %v1604 = vunpack.c.l.b16 %v745
    %v1605 = vunpack.c.h.b16 %v745
    %v1606 = vunpack.c.l.b16 %v746
    %v1607 = vunpack.c.h.b16 %v746
    %v1608 = vunpack.c.l.b16 %v747
    %v1609 = vunpack.c.h.b16 %v747
    %v1610 = vunpack.c.l.b16 %v748
    %v1611 = vunpack.c.h.b16 %v748
    %v1612 = vunpack.c.l.b16 %v749
    %v1613 = vunpack.c.h.b16 %v749
    %v1614 = vunpack.c.l.b16 %v750
    %v1615 = vunpack.c.h.b16 %v750
    %v1616 = vunpack.c.l.b16 %v751
    %v1617 = vunpack.c.h.b16 %v751
    %v1618 = vunpack.c.l.b16 %v752
    %v1619 = vunpack.c.h.b16 %v752
    %v1620 = vunpack.c.l.b16 %v753
    %v1621 = vunpack.c.h.b16 %v753
    %v1622 = vunpack.c.l.b16 %v754
    %v1623 = vunpack.c.h.b16 %v754
    %v1624 = vunpack.c.l.b16 %v755
    %v1625 = vunpack.c.h.b16 %v755
    %v1626 = vunpack.c.l.b16 %v756
    %v1627 = vunpack.c.h.b16 %v756
    %v1628 = vunpack.c.l.b16 %v757
    %v1629 = vunpack.c.h.b16 %v757
    %v1630 = vunpack.c.l.b16 %v758
    %v1631 = vunpack.c.h.b16 %v758
    %v1632 = vunpack.c.l.b16 %v759
    %v1633 = vunpack.c.h.b16 %v759
    %v1634 = vunpack.c.l.b16 %v760
    %v1635 = vunpack.c.h.b16 %v760
    %v1636 = vunpack.c.l.b16 %v761
    %v1637 = vunpack.c.h.b16 %v761
    %v1638 = vunpack.c.l.b16 %v762
    %v1639 = vunpack.c.h.b16 %v762
    %v1640 = vunpack.c.l.b16 %v763
    %v1641 = vunpack.c.h.b16 %v763
    %v1642 = vunpack.c.l.b16 %v764
    %v1643 = vunpack.c.h.b16 %v764
    %v1644 = vunpack.c.l.b16 %v765
    %v1645 = vunpack.c.h.b16 %v765
    %v1646 = vunpack.c.l.b16 %v766
    %v1647 = vunpack.c.h.b16 %v766
    %v1648 = vunpack.c.l.b16 %v767
    %v1649 = vunpack.c.h.b16 %v767
    %v1650 = vunpack.c.l.b16 %v768
    %v1651 = vunpack.c.h.b16 %v768
    %v1652 = vunpack.c.l.b16 %v769
    %v1653 = vunpack.c.h.b16 %v769
    %v1654 = vunpack.c.l.b16 %v770
    %v1655 = vunpack.c.h.b16 %v770
    %v1656 = vunpack.c.l.b16 %v771
    %v1657 = vunpack.c.h.b16 %v771
    %v1658 = vunpack.c.l.b16 %v772
    %v1659 = vunpack.c.h.b16 %v772
    %v1660 = vunpack.c.l.b16 %v773
    %v1661 = vunpack.c.h.b16 %v773
    %v1662 = vunpack.c.l.b16 %v774
    %v1663 = vunpack.c.h.b16 %v774
    %v1664 = vunpack.c.l.b16 %v775
    %v1665 = vunpack.c.h.b16 %v775
    %v1666 = vunpack.c.l.b16 %v776
    %v1667 = vunpack.c.h.b16 %v776
    %v1668 = vunpack.c.l.b16 %v777
    %v1669 = vunpack.c.h.b16 %v777
    %v1670 = vunpack.c.l.b16 %v778
    %v1671 = vunpack.c.h.b16 %v778
    %v1672 = vunpack.c.l.b16 %v779
    %v1673 = vunpack.c.h.b16 %v779
    %v1674 = vunpack.c.l.b16 %v780
    %v1675 = vunpack.c.h.b16 %v780
    %v1676 = vunpack.c.l.b16 %v781
    %v1677 = vunpack.c.h.b16 %v781
    %v1678 = vunpack.c.l.b16 %v782
    %v1679 = vunpack.c.h.b16 %v782
    %v1680 = vunpack.c.l.b16 %v783
    %v1681 = vunpack.c.h.b16 %v783
    %v1682 = vunpack.c.l.b16 %v784
    %v1683 = vunpack.c.h.b16 %v784
    %v1684 = vunpack.c.l.b16 %v785
    %v1685 = vunpack.c.h.b16 %v785
    %v1686 = vunpack.c.l.b16 %v786
    %v1687 = vunpack.c.h.b16 %v786
    %v1688 = vunpack.c.l.b16 %v787
    %v1689 = vunpack.c.h.b16 %v787
    %v1690 = vpack.c.b16 %v1120, %v1114
    %v1691 = vpack.c.b16 %v1121, %v1115
    %v1692 = vpack.c.b16 %v1122, %v1116
    %v1693 = vpack.c.b16 %v1123, %v1117
    %v1694 = vpack.c.b16 %v1124, %v1118
    %v1695 = vpack.c.b16 %v1125, %v1119
    %v1696 = vpack.c.b16 %v1132, %v1126
    %v1697 = vpack.c.b16 %v1133, %v1127
    %v1698 = vpack.c.b16 %v1134, %v1128
    %v1699 = vpack.c.b16 %v1135, %v1129
    %v1700 = vpack.c.b16 %v1136, %v1130
    %v1701 = vpack.c.b16 %v1137, %v1131
    %v1702 = vpack.c.b16 %v1144, %v1138
    %v1703 = vpack.c.b16 %v1145, %v1139
    %v1704 = vpack.c.b16 %v1146, %v1140
    %v1705 = vpack.c.b16 %v1147, %v1141
    %v1706 = vpack.c.b16 %v1148, %v1142
    %v1707 = vpack.c.b16 %v1149, %v1143
    %v1708 = vpack.c.b16 %v1156, %v1150
    %v1709 = vpack.c.b16 %v1157, %v1151
    %v1710 = vpack.c.b16 %v1158, %v1152
    %v1711 = vpack.c.b16 %v1159, %v1153
    %v1712 = vpack.c.b16 %v1160, %v1154
    %v1713 = vpack.c.b16 %v1161, %v1155
    %v1714 = vpack.c.b16 %v1168, %v1162
    %v1715 = vpack.c.b16 %v1169, %v1163
    %v1716 = vpack.c.b16 %v1170, %v1164
    %v1717 = vpack.c.b16 %v1171, %v1165
    %v1718 = vpack.c.b16 %v1172, %v1166
    %v1719 = vpack.c.b16 %v1173, %v1167
    %v1720 = vpack.c.b16 %v1180, %v1174
    %v1721 = vpack.c.b16 %v1181, %v1175
    %v1722 = vpack.c.b16 %v1182, %v1176
    %v1723 = vpack.c.b16 %v1183, %v1177
    %v1724 = vpack.c.b16 %v1184, %v1178
    %v1725 = vpack.c.b16 %v1185, %v1179
    %v1726 = vpack.c.b16 %v1192, %v1186
    %v1727 = vpack.c.b16 %v1193, %v1187
    %v1728 = vpack.c.b16 %v1194, %v1188
    %v1729 = vpack.c.b16 %v1195, %v1189
    %v1730 = vpack.c.b16 %v1196, %v1190
    %v1731 = vpack.c.b16 %v1197, %v1191
    %v1732 = vpack.c.b16 %v1204, %v1198
    %v1733 = vpack.c.b16 %v1205, %v1199
    %v1734 = vpack.c.b16 %v1206, %v1200
    %v1735 = vpack.c.b16 %v1207, %v1201
    %v1736 = vpack.c.b16 %v1208, %v1202
    %v1737 = vpack.c.b16 %v1209, %v1203
    %v1738 = vpack.c.b16 %v1216, %v1210
    %v1739 = vpack.c.b16 %v1217, %v1211
    %v1740 = vpack.c.b16 %v1218, %v1212
    %v1741 = vpack.c.b16 %v1219, %v1213
    %v1742 = vpack.c.b16 %v1220, %v1214
    %v1743 = vpack.c.b16 %v1221, %v1215
    %v1744 = vpack.c.b16 %v1228, %v1222
    %v1745 = vpack.c.b16 %v1229, %v1223
    %v1746 = vpack.c.b16 %v1230, %v1224
    %v1747 = vpack.c.b16 %v1231, %v1225
    %v1748 = vpack.c.b16 %v1232, %v1226
    %v1749 = vpack.c.b16 %v1233, %v1227
    %v1750 = vpack.c.b16 %v1240, %v1234
    %v1751 = vpack.c.b16 %v1241, %v1235
    %v1752 = vpack.c.b16 %v1242, %v1236
    %v1753 = vpack.c.b16 %v1243, %v1237
    %v1754 = vpack.c.b16 %v1244, %v1238
    %v1755 = vpack.c.b16 %v1245, %v1239
    %v1756 = vpack.c.b16 %v1252, %v1246
    %v1757 = vpack.c.b16 %v1253, %v1247
    %v1758 = vpack.c.b16 %v1254, %v1248
    %v1759 = vpack.c.b16 %v1255, %v1249
    %v1760 = vpack.c.b16 %v1256, %v1250
    %v1761 = vpack.c.b16 %v1257, %v1251
    %v1762 = vpack.c.b16 %v1264, %v1258
    %v1763 = vpack.c.b16 %v1265, %v1259
    %v1764 = vpack.c.b16 %v1266, %v1260
    %v1765 = vpack.c.b16 %v1267, %v1261
    %v1766 = vpack.c.b16 %v1268, %v1262
    %v1767 = vpack.c.b16 %v1269, %v1263
    %v1768 = vpack.c.b16 %v1276, %v1270
    %v1769 = vpack.c.b16 %v1277, %v1271
    %v1770 = vpack.c.b16 %v1278, %v1272
    %v1771 = vpack.c.b16 %v1279, %v1273
    %v1772 = vpack.c.b16 %v1280, %v1274
    %v1773 = vpack.c.b16 %v1281, %v1275
    %v1774 = vpack.c.b16 %v1288, %v1282
    %v1775 = vpack.c.b16 %v1289, %v1283
    %v1776 = vpack.c.b16 %v1290, %v1284
    %v1777 = vpack.c.b16 %v1291, %v1285
    %v1778 = vpack.c.b16 %v1292, %v1286
    %v1779 = vpack.c.b16 %v1293, %v1287
    %v1780 = vpack.c.b16 %v1300, %v1294
    %v1781 = vpack.c.b16 %v1301, %v1295
    %v1782 = vpack.c.b16 %v1302, %v1296
    %v1783 = vpack.c.b16 %v1303, %v1297
    %v1784 = vpack.c.b16 %v1304, %v1298
    %v1785 = vpack.c.b16 %v1305, %v1299
    %v1786 = vpack.c.b16 %v1312, %v1306
    %v1787 = vpack.c.b16 %v1313, %v1307
    %v1788 = vpack.c.b16 %v1314, %v1308
    %v1789 = vpack.c.b16 %v1315, %v1309
    %v1790 = vpack.c.b16 %v1316, %v1310
    %v1791 = vpack.c.b16 %v1317, %v1311
    %v1792 = vpack.c.b16 %v1324, %v1318
    %v1793 = vpack.c.b16 %v1325, %v1319
    %v1794 = vpack.c.b16 %v1326, %v1320
    %v1795 = vpack.c.b16 %v1327, %v1321
    %v1796 = vpack.c.b16 %v1328, %v1322
    %v1797 = vpack.c.b16 %v1329, %v1323
    %v1798 = vpack.c.b16 %v1336, %v1330
    %v1799 = vpack.c.b16 %v1337, %v1331
    %v1800 = vpack.c.b16 %v1338, %v1332
    %v1801 = vpack.c.b16 %v1339, %v1333
    %v1802 = vpack.c.b16 %v1340, %v1334
    %v1803 = vpack.c.b16 %v1341, %v1335
    %v1804 = vpack.c.b16 %v1348, %v1342
    %v1805 = vpack.c.b16 %v1349, %v1343
    %v1806 = vpack.c.b16 %v1350, %v1344
    %v1807 = vpack.c.b16 %v1351, %v1345
    %v1808 = vpack.c.b16 %v1352, %v1346
    %v1809 = vpack.c.b16 %v1353, %v1347
    %v1810 = vpack.c.b16 %v1360, %v1354
    %v1811 = vpack.c.b16 %v1361, %v1355
    %v1812 = vpack.c.b16 %v1362, %v1356
    %v1813 = vpack.c.b16 %v1363, %v1357
    %v1814 = vpack.c.b16 %v1364, %v1358
    %v1815 = vpack.c.b16 %v1365, %v1359
    %v1816 = vpack.c.b16 %v1372, %v1366
    %v1817 = vpack.c.b16 %v1373, %v1367
    %v1818 = vpack.c.b16 %v1374, %v1368
    %v1819 = vpack.c.b16 %v1375, %v1369
    %v1820 = vpack.c.b16 %v1376, %v1370
    %v1821 = vpack.c.b16 %v1377, %v1371
    %v1822 = vpack.c.b16 %v1384, %v1378
    %v1823 = vpack.c.b16 %v1385, %v1379
    %v1824 = vpack.c.b16 %v1386, %v1380
    %v1825 = vpack.c.b16 %v1387, %v1381
    %v1826 = vpack.c.b16 %v1388, %v1382
    %v1827 = vpack.c.b16 %v1389, %v1383
    %v1828 = vpack.c.b16 %v1396, %v1390
    %v1829 = vpack.c.b16 %v1397, %v1391
    %v1830 = vpack.c.b16 %v1398, %v1392
    %v1831 = vpack.c.b16 %v1399, %v1393
    %v1832 = vpack.c.b16 %v1400, %v1394
    %v1833 = vpack.c.b16 %v1401, %v1395
    %v1834 = vpack.c.b16 %v1408, %v1402
    %v1835 = vpack.c.b16 %v1409, %v1403
    %v1836 = vpack.c.b16 %v1410, %v1404
    %v1837 = vpack.c.b16 %v1411, %v1405
    %v1838 = vpack.c.b16 %v1412, %v1406
    %v1839 = vpack.c.b16 %v1413, %v1407
    %v1840 = vpack.c.b16 %v1420, %v1414
    %v1841 = vpack.c.b16 %v1421, %v1415
    %v1842 = vpack.c.b16 %v1422, %v1416
    %v1843 = vpack.c.b16 %v1423, %v1417
    %v1844 = vpack.c.b16 %v1424, %v1418
    %v1845 = vpack.c.b16 %v1425, %v1419
    %v1846 = vpack.c.b16 %v1432, %v1426
    %v1847 = vpack.c.b16 %v1433, %v1427
    %v1848 = vpack.c.b16 %v1434, %v1428
    %v1849 = vpack.c.b16 %v1435, %v1429
    %v1850 = vpack.c.b16 %v1436, %v1430
    %v1851 = vpack.c.b16 %v1437, %v1431
    %v1852 = vpack.c.b16 %v1444, %v1438
    %v1853 = vpack.c.b16 %v1445, %v1439
    %v1854 = vpack.c.b16 %v1446, %v1440
    %v1855 = vpack.c.b16 %v1447, %v1441
    %v1856 = vpack.c.b16 %v1448, %v1442
    %v1857 = vpack.c.b16 %v1449, %v1443
    %v1858 = vpack.c.b16 %v1456, %v1450
    %v1859 = vpack.c.b16 %v1457, %v1451
    %v1860 = vpack.c.b16 %v1458, %v1452
    %v1861 = vpack.c.b16 %v1459, %v1453
    %v1862 = vpack.c.b16 %v1460, %v1454
    %v1863 = vpack.c.b16 %v1461, %v1455
    %v1864 = vpack.c.b16 %v1468, %v1462
    %v1865 = vpack.c.b16 %v1469, %v1463
    %v1866 = vpack.c.b16 %v1470, %v1464
    %v1867 = vpack.c.b16 %v1471, %v1465
    %v1868 = vpack.c.b16 %v1472, %v1466
    %v1869 = vpack.c.b16 %v1473, %v1467
    %v1870 = vpack.c.b16 %v1480, %v1474
    %v1871 = vpack.c.b16 %v1481, %v1475
    %v1872 = vpack.c.b16 %v1482, %v1476
    %v1873 = vpack.c.b16 %v1483, %v1477
    %v1874 = vpack.c.b16 %v1484, %v1478
    %v1875 = vpack.c.b16 %v1485, %v1479
    %v1876 = vpack.c.b16 %v1492, %v1486
    %v1877 = vpack.c.b16 %v1493, %v1487
    %v1878 = vpack.c.b16 %v1494, %v1488
    %v1879 = vpack.c.b16 %v1495, %v1489
    %v1880 = vpack.c.b16 %v1496, %v1490
    %v1881 = vpack.c.b16 %v1497, %v1491
    %v1882 = vpack.c.b16 %v1504, %v1498
    %v1883 = vpack.c.b16 %v1505, %v1499
    %v1884 = vpack.c.b16 %v1506, %v1500
    %v1885 = vpack.c.b16 %v1507, %v1501
    %v1886 = vpack.c.b16 %v1508, %v1502
    %v1887 = vpack.c.b16 %v1509, %v1503
    %v1888 = vpack.c.b16 %v1516, %v1510
    %v1889 = vpack.c.b16 %v1517, %v1511
    %v1890 = vpack.c.b16 %v1518, %v1512
    %v1891 = vpack.c.b16 %v1519, %v1513
    %v1892 = vpack.c.b16 %v1520, %v1514
    %v1893 = vpack.c.b16 %v1521, %v1515
    %v1894 = vpack.c.b16 %v1528, %v1522
    %v1895 = vpack.c.b16 %v1529, %v1523
    %v1896 = vpack.c.b16 %v1530, %v1524
    %v1897 = vpack.c.b16 %v1531, %v1525
    %v1898 = vpack.c.b16 %v1532, %v1526
    %v1899 = vpack.c.b16 %v1533, %v1527
    %v1900 = vpack.c.b16 %v1540, %v1534
    %v1901 = vpack.c.b16 %v1541, %v1535
    %v1902 = vpack.c.b16 %v1542, %v1536
    %v1903 = vpack.c.b16 %v1543, %v1537
    %v1904 = vpack.c.b16 %v1544, %v1538
    %v1905 = vpack.c.b16 %v1545, %v1539
    %v1906 = vpack.c.b16 %v1552, %v1546
    %v1907 = vpack.c.b16 %v1553, %v1547
    %v1908 = vpack.c.b16 %v1554, %v1548
    %v1909 = vpack.c.b16 %v1555, %v1549
    %v1910 = vpack.c.b16 %v1556, %v1550
    %v1911 = vpack.c.b16 %v1557, %v1551
    %v1912 = vpack.c.b16 %v1564, %v1558
    %v1913 = vpack.c.b16 %v1565, %v1559
    %v1914 = vpack.c.b16 %v1566, %v1560
    %v1915 = vpack.c.b16 %v1567, %v1561
    %v1916 = vpack.c.b16 %v1568, %v1562
    %v1917 = vpack.c.b16 %v1569, %v1563
    %v1918 = vpack.c.b16 %v1576, %v1570
    %v1919 = vpack.c.b16 %v1577, %v1571
    %v1920 = vpack.c.b16 %v1578, %v1572
    %v1921 = vpack.c.b16 %v1579, %v1573
    %v1922 = vpack.c.b16 %v1580, %v1574
    %v1923 = vpack.c.b16 %v1581, %v1575
    %v1924 = vpack.c.b16 %v1588, %v1582
    %v1925 = vpack.c.b16 %v1589, %v1583
    %v1926 = vpack.c.b16 %v1590, %v1584
    %v1927 = vpack.c.b16 %v1591, %v1585
    %v1928 = vpack.c.b16 %v1592, %v1586
    %v1929 = vpack.c.b16 %v1593, %v1587
    %v1930 = vpack.c.b16 %v1600, %v1594
    %v1931 = vpack.c.b16 %v1601, %v1595
    %v1932 = vpack.c.b16 %v1602, %v1596
    %v1933 = vpack.c.b16 %v1603, %v1597
    %v1934 = vpack.c.b16 %v1604, %v1598
    %v1935 = vpack.c.b16 %v1605, %v1599
    %v1936 = vpack.c.b16 %v1612, %v1606
    %v1937 = vpack.c.b16 %v1613, %v1607
    %v1938 = vpack.c.b16 %v1614, %v1608
    %v1939 = vpack.c.b16 %v1615, %v1609
    %v1940 = vpack.c.b16 %v1616, %v1610
    %v1941 = vpack.c.b16 %v1617, %v1611
    %v1942 = vpack.c.b16 %v1624, %v1618
    %v1943 = vpack.c.b16 %v1625, %v1619
    %v1944 = vpack.c.b16 %v1626, %v1620
    %v1945 = vpack.c.b16 %v1627, %v1621
    %v1946 = vpack.c.b16 %v1628, %v1622
    %v1947 = vpack.c.b16 %v1629, %v1623
    %v1948 = vpack.c.b16 %v1636, %v1630
    %v1949 = vpack.c.b16 %v1637, %v1631
    %v1950 = vpack.c.b16 %v1638, %v1632
    %v1951 = vpack.c.b16 %v1639, %v1633
    %v1952 = vpack.c.b16 %v1640, %v1634
    %v1953 = vpack.c.b16 %v1641, %v1635
    %v1954 = vpack.c.b16 %v1648, %v1642
    %v1955 = vpack.c.b16 %v1649, %v1643
    %v1956 = vpack.c.b16 %v1650, %v1644
    %v1957 = vpack.c.b16 %v1651, %v1645
    %v1958 = vpack.c.b16 %v1652, %v1646
    %v1959 = vpack.c.b16 %v1653, %v1647
    %v1960 = vpack.c.b16 %v1660, %v1654
    %v1961 = vpack.c.b16 %v1661, %v1655
    %v1962 = vpack.c.b16 %v1662, %v1656
    %v1963 = vpack.c.b16 %v1663, %v1657
    %v1964 = vpack.c.b16 %v1664, %v1658
    %v1965 = vpack.c.b16 %v1665, %v1659
    %v1966 = vpack.c.b16 %v1672, %v1666
    %v1967 = vpack.c.b16 %v1673, %v1667
    %v1968 = vpack.c.b16 %v1674, %v1668
    %v1969 = vpack.c.b16 %v1675, %v1669
    %v1970 = vpack.c.b16 %v1676, %v1670
    %v1971 = vpack.c.b16 %v1677, %v1671
    %v1972 = vpack.c.b16 %v1684, %v1678
    %v1973 = vpack.c.b16 %v1685, %v1679
    %v1974 = vpack.c.b16 %v1686, %v1680
    %v1975 = vpack.c.b16 %v1687, %v1681
    %v1976 = vpack.c.b16 %v1688, %v1682
    %v1977 = vpack.c.b16 %v1689, %v1683
    %2266 = vmatprep.subr.bf16.mxu0 %v1691
    %2267 = vmatpush1.bf16.msra.mxu0 %v1690
    %2268 = vmatprep.subr.bf16.mxu0 %v1697
    %2269 = vmatpush1.bf16.msra.mxu0 %v1696
    %2270 = vmatprep.subr.bf16.mxu0 %v1703
    %2271 = vmatpush1.bf16.msra.mxu0 %v1702
    %2272 = vmatprep.subr.bf16.mxu0 %v1709
    %2273 = vmatpush1.bf16.msra.mxu0 %v1708
    %2274 = vmatprep.subr.bf16.mxu0 %v1715
    %2275 = vmatpush1.bf16.msra.mxu0 %v1714
    %2276 = vmatprep.subr.bf16.mxu0 %v1721
    %2277 = vmatpush1.bf16.msra.mxu0 %v1720
    %2278 = vmatprep.subr.bf16.mxu0 %v1727
    %2279 = vmatpush1.bf16.msra.mxu0 %v1726
    %2280 = vmatprep.subr.bf16.mxu0 %v1733
    %2281 = vmatpush1.bf16.msra.mxu0 %v1732
    %2282 = vmatprep.subr.bf16.mxu0 %v1739
    %2283 = vmatpush1.bf16.msra.mxu0 %v1738
    %2284 = vmatprep.subr.bf16.mxu0 %v1745
    %2285 = vmatpush1.bf16.msra.mxu0 %v1744
    %2286 = vmatprep.subr.bf16.mxu0 %v1751
    %2287 = vmatpush1.bf16.msra.mxu0 %v1750
    %2288 = vmatprep.subr.bf16.mxu0 %v1757
    %2289 = vmatpush1.bf16.msra.mxu0 %v1756
    %2290 = vmatprep.subr.bf16.mxu0 %v1763
    %2291 = vmatpush1.bf16.msra.mxu0 %v1762
    %2292 = vmatprep.subr.bf16.mxu0 %v1769
    %2293 = vmatpush1.bf16.msra.mxu0 %v1768
    %2294 = vmatprep.subr.bf16.mxu0 %v1775
    %2295 = vmatpush1.bf16.msra.mxu0 %v1774
    %2296 = vmatprep.subr.bf16.mxu0 %v1781
    %2297 = vmatpush1.bf16.msra.mxu0 %v1780
    %2298 = vmatprep.mubr.bf16.mxu0 %v790
    %2299 = vmatmul.mubr.bf16.gmra.mrb[0].mxu0 %v789
    %v2300 = vpop.f32.mrb[0].mxu0
    %v2301 = vadd.f32 %v799, %v2300
    %v2302 = vpop.f32.mrb[0].mxu0
    %v2303 = vadd.f32 %v803, %v2302
    %v2304 = vpop.f32.mrb[0].mxu0
    %v2305 = vpop.f32.mrb[0].mxu0
    %2306 = vdwg.mxu0
    %2307 = vmatprep.subr.bf16.mxu0 %v1787
    %2308 = vmatpush1.bf16.msra.mxu0 %v1786
    %2309 = vmatprep.subr.bf16.mxu0 %v1793
    %2310 = vmatpush1.bf16.msra.mxu0 %v1792
    %2311 = vmatprep.subr.bf16.mxu0 %v1799
    %2312 = vmatpush1.bf16.msra.mxu0 %v1798
    %2313 = vmatprep.subr.bf16.mxu0 %v1805
    %2314 = vmatpush1.bf16.msra.mxu0 %v1804
    %2315 = vmatprep.subr.bf16.mxu0 %v1811
    %2316 = vmatpush1.bf16.msra.mxu0 %v1810
    %2317 = vmatprep.subr.bf16.mxu0 %v1817
    %2318 = vmatpush1.bf16.msra.mxu0 %v1816
    %2319 = vmatprep.subr.bf16.mxu0 %v1823
    %2320 = vmatpush1.bf16.msra.mxu0 %v1822
    %2321 = vmatprep.subr.bf16.mxu0 %v1829
    %2322 = vmatpush1.bf16.msra.mxu0 %v1828
    %2323 = vmatprep.subr.bf16.mxu0 %v1835
    %2324 = vmatpush1.bf16.msra.mxu0 %v1834
    %2325 = vmatprep.subr.bf16.mxu0 %v1841
    %2326 = vmatpush1.bf16.msra.mxu0 %v1840
    %2327 = vmatprep.subr.bf16.mxu0 %v1847
    %2328 = vmatpush1.bf16.msra.mxu0 %v1846
    %2329 = vmatprep.subr.bf16.mxu0 %v1853
    %2330 = vmatpush1.bf16.msra.mxu0 %v1852
    %2331 = vmatprep.subr.bf16.mxu0 %v1859
    %2332 = vmatpush1.bf16.msra.mxu0 %v1858
    %2333 = vmatprep.subr.bf16.mxu0 %v1865
    %2334 = vmatpush1.bf16.msra.mxu0 %v1864
    %2335 = vmatprep.subr.bf16.mxu0 %v1871
    %2336 = vmatpush1.bf16.msra.mxu0 %v1870
    %2337 = vmatprep.subr.bf16.mxu0 %v1877
    %2338 = vmatpush1.bf16.msra.mxu0 %v1876
    %2339 = vmatprep.mubr.bf16.mxu0 %v792
    %2340 = vmatmul.mubr.bf16.gmra.mrb[0].mxu0 %v791
    %v2341 = vpop.f32.mrb[0].mxu0
    %v2342 = vadd.f32 %v2301, %v2341
    %v2343 = vpop.f32.mrb[0].mxu0
    %v2344 = vadd.f32 %v2303, %v2343
    %v2345 = vpop.f32.mrb[0].mxu0
    %v2346 = vpop.f32.mrb[0].mxu0
    %2347 = vdwg.mxu0
    %2348 = vmatprep.subr.bf16.mxu0 %v1883
    %2349 = vmatpush1.bf16.msra.mxu0 %v1882
    %2350 = vmatprep.subr.bf16.mxu0 %v1889
    %2351 = vmatpush1.bf16.msra.mxu0 %v1888
    %2352 = vmatprep.subr.bf16.mxu0 %v1895
    %2353 = vmatpush1.bf16.msra.mxu0 %v1894
    %2354 = vmatprep.subr.bf16.mxu0 %v1901
    %2355 = vmatpush1.bf16.msra.mxu0 %v1900
    %2356 = vmatprep.subr.bf16.mxu0 %v1907
    %2357 = vmatpush1.bf16.msra.mxu0 %v1906
    %2358 = vmatprep.subr.bf16.mxu0 %v1913
    %2359 = vmatpush1.bf16.msra.mxu0 %v1912
    %2360 = vmatprep.subr.bf16.mxu0 %v1919
    %2361 = vmatpush1.bf16.msra.mxu0 %v1918
    %2362 = vmatprep.subr.bf16.mxu0 %v1925
    %2363 = vmatpush1.bf16.msra.mxu0 %v1924
    %2364 = vmatprep.subr.bf16.mxu0 %v1931
    %2365 = vmatpush1.bf16.msra.mxu0 %v1930
    %2366 = vmatprep.subr.bf16.mxu0 %v1937
    %2367 = vmatpush1.bf16.msra.mxu0 %v1936
    %2368 = vmatprep.subr.bf16.mxu0 %v1943
    %2369 = vmatpush1.bf16.msra.mxu0 %v1942
    %2370 = vmatprep.subr.bf16.mxu0 %v1949
    %2371 = vmatpush1.bf16.msra.mxu0 %v1948
    %2372 = vmatprep.subr.bf16.mxu0 %v1955
    %2373 = vmatpush1.bf16.msra.mxu0 %v1954
    %2374 = vmatprep.subr.bf16.mxu0 %v1961
    %2375 = vmatpush1.bf16.msra.mxu0 %v1960
    %2376 = vmatprep.subr.bf16.mxu0 %v1967
    %2377 = vmatpush1.bf16.msra.mxu0 %v1966
    %2378 = vmatprep.subr.bf16.mxu0 %v1973
    %2379 = vmatpush1.bf16.msra.mxu0 %v1972
    %2380 = vmatprep.mubr.bf16.mxu0 %v794
    %2381 = vmatmul.mubr.bf16.gmra.mrb[0].mxu0 %v793
    %v2382 = vpop.f32.mrb[0].mxu0
    %v2383 = vadd.f32 %v2342, %v2382
    %v2384 = vpop.f32.mrb[0].mxu0
    %v2385 = vadd.f32 %v2344, %v2384
    %v2386 = vpop.f32.mrb[0].mxu0
    %v2387 = vpop.f32.mrb[0].mxu0
    %2388 = vdwg.mxu0
    %2389 = vmatprep.subr.bf16.mxu0 %v1693
    %2390 = vmatpush1.bf16.msra.mxu0 %v1692
    %2391 = vmatprep.subr.bf16.mxu0 %v1699
    %2392 = vmatpush1.bf16.msra.mxu0 %v1698
    %2393 = vmatprep.subr.bf16.mxu0 %v1705
    %2394 = vmatpush1.bf16.msra.mxu0 %v1704
    %2395 = vmatprep.subr.bf16.mxu0 %v1711
    %2396 = vmatpush1.bf16.msra.mxu0 %v1710
    %2397 = vmatprep.subr.bf16.mxu0 %v1717
    %2398 = vmatpush1.bf16.msra.mxu0 %v1716
    %2399 = vmatprep.subr.bf16.mxu0 %v1723
    %2400 = vmatpush1.bf16.msra.mxu0 %v1722
    %2401 = vmatprep.subr.bf16.mxu0 %v1729
    %2402 = vmatpush1.bf16.msra.mxu0 %v1728
    %2403 = vmatprep.subr.bf16.mxu0 %v1735
    %2404 = vmatpush1.bf16.msra.mxu0 %v1734
    %2405 = vmatprep.subr.bf16.mxu0 %v1741
    %2406 = vmatpush1.bf16.msra.mxu0 %v1740
    %2407 = vmatprep.subr.bf16.mxu0 %v1747
    %2408 = vmatpush1.bf16.msra.mxu0 %v1746
    %2409 = vmatprep.subr.bf16.mxu0 %v1753
    %2410 = vmatpush1.bf16.msra.mxu0 %v1752
    %2411 = vmatprep.subr.bf16.mxu0 %v1759
    %2412 = vmatpush1.bf16.msra.mxu0 %v1758
    %2413 = vmatprep.subr.bf16.mxu0 %v1765
    %2414 = vmatpush1.bf16.msra.mxu0 %v1764
    %2415 = vmatprep.subr.bf16.mxu0 %v1771
    %2416 = vmatpush1.bf16.msra.mxu0 %v1770
    %2417 = vmatprep.subr.bf16.mxu0 %v1777
    %2418 = vmatpush1.bf16.msra.mxu0 %v1776
    %2419 = vmatprep.subr.bf16.mxu0 %v1783
    %2420 = vmatpush1.bf16.msra.mxu0 %v1782
    %2421 = vmatprep.mubr.bf16.mxu0 %v790
    %2422 = vmatmul.mubr.bf16.gmra.mrb[0].mxu0 %v789
    %v2423 = vpop.f32.mrb[0].mxu0
    %v2424 = vadd.f32 %v807, %v2423
    %v2425 = vpop.f32.mrb[0].mxu0
    %v2426 = vadd.f32 %v811, %v2425
    %v2427 = vpop.f32.mrb[0].mxu0
    %v2428 = vpop.f32.mrb[0].mxu0
    %2429 = vdwg.mxu0
    %2430 = vmatprep.subr.bf16.mxu0 %v1789
    %2431 = vmatpush1.bf16.msra.mxu0 %v1788
    %2432 = vmatprep.subr.bf16.mxu0 %v1795
    %2433 = vmatpush1.bf16.msra.mxu0 %v1794
    %2434 = vmatprep.subr.bf16.mxu0 %v1801
    %2435 = vmatpush1.bf16.msra.mxu0 %v1800
    %2436 = vmatprep.subr.bf16.mxu0 %v1807
    %2437 = vmatpush1.bf16.msra.mxu0 %v1806
    %2438 = vmatprep.subr.bf16.mxu0 %v1813
    %2439 = vmatpush1.bf16.msra.mxu0 %v1812
    %2440 = vmatprep.subr.bf16.mxu0 %v1819
    %2441 = vmatpush1.bf16.msra.mxu0 %v1818
    %2442 = vmatprep.subr.bf16.mxu0 %v1825
    %2443 = vmatpush1.bf16.msra.mxu0 %v1824
    %2444 = vmatprep.subr.bf16.mxu0 %v1831
    %2445 = vmatpush1.bf16.msra.mxu0 %v1830
    %2446 = vmatprep.subr.bf16.mxu0 %v1837
    %2447 = vmatpush1.bf16.msra.mxu0 %v1836
    %2448 = vmatprep.subr.bf16.mxu0 %v1843
    %2449 = vmatpush1.bf16.msra.mxu0 %v1842
    %2450 = vmatprep.subr.bf16.mxu0 %v1849
    %2451 = vmatpush1.bf16.msra.mxu0 %v1848
    %2452 = vmatprep.subr.bf16.mxu0 %v1855
    %2453 = vmatpush1.bf16.msra.mxu0 %v1854
    %2454 = vmatprep.subr.bf16.mxu0 %v1861
    %2455 = vmatpush1.bf16.msra.mxu0 %v1860
    %2456 = vmatprep.subr.bf16.mxu0 %v1867
    %2457 = vmatpush1.bf16.msra.mxu0 %v1866
    %2458 = vmatprep.subr.bf16.mxu0 %v1873
    %2459 = vmatpush1.bf16.msra.mxu0 %v1872
    %2460 = vmatprep.subr.bf16.mxu0 %v1879
    %2461 = vmatpush1.bf16.msra.mxu0 %v1878
    %2462 = vmatprep.mubr.bf16.mxu0 %v792
    %2463 = vmatmul.mubr.bf16.gmra.mrb[0].mxu0 %v791
    %v2464 = vpop.f32.mrb[0].mxu0
    %v2465 = vadd.f32 %v2424, %v2464
    %v2466 = vpop.f32.mrb[0].mxu0
    %v2467 = vadd.f32 %v2426, %v2466
    %v2468 = vpop.f32.mrb[0].mxu0
    %v2469 = vpop.f32.mrb[0].mxu0
    %2470 = vdwg.mxu0
    %2471 = vmatprep.subr.bf16.mxu0 %v1885
    %2472 = vmatpush1.bf16.msra.mxu0 %v1884
    %2473 = vmatprep.subr.bf16.mxu0 %v1891
    %2474 = vmatpush1.bf16.msra.mxu0 %v1890
    %2475 = vmatprep.subr.bf16.mxu0 %v1897
    %2476 = vmatpush1.bf16.msra.mxu0 %v1896
    %2477 = vmatprep.subr.bf16.mxu0 %v1903
    %2478 = vmatpush1.bf16.msra.mxu0 %v1902
    %2479 = vmatprep.subr.bf16.mxu0 %v1909
    %2480 = vmatpush1.bf16.msra.mxu0 %v1908
    %2481 = vmatprep.subr.bf16.mxu0 %v1915
    %2482 = vmatpush1.bf16.msra.mxu0 %v1914
    %2483 = vmatprep.subr.bf16.mxu0 %v1921
    %2484 = vmatpush1.bf16.msra.mxu0 %v1920
    %2485 = vmatprep.subr.bf16.mxu0 %v1927
    %2486 = vmatpush1.bf16.msra.mxu0 %v1926
    %2487 = vmatprep.subr.bf16.mxu0 %v1933
    %2488 = vmatpush1.bf16.msra.mxu0 %v1932
    %2489 = vmatprep.subr.bf16.mxu0 %v1939
    %2490 = vmatpush1.bf16.msra.mxu0 %v1938
    %2491 = vmatprep.subr.bf16.mxu0 %v1945
    %2492 = vmatpush1.bf16.msra.mxu0 %v1944
    %2493 = vmatprep.subr.bf16.mxu0 %v1951
    %2494 = vmatpush1.bf16.msra.mxu0 %v1950
    %2495 = vmatprep.subr.bf16.mxu0 %v1957
    %2496 = vmatpush1.bf16.msra.mxu0 %v1956
    %2497 = vmatprep.subr.bf16.mxu0 %v1963
    %2498 = vmatpush1.bf16.msra.mxu0 %v1962
    %2499 = vmatprep.subr.bf16.mxu0 %v1969
    %2500 = vmatpush1.bf16.msra.mxu0 %v1968
    %2501 = vmatprep.subr.bf16.mxu0 %v1975
    %2502 = vmatpush1.bf16.msra.mxu0 %v1974
    %2503 = vmatprep.mubr.bf16.mxu0 %v794
    %2504 = vmatmul.mubr.bf16.gmra.mrb[0].mxu0 %v793
    %v2505 = vpop.f32.mrb[0].mxu0
    %v2506 = vadd.f32 %v2465, %v2505
    %v2507 = vpop.f32.mrb[0].mxu0
    %v2508 = vadd.f32 %v2467, %v2507
    %v2509 = vpop.f32.mrb[0].mxu0
    %v2510 = vpop.f32.mrb[0].mxu0
    %2511 = vdwg.mxu0
    %2512 = vmatprep.subr.bf16.mxu0 %v1695
    %2513 = vmatpush1.bf16.msra.mxu0 %v1694
    %2514 = vmatprep.subr.bf16.mxu0 %v1701
    %2515 = vmatpush1.bf16.msra.mxu0 %v1700
    %2516 = vmatprep.subr.bf16.mxu0 %v1707
    %2517 = vmatpush1.bf16.msra.mxu0 %v1706
    %2518 = vmatprep.subr.bf16.mxu0 %v1713
    %2519 = vmatpush1.bf16.msra.mxu0 %v1712
    %2520 = vmatprep.subr.bf16.mxu0 %v1719
    %2521 = vmatpush1.bf16.msra.mxu0 %v1718
    %2522 = vmatprep.subr.bf16.mxu0 %v1725
    %2523 = vmatpush1.bf16.msra.mxu0 %v1724
    %2524 = vmatprep.subr.bf16.mxu0 %v1731
    %2525 = vmatpush1.bf16.msra.mxu0 %v1730
    %2526 = vmatprep.subr.bf16.mxu0 %v1737
    %2527 = vmatpush1.bf16.msra.mxu0 %v1736
    %2528 = vmatprep.subr.bf16.mxu0 %v1743
    %2529 = vmatpush1.bf16.msra.mxu0 %v1742
    %2530 = vmatprep.subr.bf16.mxu0 %v1749
    %2531 = vmatpush1.bf16.msra.mxu0 %v1748
    %2532 = vmatprep.subr.bf16.mxu0 %v1755
    %2533 = vmatpush1.bf16.msra.mxu0 %v1754
    %2534 = vmatprep.subr.bf16.mxu0 %v1761
    %2535 = vmatpush1.bf16.msra.mxu0 %v1760
    %2536 = vmatprep.subr.bf16.mxu0 %v1767
    %2537 = vmatpush1.bf16.msra.mxu0 %v1766
    %2538 = vmatprep.subr.bf16.mxu0 %v1773
    %2539 = vmatpush1.bf16.msra.mxu0 %v1772
    %2540 = vmatprep.subr.bf16.mxu0 %v1779
    %2541 = vmatpush1.bf16.msra.mxu0 %v1778
    %2542 = vmatprep.subr.bf16.mxu0 %v1785
    %2543 = vmatpush1.bf16.msra.mxu0 %v1784
    %2544 = vmatprep.mubr.bf16.mxu0 %v790
    %2545 = vmatmul.mubr.bf16.gmra.mrb[0].mxu0 %v789
    %v2546 = vpop.f32.mrb[0].mxu0
    %v2547 = vadd.f32 %v815, %v2546
    %v2548 = vpop.f32.mrb[0].mxu0
    %v2549 = vadd.f32 %v819, %v2548
    %v2550 = vpop.f32.mrb[0].mxu0
    %v2551 = vpop.f32.mrb[0].mxu0
    %2552 = vdwg.mxu0
    %2553 = vmatprep.subr.bf16.mxu0 %v1791
    %2554 = vmatpush1.bf16.msra.mxu0 %v1790
    %2555 = vmatprep.subr.bf16.mxu0 %v1797
    %2556 = vmatpush1.bf16.msra.mxu0 %v1796
    %2557 = vmatprep.subr.bf16.mxu0 %v1803
    %2558 = vmatpush1.bf16.msra.mxu0 %v1802
    %2559 = vmatprep.subr.bf16.mxu0 %v1809
    %2560 = vmatpush1.bf16.msra.mxu0 %v1808
    %2561 = vmatprep.subr.bf16.mxu0 %v1815
    %2562 = vmatpush1.bf16.msra.mxu0 %v1814
    %2563 = vmatprep.subr.bf16.mxu0 %v1821
    %2564 = vmatpush1.bf16.msra.mxu0 %v1820
    %2565 = vmatprep.subr.bf16.mxu0 %v1827
    %2566 = vmatpush1.bf16.msra.mxu0 %v1826
    %2567 = vmatprep.subr.bf16.mxu0 %v1833
    %2568 = vmatpush1.bf16.msra.mxu0 %v1832
    %2569 = vmatprep.subr.bf16.mxu0 %v1839
    %2570 = vmatpush1.bf16.msra.mxu0 %v1838
    %2571 = vmatprep.subr.bf16.mxu0 %v1845
    %2572 = vmatpush1.bf16.msra.mxu0 %v1844
    %2573 = vmatprep.subr.bf16.mxu0 %v1851
    %2574 = vmatpush1.bf16.msra.mxu0 %v1850
    %2575 = vmatprep.subr.bf16.mxu0 %v1857
    %2576 = vmatpush1.bf16.msra.mxu0 %v1856
    %2577 = vmatprep.subr.bf16.mxu0 %v1863
    %2578 = vmatpush1.bf16.msra.mxu0 %v1862
    %2579 = vmatprep.subr.bf16.mxu0 %v1869
    %2580 = vmatpush1.bf16.msra.mxu0 %v1868
    %2581 = vmatprep.subr.bf16.mxu0 %v1875
    %2582 = vmatpush1.bf16.msra.mxu0 %v1874
    %2583 = vmatprep.subr.bf16.mxu0 %v1881
    %2584 = vmatpush1.bf16.msra.mxu0 %v1880
    %2585 = vmatprep.mubr.bf16.mxu0 %v792
    %2586 = vmatmul.mubr.bf16.gmra.mrb[0].mxu0 %v791
    %v2587 = vpop.f32.mrb[0].mxu0
    %v2588 = vadd.f32 %v2547, %v2587
    %v2589 = vpop.f32.mrb[0].mxu0
    %v2590 = vadd.f32 %v2549, %v2589
    %v2591 = vpop.f32.mrb[0].mxu0
    %v2592 = vpop.f32.mrb[0].mxu0
    %2593 = vdwg.mxu0
    %2594 = vmatprep.subr.bf16.mxu0 %v1887
    %2595 = vmatpush1.bf16.msra.mxu0 %v1886
    %2596 = vmatprep.subr.bf16.mxu0 %v1893
    %2597 = vmatpush1.bf16.msra.mxu0 %v1892
    %2598 = vmatprep.subr.bf16.mxu0 %v1899
    %2599 = vmatpush1.bf16.msra.mxu0 %v1898
    %2600 = vmatprep.subr.bf16.mxu0 %v1905
    %2601 = vmatpush1.bf16.msra.mxu0 %v1904
    %2602 = vmatprep.subr.bf16.mxu0 %v1911
    %2603 = vmatpush1.bf16.msra.mxu0 %v1910
    %2604 = vmatprep.subr.bf16.mxu0 %v1917
    %2605 = vmatpush1.bf16.msra.mxu0 %v1916
    %2606 = vmatprep.subr.bf16.mxu0 %v1923
    %2607 = vmatpush1.bf16.msra.mxu0 %v1922
    %2608 = vmatprep.subr.bf16.mxu0 %v1929
    %2609 = vmatpush1.bf16.msra.mxu0 %v1928
    %2610 = vmatprep.subr.bf16.mxu0 %v1935
    %2611 = vmatpush1.bf16.msra.mxu0 %v1934
    %2612 = vmatprep.subr.bf16.mxu0 %v1941
    %2613 = vmatpush1.bf16.msra.mxu0 %v1940
    %2614 = vmatprep.subr.bf16.mxu0 %v1947
    %2615 = vmatpush1.bf16.msra.mxu0 %v1946
    %2616 = vmatprep.subr.bf16.mxu0 %v1953
    %2617 = vmatpush1.bf16.msra.mxu0 %v1952
    %2618 = vmatprep.subr.bf16.mxu0 %v1959
    %2619 = vmatpush1.bf16.msra.mxu0 %v1958
    %2620 = vmatprep.subr.bf16.mxu0 %v1965
    %2621 = vmatpush1.bf16.msra.mxu0 %v1964
    %2622 = vmatprep.subr.bf16.mxu0 %v1971
    %2623 = vmatpush1.bf16.msra.mxu0 %v1970
    %2624 = vmatprep.subr.bf16.mxu0 %v1977
    %2625 = vmatpush1.bf16.msra.mxu0 %v1976
    %2626 = vmatprep.mubr.bf16.mxu0 %v794
    %2627 = vmatmul.mubr.bf16.gmra.mrb[0].mxu0 %v793
    %v2628 = vpop.f32.mrb[0].mxu0
    %v2629 = vadd.f32 %v2588, %v2628
    %v2630 = vpop.f32.mrb[0].mxu0
    %v2631 = vadd.f32 %v2590, %v2630
    %v2632 = vpop.f32.mrb[0].mxu0
    %v2633 = vpop.f32.mrb[0].mxu0
    %2634 = vdwg.mxu0
    %v2635 = vld [vmem:[%s7] sm:$0x1]
    %v2636 = vld [vmem:[%s8] sm:$0x1]
    %v2637 = vsel %vm293, %v2383, 0.0
    %v2638 = vrot.slane %v2637, 4
    %v2639 = vadd.f32 %v2637, %v2638
    %v2640 = vrot.slane %v2639, 2
    %v2641 = vadd.f32 %v2639, %v2640
    %v2642 = vrot.slane %v2641, 1
    %v2643 = vadd.f32 %v2641, %v2642
    %v2644 = vsel %vm293, %v2385, 0.0
    %v2645 = vrot.slane %v2644, 4
    %v2646 = vadd.f32 %v2644, %v2645
    %v2647 = vrot.slane %v2646, 2
    %v2648 = vadd.f32 %v2646, %v2647
    %v2649 = vrot.slane %v2648, 1
    %v2650 = vadd.f32 %v2648, %v2649
    %v2651 = vsel %vm293, %v2506, 0.0
    %v2652 = vrot.slane %v2651, 4
    %v2653 = vadd.f32 %v2651, %v2652
    %v2654 = vrot.slane %v2653, 2
    %v2655 = vadd.f32 %v2653, %v2654
    %v2656 = vrot.slane %v2655, 1
    %v2657 = vadd.f32 %v2655, %v2656
    %v2658 = vsel %vm293, %v2508, 0.0
    %v2659 = vrot.slane %v2658, 4
    %v2660 = vadd.f32 %v2658, %v2659
    %v2661 = vrot.slane %v2660, 2
    %v2662 = vadd.f32 %v2660, %v2661
    %v2663 = vrot.slane %v2662, 1
    %v2664 = vadd.f32 %v2662, %v2663
    %v2665 = vsel %vm293, %v2629, 0.0
    %v2666 = vrot.slane %v2665, 4
    %v2667 = vadd.f32 %v2665, %v2666
    %v2668 = vrot.slane %v2667, 2
    %v2669 = vadd.f32 %v2667, %v2668
    %v2670 = vrot.slane %v2669, 1
    %v2671 = vadd.f32 %v2669, %v2670
    %v2672 = vsel %vm293, %v2631, 0.0
    %v2673 = vrot.slane %v2672, 4
    %v2674 = vadd.f32 %v2672, %v2673
    %v2675 = vrot.slane %v2674, 2
    %v2676 = vadd.f32 %v2674, %v2675
    %v2677 = vrot.slane %v2676, 1
    %v2678 = vadd.f32 %v2676, %v2677
    %v2679 = vmul.f32 %v2383, %v2383
    %v2680 = vmul.f32 %v2385, %v2385
    %v2681 = vmul.f32 %v2506, %v2506
    %v2682 = vmul.f32 %v2508, %v2508
    %v2683 = vmul.f32 %v2629, %v2629
    %v2684 = vmul.f32 %v2631, %v2631
    %v2685 = vsel %vm293, %v2679, 0.0
    %v2686 = vrot.slane %v2685, 4
    %v2687 = vadd.f32 %v2685, %v2686
    %v2688 = vrot.slane %v2687, 2
    %v2689 = vadd.f32 %v2687, %v2688
    %v2690 = vrot.slane %v2689, 1
    %v2691 = vadd.f32 %v2689, %v2690
    %v2692 = vsel %vm293, %v2680, 0.0
    %v2693 = vrot.slane %v2692, 4
    %v2694 = vadd.f32 %v2692, %v2693
    %v2695 = vrot.slane %v2694, 2
    %v2696 = vadd.f32 %v2694, %v2695
    %v2697 = vrot.slane %v2696, 1
    %v2698 = vadd.f32 %v2696, %v2697
    %v2699 = vsel %vm293, %v2681, 0.0
    %v2700 = vrot.slane %v2699, 4
    %v2701 = vadd.f32 %v2699, %v2700
    %v2702 = vrot.slane %v2701, 2
    %v2703 = vadd.f32 %v2701, %v2702
    %v2704 = vrot.slane %v2703, 1
    %v2705 = vadd.f32 %v2703, %v2704
    %v2706 = vsel %vm293, %v2682, 0.0
    %v2707 = vrot.slane %v2706, 4
    %v2708 = vadd.f32 %v2706, %v2707
    %v2709 = vrot.slane %v2708, 2
    %v2710 = vadd.f32 %v2708, %v2709
    %v2711 = vrot.slane %v2710, 1
    %v2712 = vadd.f32 %v2710, %v2711
    %v2713 = vsel %vm293, %v2683, 0.0
    %v2714 = vrot.slane %v2713, 4
    %v2715 = vadd.f32 %v2713, %v2714
    %v2716 = vrot.slane %v2715, 2
    %v2717 = vadd.f32 %v2715, %v2716
    %v2718 = vrot.slane %v2717, 1
    %v2719 = vadd.f32 %v2717, %v2718
    %v2720 = vsel %vm293, %v2684, 0.0
    %v2721 = vrot.slane %v2720, 4
    %v2722 = vadd.f32 %v2720, %v2721
    %v2723 = vrot.slane %v2722, 2
    %v2724 = vadd.f32 %v2722, %v2723
    %v2725 = vrot.slane %v2724, 1
    %v2726 = vadd.f32 %v2724, %v2725
    %v2727 = vadd.f32 %v2643, %v2650
    %v2728 = vadd.f32 %v2657, %v2664
    %v2729 = vadd.f32 %v2671, %v2678
    %v2730 = vadd.f32 %v2727, %v2728
    %v2731 = vadd.f32 %v2730, %v2729
    %v2732 = vadd.f32 %v2691, %v2698
    %v2733 = vadd.f32 %v2705, %v2712
    %v2734 = vadd.f32 %v2719, %v2726
    %v2735 = vadd.f32 %v2732, %v2733
    %v2736 = vadd.f32 %v2735, %v2734
    %v2737 = vmul.f32 %v2731, 0.083333336
    %v2738 = vmul.f32 %v2736, 0.083333336
    %v2739 = vmul.f32 %v2737, %v2737
    %v2740 = vsub.f32 %v2738, %v2739
    %v2741 = vadd.f32 %v2740, 1e-05
    %v2742 = vrsqrt.pop %v2741
    %v2743 = vmul.f32 %v2635, %v2742
    %v2744 = vmul.f32 %v2737, %v2743
    %v2745 = vsub.f32 %v2636, %v2744
    %v2746 = vlaneseq
    %v2747 = vshrl.u32 %v2746, 7
    %v2748 = vsub.s32 0, %v2747
    %v2749 = vrot.slane %v2743, %v2748
    %v2750 = vmul.f32 %v2383, %v2749
    %v2751 = vmul.f32 %v2385, %v2749
    %v2752 = vmul.f32 %v2506, %v2749
    %v2753 = vmul.f32 %v2508, %v2749
    %v2754 = vmul.f32 %v2629, %v2749
    %v2755 = vmul.f32 %v2631, %v2749
    %v2756 = vlaneseq
    %v2757 = vshrl.u32 %v2756, 7
    %v2758 = vsub.s32 0, %v2757
    %v2759 = vrot.slane %v2745, %v2758
    %v2760 = vadd.f32 %v2750, %v2759
    %v2761 = vadd.f32 %v2751, %v2759
    %v2762 = vadd.f32 %v2752, %v2759
    %v2763 = vadd.f32 %v2753, %v2759
    %v2764 = vadd.f32 %v2754, %v2759
    %v2765 = vadd.f32 %v2755, %v2759
    %v2766 = vmax.f32 %v2760, 0.0
    %v2767 = vmax.f32 %v2761, 0.0
    %v2768 = vmax.f32 %v2762, 0.0
    %v2769 = vmax.f32 %v2763, 0.0
    %v2770 = vmax.f32 %v2764, 0.0
    %v2771 = vmax.f32 %v2765, 0.0
    %v2772 = vld [vmem:[%s9] sm:$0xff]
    %v2773 = vld [vmem:[%s9 + $0x8] sm:$0xff]
    %v2774 = vld [vmem:[%s9 + $0x10] sm:$0xff]
    %v2775 = vld [vmem:[%s9 + $0x18] sm:$0xf]
    %v2776 = vld [vmem:[%s9 + $0x1c] sm:$0xff]
    %v2777 = vld [vmem:[%s9 + $0x24] sm:$0xff]
    %v2778 = vld [vmem:[%s9 + $0x2c] sm:$0xff]
    %v2779 = vld [vmem:[%s9 + $0x34] sm:$0xf]
    %v2780 = vld [vmem:[%s9 + $0x38] sm:$0xff]
    %v2781 = vld [vmem:[%s9 + $0x40] sm:$0xff]
    %v2782 = vld [vmem:[%s9 + $0x48] sm:$0xff]
    %v2783 = vld [vmem:[%s9 + $0x50] sm:$0xf]
    %v2784 = vld [vmem:[%s9 + $0x54] sm:$0xff]
    %v2785 = vld [vmem:[%s9 + $0x5c] sm:$0xff]
    %v2786 = vld [vmem:[%s9 + $0x64] sm:$0xff]
    %v2787 = vld [vmem:[%s9 + $0x6c] sm:$0xf]
    %v2788 = vld [vmem:[%s9 + $0x70] sm:$0xff]
    %v2789 = vld [vmem:[%s9 + $0x78] sm:$0xff]
    %v2790 = vld [vmem:[%s9 + $0x80] sm:$0xff]
    %v2791 = vld [vmem:[%s9 + $0x88] sm:$0xf]
    %v2792 = vld [vmem:[%s9 + $0x8c] sm:$0xff]
    %v2793 = vld [vmem:[%s9 + $0x94] sm:$0xff]
    %v2794 = vld [vmem:[%s9 + $0x9c] sm:$0xff]
    %v2795 = vld [vmem:[%s9 + $0xa4] sm:$0xf]
    %v2796 = vld [vmem:[%s9 + $0xa8] sm:$0xff]
    %v2797 = vld [vmem:[%s9 + $0xb0] sm:$0xff]
    %v2798 = vld [vmem:[%s9 + $0xb8] sm:$0xff]
    %v2799 = vld [vmem:[%s9 + $0xc0] sm:$0xf]
    %v2800 = vld [vmem:[%s9 + $0xc4] sm:$0xff]
    %v2801 = vld [vmem:[%s9 + $0xcc] sm:$0xff]
    %v2802 = vld [vmem:[%s9 + $0xd4] sm:$0xff]
    %v2803 = vld [vmem:[%s9 + $0xdc] sm:$0xf]
    %v2804 = vld [vmem:[%s9 + $0xe0] sm:$0xff]
    %v2805 = vld [vmem:[%s9 + $0xe8] sm:$0xff]
    %v2806 = vld [vmem:[%s9 + $0xf0] sm:$0xff]
    %v2807 = vld [vmem:[%s9 + $0xf8] sm:$0xf]
    %v2808 = vld [vmem:[%s9 + $0xfc] sm:$0xff]
    %v2809 = vld [vmem:[%s9 + $0x104] sm:$0xff]
    %v2810 = vld [vmem:[%s9 + $0x10c] sm:$0xff]
    %v2811 = vld [vmem:[%s9 + $0x114] sm:$0xf]
    %v2812 = vld [vmem:[%s9 + $0x118] sm:$0xff]
    %v2813 = vld [vmem:[%s9 + $0x120] sm:$0xff]
    %v2814 = vld [vmem:[%s9 + $0x128] sm:$0xff]
    %v2815 = vld [vmem:[%s9 + $0x130] sm:$0xf]
    %v2816 = vld [vmem:[%s9 + $0x134] sm:$0xff]
    %v2817 = vld [vmem:[%s9 + $0x13c] sm:$0xff]
    %v2818 = vld [vmem:[%s9 + $0x144] sm:$0xff]
    %v2819 = vld [vmem:[%s9 + $0x14c] sm:$0xf]
    %v2820 = vld [vmem:[%s9 + $0x150] sm:$0xff]
    %v2821 = vld [vmem:[%s9 + $0x158] sm:$0xff]
    %v2822 = vld [vmem:[%s9 + $0x160] sm:$0xff]
    %v2823 = vld [vmem:[%s9 + $0x168] sm:$0xf]
    %v2824 = vld [vmem:[%s9 + $0x16c] sm:$0xff]
    %v2825 = vld [vmem:[%s9 + $0x174] sm:$0xff]
    %v2826 = vld [vmem:[%s9 + $0x17c] sm:$0xff]
    %v2827 = vld [vmem:[%s9 + $0x184] sm:$0xf]
    %v2828 = vld [vmem:[%s9 + $0x188] sm:$0xff]
    %v2829 = vld [vmem:[%s9 + $0x190] sm:$0xff]
    %v2830 = vld [vmem:[%s9 + $0x198] sm:$0xff]
    %v2831 = vld [vmem:[%s9 + $0x1a0] sm:$0xf]
    %v2832 = vld [vmem:[%s9 + $0x1a4] sm:$0xff]
    %v2833 = vld [vmem:[%s9 + $0x1ac] sm:$0xff]
    %v2834 = vld [vmem:[%s9 + $0x1b4] sm:$0xff]
    %v2835 = vld [vmem:[%s9 + $0x1bc] sm:$0xf]
    %v2836 = vld [vmem:[%s9 + $0x1c0] sm:$0xff]
    %v2837 = vld [vmem:[%s9 + $0x1c8] sm:$0xff]
    %v2838 = vld [vmem:[%s9 + $0x1d0] sm:$0xff]
    %v2839 = vld [vmem:[%s9 + $0x1d8] sm:$0xf]
    %v2840 = vld [vmem:[%s9 + $0x1dc] sm:$0xff]
    %v2841 = vld [vmem:[%s9 + $0x1e4] sm:$0xff]
    %v2842 = vld [vmem:[%s9 + $0x1ec] sm:$0xff]
    %v2843 = vld [vmem:[%s9 + $0x1f4] sm:$0xf]
    %v2844 = vld [vmem:[%s9 + $0x1f8] sm:$0xff]
    %v2845 = vld [vmem:[%s9 + $0x200] sm:$0xff]
    %v2846 = vld [vmem:[%s9 + $0x208] sm:$0xff]
    %v2847 = vld [vmem:[%s9 + $0x210] sm:$0xf]
    %v2848 = vld [vmem:[%s9 + $0x214] sm:$0xff]
    %v2849 = vld [vmem:[%s9 + $0x21c] sm:$0xff]
    %v2850 = vld [vmem:[%s9 + $0x224] sm:$0xff]
    %v2851 = vld [vmem:[%s9 + $0x22c] sm:$0xf]
    %v2852 = vld [vmem:[%s9 + $0x230] sm:$0xff]
    %v2853 = vld [vmem:[%s9 + $0x238] sm:$0xff]
    %v2854 = vld [vmem:[%s9 + $0x240] sm:$0xff]
    %v2855 = vld [vmem:[%s9 + $0x248] sm:$0xf]
    %v2856 = vld [vmem:[%s9 + $0x24c] sm:$0xff]
    %v2857 = vld [vmem:[%s9 + $0x254] sm:$0xff]
    %v2858 = vld [vmem:[%s9 + $0x25c] sm:$0xff]
    %v2859 = vld [vmem:[%s9 + $0x264] sm:$0xf]
    %v2860 = vld [vmem:[%s9 + $0x268] sm:$0xff]
    %v2861 = vld [vmem:[%s9 + $0x270] sm:$0xff]
    %v2862 = vld [vmem:[%s9 + $0x278] sm:$0xff]
    %v2863 = vld [vmem:[%s9 + $0x280] sm:$0xf]
    %v2864 = vld [vmem:[%s9 + $0x284] sm:$0xff]
    %v2865 = vld [vmem:[%s9 + $0x28c] sm:$0xff]
    %v2866 = vld [vmem:[%s9 + $0x294] sm:$0xff]
    %v2867 = vld [vmem:[%s9 + $0x29c] sm:$0xf]
    %v2868 = vld [vmem:[%s9 + $0x2a0] sm:$0xff]
    %v2869 = vld [vmem:[%s9 + $0x2a8] sm:$0xff]
    %v2870 = vld [vmem:[%s9 + $0x2b0] sm:$0xff]
    %v2871 = vld [vmem:[%s9 + $0x2b8] sm:$0xf]
    %v2872 = vld [vmem:[%s9 + $0x2bc] sm:$0xff]
    %v2873 = vld [vmem:[%s9 + $0x2c4] sm:$0xff]
    %v2874 = vld [vmem:[%s9 + $0x2cc] sm:$0xff]
    %v2875 = vld [vmem:[%s9 + $0x2d4] sm:$0xf]
    %v2876 = vld [vmem:[%s9 + $0x2d8] sm:$0xff]
    %v2877 = vld [vmem:[%s9 + $0x2e0] sm:$0xff]
    %v2878 = vld [vmem:[%s9 + $0x2e8] sm:$0xff]
    %v2879 = vld [vmem:[%s9 + $0x2f0] sm:$0xf]
    %v2880 = vld [vmem:[%s9 + $0x2f4] sm:$0xff]
    %v2881 = vld [vmem:[%s9 + $0x2fc] sm:$0xff]
    %v2882 = vld [vmem:[%s9 + $0x304] sm:$0xff]
    %v2883 = vld [vmem:[%s9 + $0x30c] sm:$0xf]
    %v2884 = vld [vmem:[%s9 + $0x310] sm:$0xff]
    %v2885 = vld [vmem:[%s9 + $0x318] sm:$0xff]
    %v2886 = vld [vmem:[%s9 + $0x320] sm:$0xff]
    %v2887 = vld [vmem:[%s9 + $0x328] sm:$0xf]
    %v2888 = vld [vmem:[%s9 + $0x32c] sm:$0xff]
    %v2889 = vld [vmem:[%s9 + $0x334] sm:$0xff]
    %v2890 = vld [vmem:[%s9 + $0x33c] sm:$0xff]
    %v2891 = vld [vmem:[%s9 + $0x344] sm:$0xf]
    %v2892 = vld [vmem:[%s9 + $0x348] sm:$0xff]
    %v2893 = vld [vmem:[%s9 + $0x350] sm:$0xff]
    %v2894 = vld [vmem:[%s9 + $0x358] sm:$0xff]
    %v2895 = vld [vmem:[%s9 + $0x360] sm:$0xf]
    %v2896 = vld [vmem:[%s9 + $0x364] sm:$0xff]
    %v2897 = vld [vmem:[%s9 + $0x36c] sm:$0xff]
    %v2898 = vld [vmem:[%s9 + $0x374] sm:$0xff]
    %v2899 = vld [vmem:[%s9 + $0x37c] sm:$0xf]
    %v2900 = vld [vmem:[%s9 + $0x380] sm:$0xff]
    %v2901 = vld [vmem:[%s9 + $0x388] sm:$0xff]
    %v2902 = vld [vmem:[%s9 + $0x390] sm:$0xff]
    %v2903 = vld [vmem:[%s9 + $0x398] sm:$0xf]
    %v2904 = vld [vmem:[%s9 + $0x39c] sm:$0xff]
    %v2905 = vld [vmem:[%s9 + $0x3a4] sm:$0xff]
    %v2906 = vld [vmem:[%s9 + $0x3ac] sm:$0xff]
    %v2907 = vld [vmem:[%s9 + $0x3b4] sm:$0xf]
    %v2908 = vld [vmem:[%s9 + $0x3b8] sm:$0xff]
    %v2909 = vld [vmem:[%s9 + $0x3c0] sm:$0xff]
    %v2910 = vld [vmem:[%s9 + $0x3c8] sm:$0xff]
    %v2911 = vld [vmem:[%s9 + $0x3d0] sm:$0xf]
    %v2912 = vld [vmem:[%s9 + $0x3d4] sm:$0xff]
    %v2913 = vld [vmem:[%s9 + $0x3dc] sm:$0xff]
    %v2914 = vld [vmem:[%s9 + $0x3e4] sm:$0xff]
    %v2915 = vld [vmem:[%s9 + $0x3ec] sm:$0xf]
    %v2916 = vld [vmem:[%s9 + $0x3f0] sm:$0xff]
    %v2917 = vld [vmem:[%s9 + $0x3f8] sm:$0xff]
    %v2918 = vld [vmem:[%s9 + $0x400] sm:$0xff]
    %v2919 = vld [vmem:[%s9 + $0x408] sm:$0xf]
    %v2920 = vld [vmem:[%s9 + $0x40c] sm:$0xff]
    %v2921 = vld [vmem:[%s9 + $0x414] sm:$0xff]
    %v2922 = vld [vmem:[%s9 + $0x41c] sm:$0xff]
    %v2923 = vld [vmem:[%s9 + $0x424] sm:$0xf]
    %v2924 = vld [vmem:[%s9 + $0x428] sm:$0xff]
    %v2925 = vld [vmem:[%s9 + $0x430] sm:$0xff]
    %v2926 = vld [vmem:[%s9 + $0x438] sm:$0xff]
    %v2927 = vld [vmem:[%s9 + $0x440] sm:$0xf]
    %v2928 = vld [vmem:[%s9 + $0x444] sm:$0xff]
    %v2929 = vld [vmem:[%s9 + $0x44c] sm:$0xff]
    %v2930 = vld [vmem:[%s9 + $0x454] sm:$0xff]
    %v2931 = vld [vmem:[%s9 + $0x45c] sm:$0xf]
    %v2932 = vld [vmem:[%s9 + $0x460] sm:$0xff]
    %v2933 = vld [vmem:[%s9 + $0x468] sm:$0xff]
    %v2934 = vld [vmem:[%s9 + $0x470] sm:$0xff]
    %v2935 = vld [vmem:[%s9 + $0x478] sm:$0xf]
    %v2936 = vld [vmem:[%s9 + $0x47c] sm:$0xff]
    %v2937 = vld [vmem:[%s9 + $0x484] sm:$0xff]
    %v2938 = vld [vmem:[%s9 + $0x48c] sm:$0xff]
    %v2939 = vld [vmem:[%s9 + $0x494] sm:$0xf]
    %v2940 = vld [vmem:[%s9 + $0x498] sm:$0xff]
    %v2941 = vld [vmem:[%s9 + $0x4a0] sm:$0xff]
    %v2942 = vld [vmem:[%s9 + $0x4a8] sm:$0xff]
    %v2943 = vld [vmem:[%s9 + $0x4b0] sm:$0xf]
    %v2944 = vld [vmem:[%s9 + $0x4b4] sm:$0xff]
    %v2945 = vld [vmem:[%s9 + $0x4bc] sm:$0xff]
    %v2946 = vld [vmem:[%s9 + $0x4c4] sm:$0xff]
    %v2947 = vld [vmem:[%s9 + $0x4cc] sm:$0xf]
    %v2948 = vld [vmem:[%s9 + $0x4d0] sm:$0xff]
    %v2949 = vld [vmem:[%s9 + $0x4d8] sm:$0xff]
    %v2950 = vld [vmem:[%s9 + $0x4e0] sm:$0xff]
    %v2951 = vld [vmem:[%s9 + $0x4e8] sm:$0xf]
    %v2952 = vld [vmem:[%s9 + $0x4ec] sm:$0xff]
    %v2953 = vld [vmem:[%s9 + $0x4f4] sm:$0xff]
    %v2954 = vld [vmem:[%s9 + $0x4fc] sm:$0xff]
    %v2955 = vld [vmem:[%s9 + $0x504] sm:$0xf]
    %v2956 = vld [vmem:[%s9 + $0x508] sm:$0xff]
    %v2957 = vld [vmem:[%s9 + $0x510] sm:$0xff]
    %v2958 = vld [vmem:[%s9 + $0x518] sm:$0xff]
    %v2959 = vld [vmem:[%s9 + $0x520] sm:$0xf]
    %v2960 = vld [vmem:[%s9 + $0x524] sm:$0xff]
    %v2961 = vld [vmem:[%s9 + $0x52c] sm:$0xff]
    %v2962 = vld [vmem:[%s9 + $0x534] sm:$0xff]
    %v2963 = vld [vmem:[%s9 + $0x53c] sm:$0xf]
    %v2964 = vld [vmem:[%s9 + $0x540] sm:$0xff]
    %v2965 = vld [vmem:[%s9 + $0x548] sm:$0xff]
    %v2966 = vld [vmem:[%s9 + $0x550] sm:$0xff]
    %v2967 = vld [vmem:[%s9 + $0x558] sm:$0xf]
    %v2968 = vld [vmem:[%s9 + $0x55c] sm:$0xff]
    %v2969 = vld [vmem:[%s9 + $0x564] sm:$0xff]
    %v2970 = vld [vmem:[%s9 + $0x56c] sm:$0xff]
    %v2971 = vld [vmem:[%s9 + $0x574] sm:$0xf]
    %v2972 = vld [vmem:[%s9 + $0x578] sm:$0xff]
    %v2973 = vld [vmem:[%s9 + $0x580] sm:$0xff]
    %v2974 = vld [vmem:[%s9 + $0x588] sm:$0xff]
    %v2975 = vld [vmem:[%s9 + $0x590] sm:$0xf]
    %v2976 = vld [vmem:[%s9 + $0x594] sm:$0xff]
    %v2977 = vld [vmem:[%s9 + $0x59c] sm:$0xff]
    %v2978 = vld [vmem:[%s9 + $0x5a4] sm:$0xff]
    %v2979 = vld [vmem:[%s9 + $0x5ac] sm:$0xf]
    %v2980 = vld [vmem:[%s9 + $0x5b0] sm:$0xff]
    %v2981 = vld [vmem:[%s9 + $0x5b8] sm:$0xff]
    %v2982 = vld [vmem:[%s9 + $0x5c0] sm:$0xff]
    %v2983 = vld [vmem:[%s9 + $0x5c8] sm:$0xf]
    %v2984 = vld [vmem:[%s9 + $0x5cc] sm:$0xff]
    %v2985 = vld [vmem:[%s9 + $0x5d4] sm:$0xff]
    %v2986 = vld [vmem:[%s9 + $0x5dc] sm:$0xff]
    %v2987 = vld [vmem:[%s9 + $0x5e4] sm:$0xf]
    %v2988 = vld [vmem:[%s9 + $0x5e8] sm:$0xff]
    %v2989 = vld [vmem:[%s9 + $0x5f0] sm:$0xff]
    %v2990 = vld [vmem:[%s9 + $0x5f8] sm:$0xff]
    %v2991 = vld [vmem:[%s9 + $0x600] sm:$0xf]
    %v2992 = vld [vmem:[%s9 + $0x604] sm:$0xff]
    %v2993 = vld [vmem:[%s9 + $0x60c] sm:$0xff]
    %v2994 = vld [vmem:[%s9 + $0x614] sm:$0xff]
    %v2995 = vld [vmem:[%s9 + $0x61c] sm:$0xf]
    %v2996 = vld [vmem:[%s9 + $0x620] sm:$0xff]
    %v2997 = vld [vmem:[%s9 + $0x628] sm:$0xff]
    %v2998 = vld [vmem:[%s9 + $0x630] sm:$0xff]
    %v2999 = vld [vmem:[%s9 + $0x638] sm:$0xf]
    %v3000 = vld [vmem:[%s9 + $0x63c] sm:$0xff]
    %v3001 = vld [vmem:[%s9 + $0x644] sm:$0xff]
    %v3002 = vld [vmem:[%s9 + $0x64c] sm:$0xff]
    %v3003 = vld [vmem:[%s9 + $0x654] sm:$0xf]
    %v3004 = vld [vmem:[%s9 + $0x658] sm:$0xff]
    %v3005 = vld [vmem:[%s9 + $0x660] sm:$0xff]
    %v3006 = vld [vmem:[%s9 + $0x668] sm:$0xff]
    %v3007 = vld [vmem:[%s9 + $0x670] sm:$0xf]
    %v3008 = vld [vmem:[%s9 + $0x674] sm:$0xff]
    %v3009 = vld [vmem:[%s9 + $0x67c] sm:$0xff]
    %v3010 = vld [vmem:[%s9 + $0x684] sm:$0xff]
    %v3011 = vld [vmem:[%s9 + $0x68c] sm:$0xf]
    %v3012 = vld [vmem:[%s9 + $0x690] sm:$0xff]
    %v3013 = vld [vmem:[%s9 + $0x698] sm:$0xff]
    %v3014 = vld [vmem:[%s9 + $0x6a0] sm:$0xff]
    %v3015 = vld [vmem:[%s9 + $0x6a8] sm:$0xf]
    %v3016 = vld [vmem:[%s9 + $0x6ac] sm:$0xff]
    %v3017 = vld [vmem:[%s9 + $0x6b4] sm:$0xff]
    %v3018 = vld [vmem:[%s9 + $0x6bc] sm:$0xff]
    %v3019 = vld [vmem:[%s9 + $0x6c4] sm:$0xf]
    %v3020 = vld [vmem:[%s9 + $0x6c8] sm:$0xff]
    %v3021 = vld [vmem:[%s9 + $0x6d0] sm:$0xff]
    %v3022 = vld [vmem:[%s9 + $0x6d8] sm:$0xff]
    %v3023 = vld [vmem:[%s9 + $0x6e0] sm:$0xf]
    %v3024 = vld [vmem:[%s9 + $0x6e4] sm:$0xff]
    %v3025 = vld [vmem:[%s9 + $0x6ec] sm:$0xff]
    %v3026 = vld [vmem:[%s9 + $0x6f4] sm:$0xff]
    %v3027 = vld [vmem:[%s9 + $0x6fc] sm:$0xf]
    %v3028 = vld [vmem:[%s9 + $0x700] sm:$0xff]
    %v3029 = vld [vmem:[%s9 + $0x708] sm:$0xff]
    %v3030 = vld [vmem:[%s9 + $0x710] sm:$0xff]
    %v3031 = vld [vmem:[%s9 + $0x718] sm:$0xf]
    %v3032 = vld [vmem:[%s9 + $0x71c] sm:$0xff]
    %v3033 = vld [vmem:[%s9 + $0x724] sm:$0xff]
    %v3034 = vld [vmem:[%s9 + $0x72c] sm:$0xff]
    %v3035 = vld [vmem:[%s9 + $0x734] sm:$0xf]
    %v3036 = vld [vmem:[%s9 + $0x738] sm:$0xff]
    %v3037 = vld [vmem:[%s9 + $0x740] sm:$0xff]
    %v3038 = vld [vmem:[%s9 + $0x748] sm:$0xff]
    %v3039 = vld [vmem:[%s9 + $0x750] sm:$0xf]
    %v3040 = vld [vmem:[%s9 + $0x754] sm:$0xff]
    %v3041 = vld [vmem:[%s9 + $0x75c] sm:$0xff]
    %v3042 = vld [vmem:[%s9 + $0x764] sm:$0xff]
    %v3043 = vld [vmem:[%s9 + $0x76c] sm:$0xf]
    %v3044 = vld [vmem:[%s9 + $0x770] sm:$0xff]
    %v3045 = vld [vmem:[%s9 + $0x778] sm:$0xff]
    %v3046 = vld [vmem:[%s9 + $0x780] sm:$0xff]
    %v3047 = vld [vmem:[%s9 + $0x788] sm:$0xf]
    %v3048 = vld [vmem:[%s9 + $0x78c] sm:$0xff]
    %v3049 = vld [vmem:[%s9 + $0x794] sm:$0xff]
    %v3050 = vld [vmem:[%s9 + $0x79c] sm:$0xff]
    %v3051 = vld [vmem:[%s9 + $0x7a4] sm:$0xf]
    %v3052 = vld [vmem:[%s9 + $0x7a8] sm:$0xff]
    %v3053 = vld [vmem:[%s9 + $0x7b0] sm:$0xff]
    %v3054 = vld [vmem:[%s9 + $0x7b8] sm:$0xff]
    %v3055 = vld [vmem:[%s9 + $0x7c0] sm:$0xf]
    %v3056 = vld [vmem:[%s9 + $0x7c4] sm:$0xff]
    %v3057 = vld [vmem:[%s9 + $0x7cc] sm:$0xff]
    %v3058 = vld [vmem:[%s9 + $0x7d4] sm:$0xff]
    %v3059 = vld [vmem:[%s9 + $0x7dc] sm:$0xf]
    %v3060 = vld [vmem:[%s9 + $0x7e0] sm:$0xff]
    %v3061 = vld [vmem:[%s9 + $0x7e8] sm:$0xff]
    %v3062 = vld [vmem:[%s9 + $0x7f0] sm:$0xff]
    %v3063 = vld [vmem:[%s9 + $0x7f8] sm:$0xf]
    %v3064 = vld [vmem:[%s9 + $0x7fc] sm:$0xff]
    %v3065 = vld [vmem:[%s9 + $0x804] sm:$0xff]
    %v3066 = vld [vmem:[%s9 + $0x80c] sm:$0xff]
    %v3067 = vld [vmem:[%s9 + $0x814] sm:$0xf]
    %v3068 = vld [vmem:[%s9 + $0x818] sm:$0xff]
    %v3069 = vld [vmem:[%s9 + $0x820] sm:$0xff]
    %v3070 = vld [vmem:[%s9 + $0x828] sm:$0xff]
    %v3071 = vld [vmem:[%s9 + $0x830] sm:$0xf]
    %v3072 = vld [vmem:[%s9 + $0x834] sm:$0xff]
    %v3073 = vld [vmem:[%s9 + $0x83c] sm:$0xff]
    %v3074 = vld [vmem:[%s9 + $0x844] sm:$0xff]
    %v3075 = vld [vmem:[%s9 + $0x84c] sm:$0xf]
    %v3076 = vld [vmem:[%s9 + $0x850] sm:$0xff]
    %v3077 = vld [vmem:[%s9 + $0x858] sm:$0xff]
    %v3078 = vld [vmem:[%s9 + $0x860] sm:$0xff]
    %v3079 = vld [vmem:[%s9 + $0x868] sm:$0xf]
    %v3080 = vld [vmem:[%s9 + $0x86c] sm:$0xff]
    %v3081 = vld [vmem:[%s9 + $0x874] sm:$0xff]
    %v3082 = vld [vmem:[%s9 + $0x87c] sm:$0xff]
    %v3083 = vld [vmem:[%s9 + $0x884] sm:$0xf]
    %v3084 = vld [vmem:[%s9 + $0x888] sm:$0xff]
    %v3085 = vld [vmem:[%s9 + $0x890] sm:$0xff]
    %v3086 = vld [vmem:[%s9 + $0x898] sm:$0xff]
    %v3087 = vld [vmem:[%s9 + $0x8a0] sm:$0xf]
    %v3088 = vld [vmem:[%s9 + $0x8a4] sm:$0xff]
    %v3089 = vld [vmem:[%s9 + $0x8ac] sm:$0xff]
    %v3090 = vld [vmem:[%s9 + $0x8b4] sm:$0xff]
    %v3091 = vld [vmem:[%s9 + $0x8bc] sm:$0xf]
    %v3092 = vld [vmem:[%s9 + $0x8c0] sm:$0xff]
    %v3093 = vld [vmem:[%s9 + $0x8c8] sm:$0xff]
    %v3094 = vld [vmem:[%s9 + $0x8d0] sm:$0xff]
    %v3095 = vld [vmem:[%s9 + $0x8d8] sm:$0xf]
    %v3096 = vld [vmem:[%s9 + $0x8dc] sm:$0xff]
    %v3097 = vld [vmem:[%s9 + $0x8e4] sm:$0xff]
    %v3098 = vld [vmem:[%s9 + $0x8ec] sm:$0xff]
    %v3099 = vld [vmem:[%s9 + $0x8f4] sm:$0xf]
    %v3100 = vld [vmem:[%s9 + $0x8f8] sm:$0xff]
    %v3101 = vld [vmem:[%s9 + $0x900] sm:$0xff]
    %v3102 = vld [vmem:[%s9 + $0x908] sm:$0xff]
    %v3103 = vld [vmem:[%s9 + $0x910] sm:$0xf]
    %v3104 = vld [vmem:[%s9 + $0x914] sm:$0xff]
    %v3105 = vld [vmem:[%s9 + $0x91c] sm:$0xff]
    %v3106 = vld [vmem:[%s9 + $0x924] sm:$0xff]
    %v3107 = vld [vmem:[%s9 + $0x92c] sm:$0xf]
    %v3108 = vld [vmem:[%s9 + $0x930] sm:$0xff]
    %v3109 = vld [vmem:[%s9 + $0x938] sm:$0xff]
    %v3110 = vld [vmem:[%s9 + $0x940] sm:$0xff]
    %v3111 = vld [vmem:[%s9 + $0x948] sm:$0xf]
    %v3112 = vld [vmem:[%s9 + $0x94c] sm:$0xff]
    %v3113 = vld [vmem:[%s9 + $0x954] sm:$0xff]
    %v3114 = vld [vmem:[%s9 + $0x95c] sm:$0xff]
    %v3115 = vld [vmem:[%s9 + $0x964] sm:$0xf]
    %v3116 = vld [vmem:[%s9 + $0x968] sm:$0xff]
    %v3117 = vld [vmem:[%s9 + $0x970] sm:$0xff]
    %v3118 = vld [vmem:[%s9 + $0x978] sm:$0xff]
    %v3119 = vld [vmem:[%s9 + $0x980] sm:$0xf]
    %v3120 = vld [vmem:[%s9 + $0x984] sm:$0xff]
    %v3121 = vld [vmem:[%s9 + $0x98c] sm:$0xff]
    %v3122 = vld [vmem:[%s9 + $0x994] sm:$0xff]
    %v3123 = vld [vmem:[%s9 + $0x99c] sm:$0xf]
    %v3124 = vld [vmem:[%s9 + $0x9a0] sm:$0xff]
    %v3125 = vld [vmem:[%s9 + $0x9a8] sm:$0xff]
    %v3126 = vld [vmem:[%s9 + $0x9b0] sm:$0xff]
    %v3127 = vld [vmem:[%s9 + $0x9b8] sm:$0xf]
    %v3128 = vld [vmem:[%s9 + $0x9bc] sm:$0xff]
    %v3129 = vld [vmem:[%s9 + $0x9c4] sm:$0xff]
    %v3130 = vld [vmem:[%s9 + $0x9cc] sm:$0xff]
    %v3131 = vld [vmem:[%s9 + $0x9d4] sm:$0xf]
    %v3132 = vld [vmem:[%s9 + $0x9d8] sm:$0xff]
    %v3133 = vld [vmem:[%s9 + $0x9e0] sm:$0xff]
    %v3134 = vld [vmem:[%s9 + $0x9e8] sm:$0xff]
    %v3135 = vld [vmem:[%s9 + $0x9f0] sm:$0xf]
    %v3136 = vld [vmem:[%s9 + $0x9f4] sm:$0xff]
    %v3137 = vld [vmem:[%s9 + $0x9fc] sm:$0xff]
    %v3138 = vld [vmem:[%s9 + $0xa04] sm:$0xff]
    %v3139 = vld [vmem:[%s9 + $0xa0c] sm:$0xf]
    %v3140 = vld [vmem:[%s9 + $0xa10] sm:$0xff]
    %v3141 = vld [vmem:[%s9 + $0xa18] sm:$0xff]
    %v3142 = vld [vmem:[%s9 + $0xa20] sm:$0xff]
    %v3143 = vld [vmem:[%s9 + $0xa28] sm:$0xf]
    %v3144 = vld [vmem:[%s9 + $0xa2c] sm:$0xff]
    %v3145 = vld [vmem:[%s9 + $0xa34] sm:$0xff]
    %v3146 = vld [vmem:[%s9 + $0xa3c] sm:$0xff]
    %v3147 = vld [vmem:[%s9 + $0xa44] sm:$0xf]
    %v3148 = vld [vmem:[%s9 + $0xa48] sm:$0xff]
    %v3149 = vld [vmem:[%s9 + $0xa50] sm:$0xff]
    %v3150 = vld [vmem:[%s9 + $0xa58] sm:$0xff]
    %v3151 = vld [vmem:[%s9 + $0xa60] sm:$0xf]
    %v3152 = vld [vmem:[%s9 + $0xa64] sm:$0xff]
    %v3153 = vld [vmem:[%s9 + $0xa6c] sm:$0xff]
    %v3154 = vld [vmem:[%s9 + $0xa74] sm:$0xff]
    %v3155 = vld [vmem:[%s9 + $0xa7c] sm:$0xf]
    %v3156 = vld [vmem:[%s10] sm:$0x7f]
    %v3157 = vpack.c.bf16 %v2766, %v2766
    %v3158 = vpack.c.bf16 %v2767, %v2767
    %v3159 = vpack.c.bf16 %v2768, %v2768
    %v3160 = vpack.c.bf16 %v2769, %v2769
    %v3161 = vpack.c.bf16 %v2770, %v2770
    %v3162 = vpack.c.bf16 %v2771, %v2771
    %v3164 = vlaneseq
    %v3165 = vshrl.u32 %v3164, 7
    %v3166 = vsub.s32 0, %v3165
    %v3167 = vrot.slane %v3156, %v3166
    %v3168 = vlaneseq
    %v3169 = vshrl.u32 %v3168, 7
    %v3170 = vsub.s32 1, %v3169
    %v3171 = vrot.slane %v3156, %v3170
    %v3172 = vlaneseq
    %v3173 = vshrl.u32 %v3172, 7
    %v3174 = vsub.s32 2, %v3173
    %v3175 = vrot.slane %v3156, %v3174
    %v3176 = vlaneseq
    %v3177 = vshrl.u32 %v3176, 7
    %v3178 = vsub.s32 3, %v3177
    %v3179 = vrot.slane %v3156, %v3178
    %v3180 = vlaneseq
    %v3181 = vshrl.u32 %v3180, 7
    %v3182 = vsub.s32 4, %v3181
    %v3183 = vrot.slane %v3156, %v3182
    %v3184 = vlaneseq
    %v3185 = vshrl.u32 %v3184, 7
    %v3186 = vsub.s32 5, %v3185
    %v3187 = vrot.slane %v3156, %v3186
    %v3188 = vlaneseq
    %v3189 = vshrl.u32 %v3188, 7
    %v3190 = vsub.s32 6, %v3189
    %v3191 = vrot.slane %v3156, %v3190
    %v3583 = vunpack.c.l.b16 %v2772
    %v3584 = vunpack.c.h.b16 %v2772
    %v3585 = vunpack.c.l.b16 %v2773
    %v3586 = vunpack.c.h.b16 %v2773
    %v3587 = vunpack.c.l.b16 %v2774
    %v3588 = vunpack.c.h.b16 %v2774
    %v3589 = vunpack.c.l.b16 %v2775
    %v3590 = vunpack.c.l.b16 %v2776
    %v3591 = vunpack.c.h.b16 %v2776
    %v3592 = vunpack.c.l.b16 %v2777
    %v3593 = vunpack.c.h.b16 %v2777
    %v3594 = vunpack.c.l.b16 %v2778
    %v3595 = vunpack.c.h.b16 %v2778
    %v3596 = vunpack.c.l.b16 %v2779
    %v3597 = vunpack.c.l.b16 %v2780
    %v3598 = vunpack.c.h.b16 %v2780
    %v3599 = vunpack.c.l.b16 %v2781
    %v3600 = vunpack.c.h.b16 %v2781
    %v3601 = vunpack.c.l.b16 %v2782
    %v3602 = vunpack.c.h.b16 %v2782
    %v3603 = vunpack.c.l.b16 %v2783
    %v3604 = vunpack.c.l.b16 %v2784
    %v3605 = vunpack.c.h.b16 %v2784
    %v3606 = vunpack.c.l.b16 %v2785
    %v3607 = vunpack.c.h.b16 %v2785
    %v3608 = vunpack.c.l.b16 %v2786
    %v3609 = vunpack.c.h.b16 %v2786
    %v3610 = vunpack.c.l.b16 %v2787
    %v3611 = vunpack.c.l.b16 %v2788
    %v3612 = vunpack.c.h.b16 %v2788
    %v3613 = vunpack.c.l.b16 %v2789
    %v3614 = vunpack.c.h.b16 %v2789
    %v3615 = vunpack.c.l.b16 %v2790
    %v3616 = vunpack.c.h.b16 %v2790
    %v3617 = vunpack.c.l.b16 %v2791
    %v3618 = vunpack.c.l.b16 %v2792
    %v3619 = vunpack.c.h.b16 %v2792
    %v3620 = vunpack.c.l.b16 %v2793
    %v3621 = vunpack.c.h.b16 %v2793
    %v3622 = vunpack.c.l.b16 %v2794
    %v3623 = vunpack.c.h.b16 %v2794
    %v3624 = vunpack.c.l.b16 %v2795
    %v3625 = vunpack.c.l.b16 %v2796
    %v3626 = vunpack.c.h.b16 %v2796
    %v3627 = vunpack.c.l.b16 %v2797
    %v3628 = vunpack.c.h.b16 %v2797
    %v3629 = vunpack.c.l.b16 %v2798
    %v3630 = vunpack.c.h.b16 %v2798
    %v3631 = vunpack.c.l.b16 %v2799
    %v3632 = vunpack.c.l.b16 %v2800
    %v3633 = vunpack.c.h.b16 %v2800
    %v3634 = vunpack.c.l.b16 %v2801
    %v3635 = vunpack.c.h.b16 %v2801
    %v3636 = vunpack.c.l.b16 %v2802
    %v3637 = vunpack.c.h.b16 %v2802
    %v3638 = vunpack.c.l.b16 %v2803
    %v3639 = vunpack.c.l.b16 %v2804
    %v3640 = vunpack.c.h.b16 %v2804
    %v3641 = vunpack.c.l.b16 %v2805
    %v3642 = vunpack.c.h.b16 %v2805
    %v3643 = vunpack.c.l.b16 %v2806
    %v3644 = vunpack.c.h.b16 %v2806
    %v3645 = vunpack.c.l.b16 %v2807
    %v3646 = vunpack.c.l.b16 %v2808
    %v3647 = vunpack.c.h.b16 %v2808
    %v3648 = vunpack.c.l.b16 %v2809
    %v3649 = vunpack.c.h.b16 %v2809
    %v3650 = vunpack.c.l.b16 %v2810
    %v3651 = vunpack.c.h.b16 %v2810
    %v3652 = vunpack.c.l.b16 %v2811
    %v3653 = vunpack.c.l.b16 %v2812
    %v3654 = vunpack.c.h.b16 %v2812
    %v3655 = vunpack.c.l.b16 %v2813
    %v3656 = vunpack.c.h.b16 %v2813
    %v3657 = vunpack.c.l.b16 %v2814
    %v3658 = vunpack.c.h.b16 %v2814
    %v3659 = vunpack.c.l.b16 %v2815
    %v3660 = vunpack.c.l.b16 %v2816
    %v3661 = vunpack.c.h.b16 %v2816
    %v3662 = vunpack.c.l.b16 %v2817
    %v3663 = vunpack.c.h.b16 %v2817
    %v3664 = vunpack.c.l.b16 %v2818
    %v3665 = vunpack.c.h.b16 %v2818
    %v3666 = vunpack.c.l.b16 %v2819
    %v3667 = vunpack.c.l.b16 %v2820
    %v3668 = vunpack.c.h.b16 %v2820
    %v3669 = vunpack.c.l.b16 %v2821
    %v3670 = vunpack.c.h.b16 %v2821
    %v3671 = vunpack.c.l.b16 %v2822
    %v3672 = vunpack.c.h.b16 %v2822
    %v3673 = vunpack.c.l.b16 %v2823
    %v3674 = vunpack.c.l.b16 %v2824
    %v3675 = vunpack.c.h.b16 %v2824
    %v3676 = vunpack.c.l.b16 %v2825
    %v3677 = vunpack.c.h.b16 %v2825
    %v3678 = vunpack.c.l.b16 %v2826
    %v3679 = vunpack.c.h.b16 %v2826
    %v3680 = vunpack.c.l.b16 %v2827
    %v3681 = vunpack.c.l.b16 %v2828
    %v3682 = vunpack.c.h.b16 %v2828
    %v3683 = vunpack.c.l.b16 %v2829
    %v3684 = vunpack.c.h.b16 %v2829
    %v3685 = vunpack.c.l.b16 %v2830
    %v3686 = vunpack.c.h.b16 %v2830
    %v3687 = vunpack.c.l.b16 %v2831
    %v3688 = vunpack.c.l.b16 %v2832
    %v3689 = vunpack.c.h.b16 %v2832
    %v3690 = vunpack.c.l.b16 %v2833
    %v3691 = vunpack.c.h.b16 %v2833
    %v3692 = vunpack.c.l.b16 %v2834
    %v3693 = vunpack.c.h.b16 %v2834
    %v3694 = vunpack.c.l.b16 %v2835
    %v3695 = vunpack.c.l.b16 %v2836
    %v3696 = vunpack.c.h.b16 %v2836
    %v3697 = vunpack.c.l.b16 %v2837
    %v3698 = vunpack.c.h.b16 %v2837
    %v3699 = vunpack.c.l.b16 %v2838
    %v3700 = vunpack.c.h.b16 %v2838
    %v3701 = vunpack.c.l.b16 %v2839
    %v3702 = vunpack.c.l.b16 %v2840
    %v3703 = vunpack.c.h.b16 %v2840
    %v3704 = vunpack.c.l.b16 %v2841
    %v3705 = vunpack.c.h.b16 %v2841
    %v3706 = vunpack.c.l.b16 %v2842
    %v3707 = vunpack.c.h.b16 %v2842
    %v3708 = vunpack.c.l.b16 %v2843
    %v3709 = vunpack.c.l.b16 %v2844
    %v3710 = vunpack.c.h.b16 %v2844
    %v3711 = vunpack.c.l.b16 %v2845
    %v3712 = vunpack.c.h.b16 %v2845
    %v3713 = vunpack.c.l.b16 %v2846
    %v3714 = vunpack.c.h.b16 %v2846
    %v3715 = vunpack.c.l.b16 %v2847
    %v3716 = vunpack.c.l.b16 %v2848
    %v3717 = vunpack.c.h.b16 %v2848
    %v3718 = vunpack.c.l.b16 %v2849
    %v3719 = vunpack.c.h.b16 %v2849
    %v3720 = vunpack.c.l.b16 %v2850
    %v3721 = vunpack.c.h.b16 %v2850
    %v3722 = vunpack.c.l.b16 %v2851
    %v3723 = vunpack.c.l.b16 %v2852
    %v3724 = vunpack.c.h.b16 %v2852
    %v3725 = vunpack.c.l.b16 %v2853
    %v3726 = vunpack.c.h.b16 %v2853
    %v3727 = vunpack.c.l.b16 %v2854
    %v3728 = vunpack.c.h.b16 %v2854
    %v3729 = vunpack.c.l.b16 %v2855
    %v3730 = vunpack.c.l.b16 %v2856
    %v3731 = vunpack.c.h.b16 %v2856
    %v3732 = vunpack.c.l.b16 %v2857
    %v3733 = vunpack.c.h.b16 %v2857
    %v3734 = vunpack.c.l.b16 %v2858
    %v3735 = vunpack.c.h.b16 %v2858
    %v3736 = vunpack.c.l.b16 %v2859
    %v3737 = vunpack.c.l.b16 %v2860
    %v3738 = vunpack.c.h.b16 %v2860
    %v3739 = vunpack.c.l.b16 %v2861
    %v3740 = vunpack.c.h.b16 %v2861
    %v3741 = vunpack.c.l.b16 %v2862
    %v3742 = vunpack.c.h.b16 %v2862
    %v3743 = vunpack.c.l.b16 %v2863
    %v3744 = vunpack.c.l.b16 %v2864
    %v3745 = vunpack.c.h.b16 %v2864
    %v3746 = vunpack.c.l.b16 %v2865
    %v3747 = vunpack.c.h.b16 %v2865
    %v3748 = vunpack.c.l.b16 %v2866
    %v3749 = vunpack.c.h.b16 %v2866
    %v3750 = vunpack.c.l.b16 %v2867
    %v3751 = vunpack.c.l.b16 %v2868
    %v3752 = vunpack.c.h.b16 %v2868
    %v3753 = vunpack.c.l.b16 %v2869
    %v3754 = vunpack.c.h.b16 %v2869
    %v3755 = vunpack.c.l.b16 %v2870
    %v3756 = vunpack.c.h.b16 %v2870
    %v3757 = vunpack.c.l.b16 %v2871
    %v3758 = vunpack.c.l.b16 %v2872
    %v3759 = vunpack.c.h.b16 %v2872
    %v3760 = vunpack.c.l.b16 %v2873
    %v3761 = vunpack.c.h.b16 %v2873
    %v3762 = vunpack.c.l.b16 %v2874
    %v3763 = vunpack.c.h.b16 %v2874
    %v3764 = vunpack.c.l.b16 %v2875
    %v3765 = vunpack.c.l.b16 %v2876
    %v3766 = vunpack.c.h.b16 %v2876
    %v3767 = vunpack.c.l.b16 %v2877
    %v3768 = vunpack.c.h.b16 %v2877
    %v3769 = vunpack.c.l.b16 %v2878
    %v3770 = vunpack.c.h.b16 %v2878
    %v3771 = vunpack.c.l.b16 %v2879
    %v3772 = vunpack.c.l.b16 %v2880
    %v3773 = vunpack.c.h.b16 %v2880
    %v3774 = vunpack.c.l.b16 %v2881
    %v3775 = vunpack.c.h.b16 %v2881
    %v3776 = vunpack.c.l.b16 %v2882
    %v3777 = vunpack.c.h.b16 %v2882
    %v3778 = vunpack.c.l.b16 %v2883
    %v3779 = vunpack.c.l.b16 %v2884
    %v3780 = vunpack.c.h.b16 %v2884
    %v3781 = vunpack.c.l.b16 %v2885
    %v3782 = vunpack.c.h.b16 %v2885
    %v3783 = vunpack.c.l.b16 %v2886
    %v3784 = vunpack.c.h.b16 %v2886
    %v3785 = vunpack.c.l.b16 %v2887
    %v3786 = vunpack.c.l.b16 %v2888
    %v3787 = vunpack.c.h.b16 %v2888
    %v3788 = vunpack.c.l.b16 %v2889
    %v3789 = vunpack.c.h.b16 %v2889
    %v3790 = vunpack.c.l.b16 %v2890
    %v3791 = vunpack.c.h.b16 %v2890
    %v3792 = vunpack.c.l.b16 %v2891
    %v3793 = vunpack.c.l.b16 %v2892
    %v3794 = vunpack.c.h.b16 %v2892
    %v3795 = vunpack.c.l.b16 %v2893
    %v3796 = vunpack.c.h.b16 %v2893
    %v3797 = vunpack.c.l.b16 %v2894
    %v3798 = vunpack.c.h.b16 %v2894
    %v3799 = vunpack.c.l.b16 %v2895
    %v3800 = vunpack.c.l.b16 %v2896
    %v3801 = vunpack.c.h.b16 %v2896
    %v3802 = vunpack.c.l.b16 %v2897
    %v3803 = vunpack.c.h.b16 %v2897
    %v3804 = vunpack.c.l.b16 %v2898
    %v3805 = vunpack.c.h.b16 %v2898
    %v3806 = vunpack.c.l.b16 %v2899
    %v3807 = vunpack.c.l.b16 %v2900
    %v3808 = vunpack.c.h.b16 %v2900
    %v3809 = vunpack.c.l.b16 %v2901
    %v3810 = vunpack.c.h.b16 %v2901
    %v3811 = vunpack.c.l.b16 %v2902
    %v3812 = vunpack.c.h.b16 %v2902
    %v3813 = vunpack.c.l.b16 %v2903
    %v3814 = vunpack.c.l.b16 %v2904
    %v3815 = vunpack.c.h.b16 %v2904
    %v3816 = vunpack.c.l.b16 %v2905
    %v3817 = vunpack.c.h.b16 %v2905
    %v3818 = vunpack.c.l.b16 %v2906
    %v3819 = vunpack.c.h.b16 %v2906
    %v3820 = vunpack.c.l.b16 %v2907
    %v3821 = vunpack.c.l.b16 %v2908
    %v3822 = vunpack.c.h.b16 %v2908
    %v3823 = vunpack.c.l.b16 %v2909
    %v3824 = vunpack.c.h.b16 %v2909
    %v3825 = vunpack.c.l.b16 %v2910
    %v3826 = vunpack.c.h.b16 %v2910
    %v3827 = vunpack.c.l.b16 %v2911
    %v3828 = vunpack.c.l.b16 %v2912
    %v3829 = vunpack.c.h.b16 %v2912
    %v3830 = vunpack.c.l.b16 %v2913
    %v3831 = vunpack.c.h.b16 %v2913
    %v3832 = vunpack.c.l.b16 %v2914
    %v3833 = vunpack.c.h.b16 %v2914
    %v3834 = vunpack.c.l.b16 %v2915
    %v3835 = vunpack.c.l.b16 %v2916
    %v3836 = vunpack.c.h.b16 %v2916
    %v3837 = vunpack.c.l.b16 %v2917
    %v3838 = vunpack.c.h.b16 %v2917
    %v3839 = vunpack.c.l.b16 %v2918
    %v3840 = vunpack.c.h.b16 %v2918
    %v3841 = vunpack.c.l.b16 %v2919
    %v3842 = vunpack.c.l.b16 %v2920
    %v3843 = vunpack.c.h.b16 %v2920
    %v3844 = vunpack.c.l.b16 %v2921
    %v3845 = vunpack.c.h.b16 %v2921
    %v3846 = vunpack.c.l.b16 %v2922
    %v3847 = vunpack.c.h.b16 %v2922
    %v3848 = vunpack.c.l.b16 %v2923
    %v3849 = vunpack.c.l.b16 %v2924
    %v3850 = vunpack.c.h.b16 %v2924
    %v3851 = vunpack.c.l.b16 %v2925
    %v3852 = vunpack.c.h.b16 %v2925
    %v3853 = vunpack.c.l.b16 %v2926
    %v3854 = vunpack.c.h.b16 %v2926
    %v3855 = vunpack.c.l.b16 %v2927
    %v3856 = vunpack.c.l.b16 %v2928
    %v3857 = vunpack.c.h.b16 %v2928
    %v3858 = vunpack.c.l.b16 %v2929
    %v3859 = vunpack.c.h.b16 %v2929
    %v3860 = vunpack.c.l.b16 %v2930
    %v3861 = vunpack.c.h.b16 %v2930
    %v3862 = vunpack.c.l.b16 %v2931
    %v3863 = vunpack.c.l.b16 %v2932
    %v3864 = vunpack.c.h.b16 %v2932
    %v3865 = vunpack.c.l.b16 %v2933
    %v3866 = vunpack.c.h.b16 %v2933
    %v3867 = vunpack.c.l.b16 %v2934
    %v3868 = vunpack.c.h.b16 %v2934
    %v3869 = vunpack.c.l.b16 %v2935
    %v3870 = vunpack.c.l.b16 %v2936
    %v3871 = vunpack.c.h.b16 %v2936
    %v3872 = vunpack.c.l.b16 %v2937
    %v3873 = vunpack.c.h.b16 %v2937
    %v3874 = vunpack.c.l.b16 %v2938
    %v3875 = vunpack.c.h.b16 %v2938
    %v3876 = vunpack.c.l.b16 %v2939
    %v3877 = vunpack.c.l.b16 %v2940
    %v3878 = vunpack.c.h.b16 %v2940
    %v3879 = vunpack.c.l.b16 %v2941
    %v3880 = vunpack.c.h.b16 %v2941
    %v3881 = vunpack.c.l.b16 %v2942
    %v3882 = vunpack.c.h.b16 %v2942
    %v3883 = vunpack.c.l.b16 %v2943
    %v3884 = vunpack.c.l.b16 %v2944
    %v3885 = vunpack.c.h.b16 %v2944
    %v3886 = vunpack.c.l.b16 %v2945
    %v3887 = vunpack.c.h.b16 %v2945
    %v3888 = vunpack.c.l.b16 %v2946
    %v3889 = vunpack.c.h.b16 %v2946
    %v3890 = vunpack.c.l.b16 %v2947
    %v3891 = vunpack.c.l.b16 %v2948
    %v3892 = vunpack.c.h.b16 %v2948
    %v3893 = vunpack.c.l.b16 %v2949
    %v3894 = vunpack.c.h.b16 %v2949
    %v3895 = vunpack.c.l.b16 %v2950
    %v3896 = vunpack.c.h.b16 %v2950
    %v3897 = vunpack.c.l.b16 %v2951
    %v3898 = vunpack.c.l.b16 %v2952
    %v3899 = vunpack.c.h.b16 %v2952
    %v3900 = vunpack.c.l.b16 %v2953
    %v3901 = vunpack.c.h.b16 %v2953
    %v3902 = vunpack.c.l.b16 %v2954
    %v3903 = vunpack.c.h.b16 %v2954
    %v3904 = vunpack.c.l.b16 %v2955
    %v3905 = vunpack.c.l.b16 %v2956
    %v3906 = vunpack.c.h.b16 %v2956
    %v3907 = vunpack.c.l.b16 %v2957
    %v3908 = vunpack.c.h.b16 %v2957
    %v3909 = vunpack.c.l.b16 %v2958
    %v3910 = vunpack.c.h.b16 %v2958
    %v3911 = vunpack.c.l.b16 %v2959
    %v3912 = vunpack.c.l.b16 %v2960
    %v3913 = vunpack.c.h.b16 %v2960
    %v3914 = vunpack.c.l.b16 %v2961
    %v3915 = vunpack.c.h.b16 %v2961
    %v3916 = vunpack.c.l.b16 %v2962
    %v3917 = vunpack.c.h.b16 %v2962
    %v3918 = vunpack.c.l.b16 %v2963
    %v3919 = vunpack.c.l.b16 %v2964
    %v3920 = vunpack.c.h.b16 %v2964
    %v3921 = vunpack.c.l.b16 %v2965
    %v3922 = vunpack.c.h.b16 %v2965
    %v3923 = vunpack.c.l.b16 %v2966
    %v3924 = vunpack.c.h.b16 %v2966
    %v3925 = vunpack.c.l.b16 %v2967
    %v3926 = vunpack.c.l.b16 %v2968
    %v3927 = vunpack.c.h.b16 %v2968
    %v3928 = vunpack.c.l.b16 %v2969
    %v3929 = vunpack.c.h.b16 %v2969
    %v3930 = vunpack.c.l.b16 %v2970
    %v3931 = vunpack.c.h.b16 %v2970
    %v3932 = vunpack.c.l.b16 %v2971
    %v3933 = vunpack.c.l.b16 %v2972
    %v3934 = vunpack.c.h.b16 %v2972
    %v3935 = vunpack.c.l.b16 %v2973
    %v3936 = vunpack.c.h.b16 %v2973
    %v3937 = vunpack.c.l.b16 %v2974
    %v3938 = vunpack.c.h.b16 %v2974
    %v3939 = vunpack.c.l.b16 %v2975
    %v3940 = vunpack.c.l.b16 %v2976
    %v3941 = vunpack.c.h.b16 %v2976
    %v3942 = vunpack.c.l.b16 %v2977
    %v3943 = vunpack.c.h.b16 %v2977
    %v3944 = vunpack.c.l.b16 %v2978
    %v3945 = vunpack.c.h.b16 %v2978
    %v3946 = vunpack.c.l.b16 %v2979
    %v3947 = vunpack.c.l.b16 %v2980
    %v3948 = vunpack.c.h.b16 %v2980
    %v3949 = vunpack.c.l.b16 %v2981
    %v3950 = vunpack.c.h.b16 %v2981
    %v3951 = vunpack.c.l.b16 %v2982
    %v3952 = vunpack.c.h.b16 %v2982
    %v3953 = vunpack.c.l.b16 %v2983
    %v3954 = vunpack.c.l.b16 %v2984
    %v3955 = vunpack.c.h.b16 %v2984
    %v3956 = vunpack.c.l.b16 %v2985
    %v3957 = vunpack.c.h.b16 %v2985
    %v3958 = vunpack.c.l.b16 %v2986
    %v3959 = vunpack.c.h.b16 %v2986
    %v3960 = vunpack.c.l.b16 %v2987
    %v3961 = vunpack.c.l.b16 %v2988
    %v3962 = vunpack.c.h.b16 %v2988
    %v3963 = vunpack.c.l.b16 %v2989
    %v3964 = vunpack.c.h.b16 %v2989
    %v3965 = vunpack.c.l.b16 %v2990
    %v3966 = vunpack.c.h.b16 %v2990
    %v3967 = vunpack.c.l.b16 %v2991
    %v3968 = vunpack.c.l.b16 %v2992
    %v3969 = vunpack.c.h.b16 %v2992
    %v3970 = vunpack.c.l.b16 %v2993
    %v3971 = vunpack.c.h.b16 %v2993
    %v3972 = vunpack.c.l.b16 %v2994
    %v3973 = vunpack.c.h.b16 %v2994
    %v3974 = vunpack.c.l.b16 %v2995
    %v3975 = vunpack.c.l.b16 %v2996
    %v3976 = vunpack.c.h.b16 %v2996
    %v3977 = vunpack.c.l.b16 %v2997
    %v3978 = vunpack.c.h.b16 %v2997
    %v3979 = vunpack.c.l.b16 %v2998
    %v3980 = vunpack.c.h.b16 %v2998
    %v3981 = vunpack.c.l.b16 %v2999
    %v3982 = vunpack.c.l.b16 %v3000
    %v3983 = vunpack.c.h.b16 %v3000
    %v3984 = vunpack.c.l.b16 %v3001
    %v3985 = vunpack.c.h.b16 %v3001
    %v3986 = vunpack.c.l.b16 %v3002
    %v3987 = vunpack.c.h.b16 %v3002
    %v3988 = vunpack.c.l.b16 %v3003
    %v3989 = vunpack.c.l.b16 %v3004
    %v3990 = vunpack.c.h.b16 %v3004
    %v3991 = vunpack.c.l.b16 %v3005
    %v3992 = vunpack.c.h.b16 %v3005
    %v3993 = vunpack.c.l.b16 %v3006
    %v3994 = vunpack.c.h.b16 %v3006
    %v3995 = vunpack.c.l.b16 %v3007
    %v3996 = vunpack.c.l.b16 %v3008
    %v3997 = vunpack.c.h.b16 %v3008
    %v3998 = vunpack.c.l.b16 %v3009
    %v3999 = vunpack.c.h.b16 %v3009
    %v4000 = vunpack.c.l.b16 %v3010
    %v4001 = vunpack.c.h.b16 %v3010
    %v4002 = vunpack.c.l.b16 %v3011
    %v4003 = vunpack.c.l.b16 %v3012
    %v4004 = vunpack.c.h.b16 %v3012
    %v4005 = vunpack.c.l.b16 %v3013
    %v4006 = vunpack.c.h.b16 %v3013
    %v4007 = vunpack.c.l.b16 %v3014
    %v4008 = vunpack.c.h.b16 %v3014
    %v4009 = vunpack.c.l.b16 %v3015
    %v4010 = vunpack.c.l.b16 %v3016
    %v4011 = vunpack.c.h.b16 %v3016
    %v4012 = vunpack.c.l.b16 %v3017
    %v4013 = vunpack.c.h.b16 %v3017
    %v4014 = vunpack.c.l.b16 %v3018
    %v4015 = vunpack.c.h.b16 %v3018
    %v4016 = vunpack.c.l.b16 %v3019
    %v4017 = vunpack.c.l.b16 %v3020
    %v4018 = vunpack.c.h.b16 %v3020
    %v4019 = vunpack.c.l.b16 %v3021
    %v4020 = vunpack.c.h.b16 %v3021
    %v4021 = vunpack.c.l.b16 %v3022
    %v4022 = vunpack.c.h.b16 %v3022
    %v4023 = vunpack.c.l.b16 %v3023
    %v4024 = vunpack.c.l.b16 %v3024
    %v4025 = vunpack.c.h.b16 %v3024
    %v4026 = vunpack.c.l.b16 %v3025
    %v4027 = vunpack.c.h.b16 %v3025
    %v4028 = vunpack.c.l.b16 %v3026
    %v4029 = vunpack.c.h.b16 %v3026
    %v4030 = vunpack.c.l.b16 %v3027
    %v4031 = vunpack.c.l.b16 %v3028
    %v4032 = vunpack.c.h.b16 %v3028
    %v4033 = vunpack.c.l.b16 %v3029
    %v4034 = vunpack.c.h.b16 %v3029
    %v4035 = vunpack.c.l.b16 %v3030
    %v4036 = vunpack.c.h.b16 %v3030
    %v4037 = vunpack.c.l.b16 %v3031
    %v4038 = vunpack.c.l.b16 %v3032
    %v4039 = vunpack.c.h.b16 %v3032
    %v4040 = vunpack.c.l.b16 %v3033
    %v4041 = vunpack.c.h.b16 %v3033
    %v4042 = vunpack.c.l.b16 %v3034
    %v4043 = vunpack.c.h.b16 %v3034
    %v4044 = vunpack.c.l.b16 %v3035
    %v4045 = vunpack.c.l.b16 %v3036
    %v4046 = vunpack.c.h.b16 %v3036
    %v4047 = vunpack.c.l.b16 %v3037
    %v4048 = vunpack.c.h.b16 %v3037
    %v4049 = vunpack.c.l.b16 %v3038
    %v4050 = vunpack.c.h.b16 %v3038
    %v4051 = vunpack.c.l.b16 %v3039
    %v4052 = vunpack.c.l.b16 %v3040
    %v4053 = vunpack.c.h.b16 %v3040
    %v4054 = vunpack.c.l.b16 %v3041
    %v4055 = vunpack.c.h.b16 %v3041
    %v4056 = vunpack.c.l.b16 %v3042
    %v4057 = vunpack.c.h.b16 %v3042
    %v4058 = vunpack.c.l.b16 %v3043
    %v4059 = vunpack.c.l.b16 %v3044
    %v4060 = vunpack.c.h.b16 %v3044
    %v4061 = vunpack.c.l.b16 %v3045
    %v4062 = vunpack.c.h.b16 %v3045
    %v4063 = vunpack.c.l.b16 %v3046
    %v4064 = vunpack.c.h.b16 %v3046
    %v4065 = vunpack.c.l.b16 %v3047
    %v4066 = vunpack.c.l.b16 %v3048
    %v4067 = vunpack.c.h.b16 %v3048
    %v4068 = vunpack.c.l.b16 %v3049
    %v4069 = vunpack.c.h.b16 %v3049
    %v4070 = vunpack.c.l.b16 %v3050
    %v4071 = vunpack.c.h.b16 %v3050
    %v4072 = vunpack.c.l.b16 %v3051
    %v4073 = vunpack.c.l.b16 %v3052
    %v4074 = vunpack.c.h.b16 %v3052
    %v4075 = vunpack.c.l.b16 %v3053
    %v4076 = vunpack.c.h.b16 %v3053
    %v4077 = vunpack.c.l.b16 %v3054
    %v4078 = vunpack.c.h.b16 %v3054
    %v4079 = vunpack.c.l.b16 %v3055
    %v4080 = vunpack.c.l.b16 %v3056
    %v4081 = vunpack.c.h.b16 %v3056
    %v4082 = vunpack.c.l.b16 %v3057
    %v4083 = vunpack.c.h.b16 %v3057
    %v4084 = vunpack.c.l.b16 %v3058
    %v4085 = vunpack.c.h.b16 %v3058
    %v4086 = vunpack.c.l.b16 %v3059
    %v4087 = vunpack.c.l.b16 %v3060
    %v4088 = vunpack.c.h.b16 %v3060
    %v4089 = vunpack.c.l.b16 %v3061
    %v4090 = vunpack.c.h.b16 %v3061
    %v4091 = vunpack.c.l.b16 %v3062
    %v4092 = vunpack.c.h.b16 %v3062
    %v4093 = vunpack.c.l.b16 %v3063
    %v4094 = vunpack.c.l.b16 %v3064
    %v4095 = vunpack.c.h.b16 %v3064
    %v4096 = vunpack.c.l.b16 %v3065
    %v4097 = vunpack.c.h.b16 %v3065
    %v4098 = vunpack.c.l.b16 %v3066
    %v4099 = vunpack.c.h.b16 %v3066
    %v4100 = vunpack.c.l.b16 %v3067
    %v4101 = vunpack.c.l.b16 %v3068
    %v4102 = vunpack.c.h.b16 %v3068
    %v4103 = vunpack.c.l.b16 %v3069
    %v4104 = vunpack.c.h.b16 %v3069
    %v4105 = vunpack.c.l.b16 %v3070
    %v4106 = vunpack.c.h.b16 %v3070
    %v4107 = vunpack.c.l.b16 %v3071
    %v4108 = vunpack.c.l.b16 %v3072
    %v4109 = vunpack.c.h.b16 %v3072
    %v4110 = vunpack.c.l.b16 %v3073
    %v4111 = vunpack.c.h.b16 %v3073
    %v4112 = vunpack.c.l.b16 %v3074
    %v4113 = vunpack.c.h.b16 %v3074
    %v4114 = vunpack.c.l.b16 %v3075
    %v4115 = vunpack.c.l.b16 %v3076
    %v4116 = vunpack.c.h.b16 %v3076
    %v4117 = vunpack.c.l.b16 %v3077
    %v4118 = vunpack.c.h.b16 %v3077
    %v4119 = vunpack.c.l.b16 %v3078
    %v4120 = vunpack.c.h.b16 %v3078
    %v4121 = vunpack.c.l.b16 %v3079
    %v4122 = vunpack.c.l.b16 %v3080
    %v4123 = vunpack.c.h.b16 %v3080
    %v4124 = vunpack.c.l.b16 %v3081
    %v4125 = vunpack.c.h.b16 %v3081
    %v4126 = vunpack.c.l.b16 %v3082
    %v4127 = vunpack.c.h.b16 %v3082
    %v4128 = vunpack.c.l.b16 %v3083
    %v4129 = vunpack.c.l.b16 %v3084
    %v4130 = vunpack.c.h.b16 %v3084
    %v4131 = vunpack.c.l.b16 %v3085
    %v4132 = vunpack.c.h.b16 %v3085
    %v4133 = vunpack.c.l.b16 %v3086
    %v4134 = vunpack.c.h.b16 %v3086
    %v4135 = vunpack.c.l.b16 %v3087
    %v4136 = vunpack.c.l.b16 %v3088
    %v4137 = vunpack.c.h.b16 %v3088
    %v4138 = vunpack.c.l.b16 %v3089
    %v4139 = vunpack.c.h.b16 %v3089
    %v4140 = vunpack.c.l.b16 %v3090
    %v4141 = vunpack.c.h.b16 %v3090
    %v4142 = vunpack.c.l.b16 %v3091
    %v4143 = vunpack.c.l.b16 %v3092
    %v4144 = vunpack.c.h.b16 %v3092
    %v4145 = vunpack.c.l.b16 %v3093
    %v4146 = vunpack.c.h.b16 %v3093
    %v4147 = vunpack.c.l.b16 %v3094
    %v4148 = vunpack.c.h.b16 %v3094
    %v4149 = vunpack.c.l.b16 %v3095
    %v4150 = vunpack.c.l.b16 %v3096
    %v4151 = vunpack.c.h.b16 %v3096
    %v4152 = vunpack.c.l.b16 %v3097
    %v4153 = vunpack.c.h.b16 %v3097
    %v4154 = vunpack.c.l.b16 %v3098
    %v4155 = vunpack.c.h.b16 %v3098
    %v4156 = vunpack.c.l.b16 %v3099
    %v4157 = vunpack.c.l.b16 %v3100
    %v4158 = vunpack.c.h.b16 %v3100
    %v4159 = vunpack.c.l.b16 %v3101
    %v4160 = vunpack.c.h.b16 %v3101
    %v4161 = vunpack.c.l.b16 %v3102
    %v4162 = vunpack.c.h.b16 %v3102
    %v4163 = vunpack.c.l.b16 %v3103
    %v4164 = vunpack.c.l.b16 %v3104
    %v4165 = vunpack.c.h.b16 %v3104
    %v4166 = vunpack.c.l.b16 %v3105
    %v4167 = vunpack.c.h.b16 %v3105
    %v4168 = vunpack.c.l.b16 %v3106
    %v4169 = vunpack.c.h.b16 %v3106
    %v4170 = vunpack.c.l.b16 %v3107
    %v4171 = vunpack.c.l.b16 %v3108
    %v4172 = vunpack.c.h.b16 %v3108
    %v4173 = vunpack.c.l.b16 %v3109
    %v4174 = vunpack.c.h.b16 %v3109
    %v4175 = vunpack.c.l.b16 %v3110
    %v4176 = vunpack.c.h.b16 %v3110
    %v4177 = vunpack.c.l.b16 %v3111
    %v4178 = vunpack.c.l.b16 %v3112
    %v4179 = vunpack.c.h.b16 %v3112
    %v4180 = vunpack.c.l.b16 %v3113
    %v4181 = vunpack.c.h.b16 %v3113
    %v4182 = vunpack.c.l.b16 %v3114
    %v4183 = vunpack.c.h.b16 %v3114
    %v4184 = vunpack.c.l.b16 %v3115
    %v4185 = vunpack.c.l.b16 %v3116
    %v4186 = vunpack.c.h.b16 %v3116
    %v4187 = vunpack.c.l.b16 %v3117
    %v4188 = vunpack.c.h.b16 %v3117
    %v4189 = vunpack.c.l.b16 %v3118
    %v4190 = vunpack.c.h.b16 %v3118
    %v4191 = vunpack.c.l.b16 %v3119
    %v4192 = vunpack.c.l.b16 %v3120
    %v4193 = vunpack.c.h.b16 %v3120
    %v4194 = vunpack.c.l.b16 %v3121
    %v4195 = vunpack.c.h.b16 %v3121
    %v4196 = vunpack.c.l.b16 %v3122
    %v4197 = vunpack.c.h.b16 %v3122
    %v4198 = vunpack.c.l.b16 %v3123
    %v4199 = vunpack.c.l.b16 %v3124
    %v4200 = vunpack.c.h.b16 %v3124
    %v4201 = vunpack.c.l.b16 %v3125
    %v4202 = vunpack.c.h.b16 %v3125
    %v4203 = vunpack.c.l.b16 %v3126
    %v4204 = vunpack.c.h.b16 %v3126
    %v4205 = vunpack.c.l.b16 %v3127
    %v4206 = vunpack.c.l.b16 %v3128
    %v4207 = vunpack.c.h.b16 %v3128
    %v4208 = vunpack.c.l.b16 %v3129
    %v4209 = vunpack.c.h.b16 %v3129
    %v4210 = vunpack.c.l.b16 %v3130
    %v4211 = vunpack.c.h.b16 %v3130
    %v4212 = vunpack.c.l.b16 %v3131
    %v4213 = vunpack.c.l.b16 %v3132
    %v4214 = vunpack.c.h.b16 %v3132
    %v4215 = vunpack.c.l.b16 %v3133
    %v4216 = vunpack.c.h.b16 %v3133
    %v4217 = vunpack.c.l.b16 %v3134
    %v4218 = vunpack.c.h.b16 %v3134
    %v4219 = vunpack.c.l.b16 %v3135
    %v4220 = vunpack.c.l.b16 %v3136
    %v4221 = vunpack.c.h.b16 %v3136
    %v4222 = vunpack.c.l.b16 %v3137
    %v4223 = vunpack.c.h.b16 %v3137
    %v4224 = vunpack.c.l.b16 %v3138
    %v4225 = vunpack.c.h.b16 %v3138
    %v4226 = vunpack.c.l.b16 %v3139
    %v4227 = vunpack.c.l.b16 %v3140
    %v4228 = vunpack.c.h.b16 %v3140
    %v4229 = vunpack.c.l.b16 %v3141
    %v4230 = vunpack.c.h.b16 %v3141
    %v4231 = vunpack.c.l.b16 %v3142
    %v4232 = vunpack.c.h.b16 %v3142
    %v4233 = vunpack.c.l.b16 %v3143
    %v4234 = vunpack.c.l.b16 %v3144
    %v4235 = vunpack.c.h.b16 %v3144
    %v4236 = vunpack.c.l.b16 %v3145
    %v4237 = vunpack.c.h.b16 %v3145
    %v4238 = vunpack.c.l.b16 %v3146
    %v4239 = vunpack.c.h.b16 %v3146
    %v4240 = vunpack.c.l.b16 %v3147
    %v4241 = vunpack.c.l.b16 %v3148
    %v4242 = vunpack.c.h.b16 %v3148
    %v4243 = vunpack.c.l.b16 %v3149
    %v4244 = vunpack.c.h.b16 %v3149
    %v4245 = vunpack.c.l.b16 %v3150
    %v4246 = vunpack.c.h.b16 %v3150
    %v4247 = vunpack.c.l.b16 %v3151
    %v4248 = vunpack.c.l.b16 %v3152
    %v4249 = vunpack.c.h.b16 %v3152
    %v4250 = vunpack.c.l.b16 %v3153
    %v4251 = vunpack.c.h.b16 %v3153
    %v4252 = vunpack.c.l.b16 %v3154
    %v4253 = vunpack.c.h.b16 %v3154
    %v4254 = vunpack.c.l.b16 %v3155
    %v4255 = vpack.c.b16 %v3590, %v3583
    %v4256 = vpack.c.b16 %v3591, %v3584
    %v4257 = vpack.c.b16 %v3592, %v3585
    %v4258 = vpack.c.b16 %v3593, %v3586
    %v4259 = vpack.c.b16 %v3594, %v3587
    %v4260 = vpack.c.b16 %v3595, %v3588
    %v4261 = vpack.c.b16 %v3596, %v3589
    %v4262 = vpack.c.b16 %v3604, %v3597
    %v4263 = vpack.c.b16 %v3605, %v3598
    %v4264 = vpack.c.b16 %v3606, %v3599
    %v4265 = vpack.c.b16 %v3607, %v3600
    %v4266 = vpack.c.b16 %v3608, %v3601
    %v4267 = vpack.c.b16 %v3609, %v3602
    %v4268 = vpack.c.b16 %v3610, %v3603
    %v4269 = vpack.c.b16 %v3618, %v3611
    %v4270 = vpack.c.b16 %v3619, %v3612
    %v4271 = vpack.c.b16 %v3620, %v3613
    %v4272 = vpack.c.b16 %v3621, %v3614
    %v4273 = vpack.c.b16 %v3622, %v3615
    %v4274 = vpack.c.b16 %v3623, %v3616
    %v4275 = vpack.c.b16 %v3624, %v3617
    %v4276 = vpack.c.b16 %v3632, %v3625
    %v4277 = vpack.c.b16 %v3633, %v3626
    %v4278 = vpack.c.b16 %v3634, %v3627
    %v4279 = vpack.c.b16 %v3635, %v3628
    %v4280 = vpack.c.b16 %v3636, %v3629
    %v4281 = vpack.c.b16 %v3637, %v3630
    %v4282 = vpack.c.b16 %v3638, %v3631
    %v4283 = vpack.c.b16 %v3646, %v3639
    %v4284 = vpack.c.b16 %v3647, %v3640
    %v4285 = vpack.c.b16 %v3648, %v3641
    %v4286 = vpack.c.b16 %v3649, %v3642
    %v4287 = vpack.c.b16 %v3650, %v3643
    %v4288 = vpack.c.b16 %v3651, %v3644
    %v4289 = vpack.c.b16 %v3652, %v3645
    %v4290 = vpack.c.b16 %v3660, %v3653
    %v4291 = vpack.c.b16 %v3661, %v3654
    %v4292 = vpack.c.b16 %v3662, %v3655
    %v4293 = vpack.c.b16 %v3663, %v3656
    %v4294 = vpack.c.b16 %v3664, %v3657
    %v4295 = vpack.c.b16 %v3665, %v3658
    %v4296 = vpack.c.b16 %v3666, %v3659
    %v4297 = vpack.c.b16 %v3674, %v3667
    %v4298 = vpack.c.b16 %v3675, %v3668
    %v4299 = vpack.c.b16 %v3676, %v3669
    %v4300 = vpack.c.b16 %v3677, %v3670
    %v4301 = vpack.c.b16 %v3678, %v3671
    %v4302 = vpack.c.b16 %v3679, %v3672
    %v4303 = vpack.c.b16 %v3680, %v3673
    %v4304 = vpack.c.b16 %v3688, %v3681
    %v4305 = vpack.c.b16 %v3689, %v3682
    %v4306 = vpack.c.b16 %v3690, %v3683
    %v4307 = vpack.c.b16 %v3691, %v3684
    %v4308 = vpack.c.b16 %v3692, %v3685
    %v4309 = vpack.c.b16 %v3693, %v3686
    %v4310 = vpack.c.b16 %v3694, %v3687
    %v4311 = vpack.c.b16 %v3702, %v3695
    %v4312 = vpack.c.b16 %v3703, %v3696
    %v4313 = vpack.c.b16 %v3704, %v3697
    %v4314 = vpack.c.b16 %v3705, %v3698
    %v4315 = vpack.c.b16 %v3706, %v3699
    %v4316 = vpack.c.b16 %v3707, %v3700
    %v4317 = vpack.c.b16 %v3708, %v3701
    %v4318 = vpack.c.b16 %v3716, %v3709
    %v4319 = vpack.c.b16 %v3717, %v3710
    %v4320 = vpack.c.b16 %v3718, %v3711
    %v4321 = vpack.c.b16 %v3719, %v3712
    %v4322 = vpack.c.b16 %v3720, %v3713
    %v4323 = vpack.c.b16 %v3721, %v3714
    %v4324 = vpack.c.b16 %v3722, %v3715
    %v4325 = vpack.c.b16 %v3730, %v3723
    %v4326 = vpack.c.b16 %v3731, %v3724
    %v4327 = vpack.c.b16 %v3732, %v3725
    %v4328 = vpack.c.b16 %v3733, %v3726
    %v4329 = vpack.c.b16 %v3734, %v3727
    %v4330 = vpack.c.b16 %v3735, %v3728
    %v4331 = vpack.c.b16 %v3736, %v3729
    %v4332 = vpack.c.b16 %v3744, %v3737
    %v4333 = vpack.c.b16 %v3745, %v3738
    %v4334 = vpack.c.b16 %v3746, %v3739
    %v4335 = vpack.c.b16 %v3747, %v3740
    %v4336 = vpack.c.b16 %v3748, %v3741
    %v4337 = vpack.c.b16 %v3749, %v3742
    %v4338 = vpack.c.b16 %v3750, %v3743
    %v4339 = vpack.c.b16 %v3758, %v3751
    %v4340 = vpack.c.b16 %v3759, %v3752
    %v4341 = vpack.c.b16 %v3760, %v3753
    %v4342 = vpack.c.b16 %v3761, %v3754
    %v4343 = vpack.c.b16 %v3762, %v3755
    %v4344 = vpack.c.b16 %v3763, %v3756
    %v4345 = vpack.c.b16 %v3764, %v3757
    %v4346 = vpack.c.b16 %v3772, %v3765
    %v4347 = vpack.c.b16 %v3773, %v3766
    %v4348 = vpack.c.b16 %v3774, %v3767
    %v4349 = vpack.c.b16 %v3775, %v3768
    %v4350 = vpack.c.b16 %v3776, %v3769
    %v4351 = vpack.c.b16 %v3777, %v3770
    %v4352 = vpack.c.b16 %v3778, %v3771
    %v4353 = vpack.c.b16 %v3786, %v3779
    %v4354 = vpack.c.b16 %v3787, %v3780
    %v4355 = vpack.c.b16 %v3788, %v3781
    %v4356 = vpack.c.b16 %v3789, %v3782
    %v4357 = vpack.c.b16 %v3790, %v3783
    %v4358 = vpack.c.b16 %v3791, %v3784
    %v4359 = vpack.c.b16 %v3792, %v3785
    %v4360 = vpack.c.b16 %v3800, %v3793
    %v4361 = vpack.c.b16 %v3801, %v3794
    %v4362 = vpack.c.b16 %v3802, %v3795
    %v4363 = vpack.c.b16 %v3803, %v3796
    %v4364 = vpack.c.b16 %v3804, %v3797
    %v4365 = vpack.c.b16 %v3805, %v3798
    %v4366 = vpack.c.b16 %v3806, %v3799
    %v4367 = vpack.c.b16 %v3814, %v3807
    %v4368 = vpack.c.b16 %v3815, %v3808
    %v4369 = vpack.c.b16 %v3816, %v3809
    %v4370 = vpack.c.b16 %v3817, %v3810
    %v4371 = vpack.c.b16 %v3818, %v3811
    %v4372 = vpack.c.b16 %v3819, %v3812
    %v4373 = vpack.c.b16 %v3820, %v3813
    %v4374 = vpack.c.b16 %v3828, %v3821
    %v4375 = vpack.c.b16 %v3829, %v3822
    %v4376 = vpack.c.b16 %v3830, %v3823
    %v4377 = vpack.c.b16 %v3831, %v3824
    %v4378 = vpack.c.b16 %v3832, %v3825
    %v4379 = vpack.c.b16 %v3833, %v3826
    %v4380 = vpack.c.b16 %v3834, %v3827
    %v4381 = vpack.c.b16 %v3842, %v3835
    %v4382 = vpack.c.b16 %v3843, %v3836
    %v4383 = vpack.c.b16 %v3844, %v3837
    %v4384 = vpack.c.b16 %v3845, %v3838
    %v4385 = vpack.c.b16 %v3846, %v3839
    %v4386 = vpack.c.b16 %v3847, %v3840
    %v4387 = vpack.c.b16 %v3848, %v3841
    %v4388 = vpack.c.b16 %v3856, %v3849
    %v4389 = vpack.c.b16 %v3857, %v3850
    %v4390 = vpack.c.b16 %v3858, %v3851
    %v4391 = vpack.c.b16 %v3859, %v3852
    %v4392 = vpack.c.b16 %v3860, %v3853
    %v4393 = vpack.c.b16 %v3861, %v3854
    %v4394 = vpack.c.b16 %v3862, %v3855
    %v4395 = vpack.c.b16 %v3870, %v3863
    %v4396 = vpack.c.b16 %v3871, %v3864
    %v4397 = vpack.c.b16 %v3872, %v3865
    %v4398 = vpack.c.b16 %v3873, %v3866
    %v4399 = vpack.c.b16 %v3874, %v3867
    %v4400 = vpack.c.b16 %v3875, %v3868
    %v4401 = vpack.c.b16 %v3876, %v3869
    %v4402 = vpack.c.b16 %v3884, %v3877
    %v4403 = vpack.c.b16 %v3885, %v3878
    %v4404 = vpack.c.b16 %v3886, %v3879
    %v4405 = vpack.c.b16 %v3887, %v3880
    %v4406 = vpack.c.b16 %v3888, %v3881
    %v4407 = vpack.c.b16 %v3889, %v3882
    %v4408 = vpack.c.b16 %v3890, %v3883
    %v4409 = vpack.c.b16 %v3898, %v3891
    %v4410 = vpack.c.b16 %v3899, %v3892
    %v4411 = vpack.c.b16 %v3900, %v3893
    %v4412 = vpack.c.b16 %v3901, %v3894
    %v4413 = vpack.c.b16 %v3902, %v3895
    %v4414 = vpack.c.b16 %v3903, %v3896
    %v4415 = vpack.c.b16 %v3904, %v3897
    %v4416 = vpack.c.b16 %v3912, %v3905
    %v4417 = vpack.c.b16 %v3913, %v3906
    %v4418 = vpack.c.b16 %v3914, %v3907
    %v4419 = vpack.c.b16 %v3915, %v3908
    %v4420 = vpack.c.b16 %v3916, %v3909
    %v4421 = vpack.c.b16 %v3917, %v3910
    %v4422 = vpack.c.b16 %v3918, %v3911
    %v4423 = vpack.c.b16 %v3926, %v3919
    %v4424 = vpack.c.b16 %v3927, %v3920
    %v4425 = vpack.c.b16 %v3928, %v3921
    %v4426 = vpack.c.b16 %v3929, %v3922
    %v4427 = vpack.c.b16 %v3930, %v3923
    %v4428 = vpack.c.b16 %v3931, %v3924
    %v4429 = vpack.c.b16 %v3932, %v3925
    %v4430 = vpack.c.b16 %v3940, %v3933
    %v4431 = vpack.c.b16 %v3941, %v3934
    %v4432 = vpack.c.b16 %v3942, %v3935
    %v4433 = vpack.c.b16 %v3943, %v3936
    %v4434 = vpack.c.b16 %v3944, %v3937
    %v4435 = vpack.c.b16 %v3945, %v3938
    %v4436 = vpack.c.b16 %v3946, %v3939
    %v4437 = vpack.c.b16 %v3954, %v3947
    %v4438 = vpack.c.b16 %v3955, %v3948
    %v4439 = vpack.c.b16 %v3956, %v3949
    %v4440 = vpack.c.b16 %v3957, %v3950
    %v4441 = vpack.c.b16 %v3958, %v3951
    %v4442 = vpack.c.b16 %v3959, %v3952
    %v4443 = vpack.c.b16 %v3960, %v3953
    %v4444 = vpack.c.b16 %v3968, %v3961
    %v4445 = vpack.c.b16 %v3969, %v3962
    %v4446 = vpack.c.b16 %v3970, %v3963
    %v4447 = vpack.c.b16 %v3971, %v3964
    %v4448 = vpack.c.b16 %v3972, %v3965
    %v4449 = vpack.c.b16 %v3973, %v3966
    %v4450 = vpack.c.b16 %v3974, %v3967
    %v4451 = vpack.c.b16 %v3982, %v3975
    %v4452 = vpack.c.b16 %v3983, %v3976
    %v4453 = vpack.c.b16 %v3984, %v3977
    %v4454 = vpack.c.b16 %v3985, %v3978
    %v4455 = vpack.c.b16 %v3986, %v3979
    %v4456 = vpack.c.b16 %v3987, %v3980
    %v4457 = vpack.c.b16 %v3988, %v3981
    %v4458 = vpack.c.b16 %v3996, %v3989
    %v4459 = vpack.c.b16 %v3997, %v3990
    %v4460 = vpack.c.b16 %v3998, %v3991
    %v4461 = vpack.c.b16 %v3999, %v3992
    %v4462 = vpack.c.b16 %v4000, %v3993
    %v4463 = vpack.c.b16 %v4001, %v3994
    %v4464 = vpack.c.b16 %v4002, %v3995
    %v4465 = vpack.c.b16 %v4010, %v4003
    %v4466 = vpack.c.b16 %v4011, %v4004
    %v4467 = vpack.c.b16 %v4012, %v4005
    %v4468 = vpack.c.b16 %v4013, %v4006
    %v4469 = vpack.c.b16 %v4014, %v4007
    %v4470 = vpack.c.b16 %v4015, %v4008
    %v4471 = vpack.c.b16 %v4016, %v4009
    %v4472 = vpack.c.b16 %v4024, %v4017
    %v4473 = vpack.c.b16 %v4025, %v4018
    %v4474 = vpack.c.b16 %v4026, %v4019
    %v4475 = vpack.c.b16 %v4027, %v4020
    %v4476 = vpack.c.b16 %v4028, %v4021
    %v4477 = vpack.c.b16 %v4029, %v4022
    %v4478 = vpack.c.b16 %v4030, %v4023
    %v4479 = vpack.c.b16 %v4038, %v4031
    %v4480 = vpack.c.b16 %v4039, %v4032
    %v4481 = vpack.c.b16 %v4040, %v4033
    %v4482 = vpack.c.b16 %v4041, %v4034
    %v4483 = vpack.c.b16 %v4042, %v4035
    %v4484 = vpack.c.b16 %v4043, %v4036
    %v4485 = vpack.c.b16 %v4044, %v4037
    %v4486 = vpack.c.b16 %v4052, %v4045
    %v4487 = vpack.c.b16 %v4053, %v4046
    %v4488 = vpack.c.b16 %v4054, %v4047
    %v4489 = vpack.c.b16 %v4055, %v4048
    %v4490 = vpack.c.b16 %v4056, %v4049
    %v4491 = vpack.c.b16 %v4057, %v4050
    %v4492 = vpack.c.b16 %v4058, %v4051
    %v4493 = vpack.c.b16 %v4066, %v4059
    %v4494 = vpack.c.b16 %v4067, %v4060
    %v4495 = vpack.c.b16 %v4068, %v4061
    %v4496 = vpack.c.b16 %v4069, %v4062
    %v4497 = vpack.c.b16 %v4070, %v4063
    %v4498 = vpack.c.b16 %v4071, %v4064
    %v4499 = vpack.c.b16 %v4072, %v4065
    %v4500 = vpack.c.b16 %v4080, %v4073
    %v4501 = vpack.c.b16 %v4081, %v4074
    %v4502 = vpack.c.b16 %v4082, %v4075
    %v4503 = vpack.c.b16 %v4083, %v4076
    %v4504 = vpack.c.b16 %v4084, %v4077
    %v4505 = vpack.c.b16 %v4085, %v4078
    %v4506 = vpack.c.b16 %v4086, %v4079
    %v4507 = vpack.c.b16 %v4094, %v4087
    %v4508 = vpack.c.b16 %v4095, %v4088
    %v4509 = vpack.c.b16 %v4096, %v4089
    %v4510 = vpack.c.b16 %v4097, %v4090
    %v4511 = vpack.c.b16 %v4098, %v4091
    %v4512 = vpack.c.b16 %v4099, %v4092
    %v4513 = vpack.c.b16 %v4100, %v4093
    %v4514 = vpack.c.b16 %v4108, %v4101
    %v4515 = vpack.c.b16 %v4109, %v4102
    %v4516 = vpack.c.b16 %v4110, %v4103
    %v4517 = vpack.c.b16 %v4111, %v4104
    %v4518 = vpack.c.b16 %v4112, %v4105
    %v4519 = vpack.c.b16 %v4113, %v4106
    %v4520 = vpack.c.b16 %v4114, %v4107
    %v4521 = vpack.c.b16 %v4122, %v4115
    %v4522 = vpack.c.b16 %v4123, %v4116
    %v4523 = vpack.c.b16 %v4124, %v4117
    %v4524 = vpack.c.b16 %v4125, %v4118
    %v4525 = vpack.c.b16 %v4126, %v4119
    %v4526 = vpack.c.b16 %v4127, %v4120
    %v4527 = vpack.c.b16 %v4128, %v4121
    %v4528 = vpack.c.b16 %v4136, %v4129
    %v4529 = vpack.c.b16 %v4137, %v4130
    %v4530 = vpack.c.b16 %v4138, %v4131
    %v4531 = vpack.c.b16 %v4139, %v4132
    %v4532 = vpack.c.b16 %v4140, %v4133
    %v4533 = vpack.c.b16 %v4141, %v4134
    %v4534 = vpack.c.b16 %v4142, %v4135
    %v4535 = vpack.c.b16 %v4150, %v4143
    %v4536 = vpack.c.b16 %v4151, %v4144
    %v4537 = vpack.c.b16 %v4152, %v4145
    %v4538 = vpack.c.b16 %v4153, %v4146
    %v4539 = vpack.c.b16 %v4154, %v4147
    %v4540 = vpack.c.b16 %v4155, %v4148
    %v4541 = vpack.c.b16 %v4156, %v4149
    %v4542 = vpack.c.b16 %v4164, %v4157
    %v4543 = vpack.c.b16 %v4165, %v4158
    %v4544 = vpack.c.b16 %v4166, %v4159
    %v4545 = vpack.c.b16 %v4167, %v4160
    %v4546 = vpack.c.b16 %v4168, %v4161
    %v4547 = vpack.c.b16 %v4169, %v4162
    %v4548 = vpack.c.b16 %v4170, %v4163
    %v4549 = vpack.c.b16 %v4178, %v4171
    %v4550 = vpack.c.b16 %v4179, %v4172
    %v4551 = vpack.c.b16 %v4180, %v4173
    %v4552 = vpack.c.b16 %v4181, %v4174
    %v4553 = vpack.c.b16 %v4182, %v4175
    %v4554 = vpack.c.b16 %v4183, %v4176
    %v4555 = vpack.c.b16 %v4184, %v4177
    %v4556 = vpack.c.b16 %v4192, %v4185
    %v4557 = vpack.c.b16 %v4193, %v4186
    %v4558 = vpack.c.b16 %v4194, %v4187
    %v4559 = vpack.c.b16 %v4195, %v4188
    %v4560 = vpack.c.b16 %v4196, %v4189
    %v4561 = vpack.c.b16 %v4197, %v4190
    %v4562 = vpack.c.b16 %v4198, %v4191
    %v4563 = vpack.c.b16 %v4206, %v4199
    %v4564 = vpack.c.b16 %v4207, %v4200
    %v4565 = vpack.c.b16 %v4208, %v4201
    %v4566 = vpack.c.b16 %v4209, %v4202
    %v4567 = vpack.c.b16 %v4210, %v4203
    %v4568 = vpack.c.b16 %v4211, %v4204
    %v4569 = vpack.c.b16 %v4212, %v4205
    %v4570 = vpack.c.b16 %v4220, %v4213
    %v4571 = vpack.c.b16 %v4221, %v4214
    %v4572 = vpack.c.b16 %v4222, %v4215
    %v4573 = vpack.c.b16 %v4223, %v4216
    %v4574 = vpack.c.b16 %v4224, %v4217
    %v4575 = vpack.c.b16 %v4225, %v4218
    %v4576 = vpack.c.b16 %v4226, %v4219
    %v4577 = vpack.c.b16 %v4234, %v4227
    %v4578 = vpack.c.b16 %v4235, %v4228
    %v4579 = vpack.c.b16 %v4236, %v4229
    %v4580 = vpack.c.b16 %v4237, %v4230
    %v4581 = vpack.c.b16 %v4238, %v4231
    %v4582 = vpack.c.b16 %v4239, %v4232
    %v4583 = vpack.c.b16 %v4240, %v4233
    %v4584 = vpack.c.b16 %v4248, %v4241
    %v4585 = vpack.c.b16 %v4249, %v4242
    %v4586 = vpack.c.b16 %v4250, %v4243
    %v4587 = vpack.c.b16 %v4251, %v4244
    %v4588 = vpack.c.b16 %v4252, %v4245
    %v4589 = vpack.c.b16 %v4253, %v4246
    %v4590 = vpack.c.b16 %v4254, %v4247
    %4927 = vmatprep.subr.bf16.mxu0 %v4256
    %4928 = vmatpush1.bf16.msra.mxu0 %v4255
    %4929 = vmatprep.subr.bf16.mxu0 %v4263
    %4930 = vmatpush1.bf16.msra.mxu0 %v4262
    %4931 = vmatprep.subr.bf16.mxu0 %v4270
    %4932 = vmatpush1.bf16.msra.mxu0 %v4269
    %4933 = vmatprep.subr.bf16.mxu0 %v4277
    %4934 = vmatpush1.bf16.msra.mxu0 %v4276
    %4935 = vmatprep.subr.bf16.mxu0 %v4284
    %4936 = vmatpush1.bf16.msra.mxu0 %v4283
    %4937 = vmatprep.subr.bf16.mxu0 %v4291
    %4938 = vmatpush1.bf16.msra.mxu0 %v4290
    %4939 = vmatprep.subr.bf16.mxu0 %v4298
    %4940 = vmatpush1.bf16.msra.mxu0 %v4297
    %4941 = vmatprep.subr.bf16.mxu0 %v4305
    %4942 = vmatpush1.bf16.msra.mxu0 %v4304
    %4943 = vmatprep.subr.bf16.mxu0 %v4312
    %4944 = vmatpush1.bf16.msra.mxu0 %v4311
    %4945 = vmatprep.subr.bf16.mxu0 %v4319
    %4946 = vmatpush1.bf16.msra.mxu0 %v4318
    %4947 = vmatprep.subr.bf16.mxu0 %v4326
    %4948 = vmatpush1.bf16.msra.mxu0 %v4325
    %4949 = vmatprep.subr.bf16.mxu0 %v4333
    %4950 = vmatpush1.bf16.msra.mxu0 %v4332
    %4951 = vmatprep.subr.bf16.mxu0 %v4340
    %4952 = vmatpush1.bf16.msra.mxu0 %v4339
    %4953 = vmatprep.subr.bf16.mxu0 %v4347
    %4954 = vmatpush1.bf16.msra.mxu0 %v4346
    %4955 = vmatprep.subr.bf16.mxu0 %v4354
    %4956 = vmatpush1.bf16.msra.mxu0 %v4353
    %4957 = vmatprep.subr.bf16.mxu0 %v4361
    %4958 = vmatpush1.bf16.msra.mxu0 %v4360
    %4959 = vmatprep.mubr.bf16.mxu0 %v3158
    %4960 = vmatmul.mubr.bf16.gmra.mrb[0].mxu0 %v3157
    %v4961 = vpop.f32.mrb[0].mxu0
    %v4962 = vadd.f32 %v3167, %v4961
    %v4963 = vpop.f32.mrb[0].mxu0
    %v4964 = vadd.f32 %v3171, %v4963
    %v4965 = vpop.f32.mrb[0].mxu0
    %v4966 = vpop.f32.mrb[0].mxu0
    %4967 = vdwg.mxu0
    %4968 = vmatprep.subr.bf16.mxu0 %v4368
    %4969 = vmatpush1.bf16.msra.mxu0 %v4367
    %4970 = vmatprep.subr.bf16.mxu0 %v4375
    %4971 = vmatpush1.bf16.msra.mxu0 %v4374
    %4972 = vmatprep.subr.bf16.mxu0 %v4382
    %4973 = vmatpush1.bf16.msra.mxu0 %v4381
    %4974 = vmatprep.subr.bf16.mxu0 %v4389
    %4975 = vmatpush1.bf16.msra.mxu0 %v4388
    %4976 = vmatprep.subr.bf16.mxu0 %v4396
    %4977 = vmatpush1.bf16.msra.mxu0 %v4395
    %4978 = vmatprep.subr.bf16.mxu0 %v4403
    %4979 = vmatpush1.bf16.msra.mxu0 %v4402
    %4980 = vmatprep.subr.bf16.mxu0 %v4410
    %4981 = vmatpush1.bf16.msra.mxu0 %v4409
    %4982 = vmatprep.subr.bf16.mxu0 %v4417
    %4983 = vmatpush1.bf16.msra.mxu0 %v4416
    %4984 = vmatprep.subr.bf16.mxu0 %v4424
    %4985 = vmatpush1.bf16.msra.mxu0 %v4423
    %4986 = vmatprep.subr.bf16.mxu0 %v4431
    %4987 = vmatpush1.bf16.msra.mxu0 %v4430
    %4988 = vmatprep.subr.bf16.mxu0 %v4438
    %4989 = vmatpush1.bf16.msra.mxu0 %v4437
    %4990 = vmatprep.subr.bf16.mxu0 %v4445
    %4991 = vmatpush1.bf16.msra.mxu0 %v4444
    %4992 = vmatprep.subr.bf16.mxu0 %v4452
    %4993 = vmatpush1.bf16.msra.mxu0 %v4451
    %4994 = vmatprep.subr.bf16.mxu0 %v4459
    %4995 = vmatpush1.bf16.msra.mxu0 %v4458
    %4996 = vmatprep.subr.bf16.mxu0 %v4466
    %4997 = vmatpush1.bf16.msra.mxu0 %v4465
    %4998 = vmatprep.subr.bf16.mxu0 %v4473
    %4999 = vmatpush1.bf16.msra.mxu0 %v4472
    %5000 = vmatprep.mubr.bf16.mxu0 %v3160
    %5001 = vmatmul.mubr.bf16.gmra.mrb[0].mxu0 %v3159
    %v5002 = vpop.f32.mrb[0].mxu0
    %v5003 = vadd.f32 %v4962, %v5002
    %v5004 = vpop.f32.mrb[0].mxu0
    %v5005 = vadd.f32 %v4964, %v5004
    %v5006 = vpop.f32.mrb[0].mxu0
    %v5007 = vpop.f32.mrb[0].mxu0
    %5008 = vdwg.mxu0
    %5009 = vmatprep.subr.bf16.mxu0 %v4480
    %5010 = vmatpush1.bf16.msra.mxu0 %v4479
    %5011 = vmatprep.subr.bf16.mxu0 %v4487
    %5012 = vmatpush1.bf16.msra.mxu0 %v4486
    %5013 = vmatprep.subr.bf16.mxu0 %v4494
    %5014 = vmatpush1.bf16.msra.mxu0 %v4493
    %5015 = vmatprep.subr.bf16.mxu0 %v4501
    %5016 = vmatpush1.bf16.msra.mxu0 %v4500
    %5017 = vmatprep.subr.bf16.mxu0 %v4508
    %5018 = vmatpush1.bf16.msra.mxu0 %v4507
    %5019 = vmatprep.subr.bf16.mxu0 %v4515
    %5020 = vmatpush1.bf16.msra.mxu0 %v4514
    %5021 = vmatprep.subr.bf16.mxu0 %v4522
    %5022 = vmatpush1.bf16.msra.mxu0 %v4521
    %5023 = vmatprep.subr.bf16.mxu0 %v4529
    %5024 = vmatpush1.bf16.msra.mxu0 %v4528
    %5025 = vmatprep.subr.bf16.mxu0 %v4536
    %5026 = vmatpush1.bf16.msra.mxu0 %v4535
    %5027 = vmatprep.subr.bf16.mxu0 %v4543
    %5028 = vmatpush1.bf16.msra.mxu0 %v4542
    %5029 = vmatprep.subr.bf16.mxu0 %v4550
    %5030 = vmatpush1.bf16.msra.mxu0 %v4549
    %5031 = vmatprep.subr.bf16.mxu0 %v4557
    %5032 = vmatpush1.bf16.msra.mxu0 %v4556
    %5033 = vmatprep.subr.bf16.mxu0 %v4564
    %5034 = vmatpush1.bf16.msra.mxu0 %v4563
    %5035 = vmatprep.subr.bf16.mxu0 %v4571
    %5036 = vmatpush1.bf16.msra.mxu0 %v4570
    %5037 = vmatprep.subr.bf16.mxu0 %v4578
    %5038 = vmatpush1.bf16.msra.mxu0 %v4577
    %5039 = vmatprep.subr.bf16.mxu0 %v4585
    %5040 = vmatpush1.bf16.msra.mxu0 %v4584
    %5041 = vmatprep.mubr.bf16.mxu0 %v3162
    %5042 = vmatmul.mubr.bf16.gmra.mrb[0].mxu0 %v3161
    %v5043 = vpop.f32.mrb[0].mxu0
    %v5044 = vadd.f32 %v5003, %v5043
    %v5045 = vpop.f32.mrb[0].mxu0
    %v5046 = vadd.f32 %v5005, %v5045
    %v5047 = vpop.f32.mrb[0].mxu0
    %v5048 = vpop.f32.mrb[0].mxu0
    %5049 = vdwg.mxu0
    %5050 = vmatprep.subr.bf16.mxu0 %v4258
    %5051 = vmatpush1.bf16.msra.mxu0 %v4257
    %5052 = vmatprep.subr.bf16.mxu0 %v4265
    %5053 = vmatpush1.bf16.msra.mxu0 %v4264
    %5054 = vmatprep.subr.bf16.mxu0 %v4272
    %5055 = vmatpush1.bf16.msra.mxu0 %v4271
    %5056 = vmatprep.subr.bf16.mxu0 %v4279
    %5057 = vmatpush1.bf16.msra.mxu0 %v4278
    %5058 = vmatprep.subr.bf16.mxu0 %v4286
    %5059 = vmatpush1.bf16.msra.mxu0 %v4285
    %5060 = vmatprep.subr.bf16.mxu0 %v4293
    %5061 = vmatpush1.bf16.msra.mxu0 %v4292
    %5062 = vmatprep.subr.bf16.mxu0 %v4300
    %5063 = vmatpush1.bf16.msra.mxu0 %v4299
    %5064 = vmatprep.subr.bf16.mxu0 %v4307
    %5065 = vmatpush1.bf16.msra.mxu0 %v4306
    %5066 = vmatprep.subr.bf16.mxu0 %v4314
    %5067 = vmatpush1.bf16.msra.mxu0 %v4313
    %5068 = vmatprep.subr.bf16.mxu0 %v4321
    %5069 = vmatpush1.bf16.msra.mxu0 %v4320
    %5070 = vmatprep.subr.bf16.mxu0 %v4328
    %5071 = vmatpush1.bf16.msra.mxu0 %v4327
    %5072 = vmatprep.subr.bf16.mxu0 %v4335
    %5073 = vmatpush1.bf16.msra.mxu0 %v4334
    %5074 = vmatprep.subr.bf16.mxu0 %v4342
    %5075 = vmatpush1.bf16.msra.mxu0 %v4341
    %5076 = vmatprep.subr.bf16.mxu0 %v4349
    %5077 = vmatpush1.bf16.msra.mxu0 %v4348
    %5078 = vmatprep.subr.bf16.mxu0 %v4356
    %5079 = vmatpush1.bf16.msra.mxu0 %v4355
    %5080 = vmatprep.subr.bf16.mxu0 %v4363
    %5081 = vmatpush1.bf16.msra.mxu0 %v4362
    %5082 = vmatprep.mubr.bf16.mxu0 %v3158
    %5083 = vmatmul.mubr.bf16.gmra.mrb[0].mxu0 %v3157
    %v5084 = vpop.f32.mrb[0].mxu0
    %v5085 = vadd.f32 %v3175, %v5084
    %v5086 = vpop.f32.mrb[0].mxu0
    %v5087 = vadd.f32 %v3179, %v5086
    %v5088 = vpop.f32.mrb[0].mxu0
    %v5089 = vpop.f32.mrb[0].mxu0
    %5090 = vdwg.mxu0
    %5091 = vmatprep.subr.bf16.mxu0 %v4370
    %5092 = vmatpush1.bf16.msra.mxu0 %v4369
    %5093 = vmatprep.subr.bf16.mxu0 %v4377
    %5094 = vmatpush1.bf16.msra.mxu0 %v4376
    %5095 = vmatprep.subr.bf16.mxu0 %v4384
    %5096 = vmatpush1.bf16.msra.mxu0 %v4383
    %5097 = vmatprep.subr.bf16.mxu0 %v4391
    %5098 = vmatpush1.bf16.msra.mxu0 %v4390
    %5099 = vmatprep.subr.bf16.mxu0 %v4398
    %5100 = vmatpush1.bf16.msra.mxu0 %v4397
    %5101 = vmatprep.subr.bf16.mxu0 %v4405
    %5102 = vmatpush1.bf16.msra.mxu0 %v4404
    %5103 = vmatprep.subr.bf16.mxu0 %v4412
    %5104 = vmatpush1.bf16.msra.mxu0 %v4411
    %5105 = vmatprep.subr.bf16.mxu0 %v4419
    %5106 = vmatpush1.bf16.msra.mxu0 %v4418
    %5107 = vmatprep.subr.bf16.mxu0 %v4426
    %5108 = vmatpush1.bf16.msra.mxu0 %v4425
    %5109 = vmatprep.subr.bf16.mxu0 %v4433
    %5110 = vmatpush1.bf16.msra.mxu0 %v4432
    %5111 = vmatprep.subr.bf16.mxu0 %v4440
    %5112 = vmatpush1.bf16.msra.mxu0 %v4439
    %5113 = vmatprep.subr.bf16.mxu0 %v4447
    %5114 = vmatpush1.bf16.msra.mxu0 %v4446
    %5115 = vmatprep.subr.bf16.mxu0 %v4454
    %5116 = vmatpush1.bf16.msra.mxu0 %v4453
    %5117 = vmatprep.subr.bf16.mxu0 %v4461
    %5118 = vmatpush1.bf16.msra.mxu0 %v4460
    %5119 = vmatprep.subr.bf16.mxu0 %v4468
    %5120 = vmatpush1.bf16.msra.mxu0 %v4467
    %5121 = vmatprep.subr.bf16.mxu0 %v4475
    %5122 = vmatpush1.bf16.msra.mxu0 %v4474
    %5123 = vmatprep.mubr.bf16.mxu0 %v3160
    %5124 = vmatmul.mubr.bf16.gmra.mrb[0].mxu0 %v3159
    %v5125 = vpop.f32.mrb[0].mxu0
    %v5126 = vadd.f32 %v5085, %v5125
    %v5127 = vpop.f32.mrb[0].mxu0
    %v5128 = vadd.f32 %v5087, %v5127
    %v5129 = vpop.f32.mrb[0].mxu0
    %v5130 = vpop.f32.mrb[0].mxu0
    %5131 = vdwg.mxu0
    %5132 = vmatprep.subr.bf16.mxu0 %v4482
    %5133 = vmatpush1.bf16.msra.mxu0 %v4481
    %5134 = vmatprep.subr.bf16.mxu0 %v4489
    %5135 = vmatpush1.bf16.msra.mxu0 %v4488
    %5136 = vmatprep.subr.bf16.mxu0 %v4496
    %5137 = vmatpush1.bf16.msra.mxu0 %v4495
    %5138 = vmatprep.subr.bf16.mxu0 %v4503
    %5139 = vmatpush1.bf16.msra.mxu0 %v4502
    %5140 = vmatprep.subr.bf16.mxu0 %v4510
    %5141 = vmatpush1.bf16.msra.mxu0 %v4509
    %5142 = vmatprep.subr.bf16.mxu0 %v4517
    %5143 = vmatpush1.bf16.msra.mxu0 %v4516
    %5144 = vmatprep.subr.bf16.mxu0 %v4524
    %5145 = vmatpush1.bf16.msra.mxu0 %v4523
    %5146 = vmatprep.subr.bf16.mxu0 %v4531
    %5147 = vmatpush1.bf16.msra.mxu0 %v4530
    %5148 = vmatprep.subr.bf16.mxu0 %v4538
    %5149 = vmatpush1.bf16.msra.mxu0 %v4537
    %5150 = vmatprep.subr.bf16.mxu0 %v4545
    %5151 = vmatpush1.bf16.msra.mxu0 %v4544
    %5152 = vmatprep.subr.bf16.mxu0 %v4552
    %5153 = vmatpush1.bf16.msra.mxu0 %v4551
    %5154 = vmatprep.subr.bf16.mxu0 %v4559
    %5155 = vmatpush1.bf16.msra.mxu0 %v4558
    %5156 = vmatprep.subr.bf16.mxu0 %v4566
    %5157 = vmatpush1.bf16.msra.mxu0 %v4565
    %5158 = vmatprep.subr.bf16.mxu0 %v4573
    %5159 = vmatpush1.bf16.msra.mxu0 %v4572
    %5160 = vmatprep.subr.bf16.mxu0 %v4580
    %5161 = vmatpush1.bf16.msra.mxu0 %v4579
    %5162 = vmatprep.subr.bf16.mxu0 %v4587
    %5163 = vmatpush1.bf16.msra.mxu0 %v4586
    %5164 = vmatprep.mubr.bf16.mxu0 %v3162
    %5165 = vmatmul.mubr.bf16.gmra.mrb[0].mxu0 %v3161
    %v5166 = vpop.f32.mrb[0].mxu0
    %v5167 = vadd.f32 %v5126, %v5166
    %v5168 = vpop.f32.mrb[0].mxu0
    %v5169 = vadd.f32 %v5128, %v5168
    %v5170 = vpop.f32.mrb[0].mxu0
    %v5171 = vpop.f32.mrb[0].mxu0
    %5172 = vdwg.mxu0
    %5173 = vmatprep.subr.bf16.mxu0 %v4260
    %5174 = vmatpush1.bf16.msra.mxu0 %v4259
    %5175 = vmatprep.subr.bf16.mxu0 %v4267
    %5176 = vmatpush1.bf16.msra.mxu0 %v4266
    %5177 = vmatprep.subr.bf16.mxu0 %v4274
    %5178 = vmatpush1.bf16.msra.mxu0 %v4273
    %5179 = vmatprep.subr.bf16.mxu0 %v4281
    %5180 = vmatpush1.bf16.msra.mxu0 %v4280
    %5181 = vmatprep.subr.bf16.mxu0 %v4288
    %5182 = vmatpush1.bf16.msra.mxu0 %v4287
    %5183 = vmatprep.subr.bf16.mxu0 %v4295
    %5184 = vmatpush1.bf16.msra.mxu0 %v4294
    %5185 = vmatprep.subr.bf16.mxu0 %v4302
    %5186 = vmatpush1.bf16.msra.mxu0 %v4301
    %5187 = vmatprep.subr.bf16.mxu0 %v4309
    %5188 = vmatpush1.bf16.msra.mxu0 %v4308
    %5189 = vmatprep.subr.bf16.mxu0 %v4316
    %5190 = vmatpush1.bf16.msra.mxu0 %v4315
    %5191 = vmatprep.subr.bf16.mxu0 %v4323
    %5192 = vmatpush1.bf16.msra.mxu0 %v4322
    %5193 = vmatprep.subr.bf16.mxu0 %v4330
    %5194 = vmatpush1.bf16.msra.mxu0 %v4329
    %5195 = vmatprep.subr.bf16.mxu0 %v4337
    %5196 = vmatpush1.bf16.msra.mxu0 %v4336
    %5197 = vmatprep.subr.bf16.mxu0 %v4344
    %5198 = vmatpush1.bf16.msra.mxu0 %v4343
    %5199 = vmatprep.subr.bf16.mxu0 %v4351
    %5200 = vmatpush1.bf16.msra.mxu0 %v4350
    %5201 = vmatprep.subr.bf16.mxu0 %v4358
    %5202 = vmatpush1.bf16.msra.mxu0 %v4357
    %5203 = vmatprep.subr.bf16.mxu0 %v4365
    %5204 = vmatpush1.bf16.msra.mxu0 %v4364
    %5205 = vmatprep.mubr.bf16.mxu0 %v3158
    %5206 = vmatmul.mubr.bf16.gmra.mrb[0].mxu0 %v3157
    %v5207 = vpop.f32.mrb[0].mxu0
    %v5208 = vadd.f32 %v3183, %v5207
    %v5209 = vpop.f32.mrb[0].mxu0
    %v5210 = vadd.f32 %v3187, %v5209
    %v5211 = vpop.f32.mrb[0].mxu0
    %v5212 = vpop.f32.mrb[0].mxu0
    %5213 = vdwg.mxu0
    %5214 = vmatprep.subr.bf16.mxu0 %v4372
    %5215 = vmatpush1.bf16.msra.mxu0 %v4371
    %5216 = vmatprep.subr.bf16.mxu0 %v4379
    %5217 = vmatpush1.bf16.msra.mxu0 %v4378
    %5218 = vmatprep.subr.bf16.mxu0 %v4386
    %5219 = vmatpush1.bf16.msra.mxu0 %v4385
    %5220 = vmatprep.subr.bf16.mxu0 %v4393
    %5221 = vmatpush1.bf16.msra.mxu0 %v4392
    %5222 = vmatprep.subr.bf16.mxu0 %v4400
    %5223 = vmatpush1.bf16.msra.mxu0 %v4399
    %5224 = vmatprep.subr.bf16.mxu0 %v4407
    %5225 = vmatpush1.bf16.msra.mxu0 %v4406
    %5226 = vmatprep.subr.bf16.mxu0 %v4414
    %5227 = vmatpush1.bf16.msra.mxu0 %v4413
    %5228 = vmatprep.subr.bf16.mxu0 %v4421
    %5229 = vmatpush1.bf16.msra.mxu0 %v4420
    %5230 = vmatprep.subr.bf16.mxu0 %v4428
    %5231 = vmatpush1.bf16.msra.mxu0 %v4427
    %5232 = vmatprep.subr.bf16.mxu0 %v4435
    %5233 = vmatpush1.bf16.msra.mxu0 %v4434
    %5234 = vmatprep.subr.bf16.mxu0 %v4442
    %5235 = vmatpush1.bf16.msra.mxu0 %v4441
    %5236 = vmatprep.subr.bf16.mxu0 %v4449
    %5237 = vmatpush1.bf16.msra.mxu0 %v4448
    %5238 = vmatprep.subr.bf16.mxu0 %v4456
    %5239 = vmatpush1.bf16.msra.mxu0 %v4455
    %5240 = vmatprep.subr.bf16.mxu0 %v4463
    %5241 = vmatpush1.bf16.msra.mxu0 %v4462
    %5242 = vmatprep.subr.bf16.mxu0 %v4470
    %5243 = vmatpush1.bf16.msra.mxu0 %v4469
    %5244 = vmatprep.subr.bf16.mxu0 %v4477
    %5245 = vmatpush1.bf16.msra.mxu0 %v4476
    %5246 = vmatprep.mubr.bf16.mxu0 %v3160
    %5247 = vmatmul.mubr.bf16.gmra.mrb[0].mxu0 %v3159
    %v5248 = vpop.f32.mrb[0].mxu0
    %v5249 = vadd.f32 %v5208, %v5248
    %v5250 = vpop.f32.mrb[0].mxu0
    %v5251 = vadd.f32 %v5210, %v5250
    %v5252 = vpop.f32.mrb[0].mxu0
    %v5253 = vpop.f32.mrb[0].mxu0
    %5254 = vdwg.mxu0
    %5255 = vmatprep.subr.bf16.mxu0 %v4484
    %5256 = vmatpush1.bf16.msra.mxu0 %v4483
    %5257 = vmatprep.subr.bf16.mxu0 %v4491
    %5258 = vmatpush1.bf16.msra.mxu0 %v4490
    %5259 = vmatprep.subr.bf16.mxu0 %v4498
    %5260 = vmatpush1.bf16.msra.mxu0 %v4497
    %5261 = vmatprep.subr.bf16.mxu0 %v4505
    %5262 = vmatpush1.bf16.msra.mxu0 %v4504
    %5263 = vmatprep.subr.bf16.mxu0 %v4512
    %5264 = vmatpush1.bf16.msra.mxu0 %v4511
    %5265 = vmatprep.subr.bf16.mxu0 %v4519
    %5266 = vmatpush1.bf16.msra.mxu0 %v4518
    %5267 = vmatprep.subr.bf16.mxu0 %v4526
    %5268 = vmatpush1.bf16.msra.mxu0 %v4525
    %5269 = vmatprep.subr.bf16.mxu0 %v4533
    %5270 = vmatpush1.bf16.msra.mxu0 %v4532
    %5271 = vmatprep.subr.bf16.mxu0 %v4540
    %5272 = vmatpush1.bf16.msra.mxu0 %v4539
    %5273 = vmatprep.subr.bf16.mxu0 %v4547
    %5274 = vmatpush1.bf16.msra.mxu0 %v4546
    %5275 = vmatprep.subr.bf16.mxu0 %v4554
    %5276 = vmatpush1.bf16.msra.mxu0 %v4553
    %5277 = vmatprep.subr.bf16.mxu0 %v4561
    %5278 = vmatpush1.bf16.msra.mxu0 %v4560
    %5279 = vmatprep.subr.bf16.mxu0 %v4568
    %5280 = vmatpush1.bf16.msra.mxu0 %v4567
    %5281 = vmatprep.subr.bf16.mxu0 %v4575
    %5282 = vmatpush1.bf16.msra.mxu0 %v4574
    %5283 = vmatprep.subr.bf16.mxu0 %v4582
    %5284 = vmatpush1.bf16.msra.mxu0 %v4581
    %5285 = vmatprep.subr.bf16.mxu0 %v4589
    %5286 = vmatpush1.bf16.msra.mxu0 %v4588
    %5287 = vmatprep.mubr.bf16.mxu0 %v3162
    %5288 = vmatmul.mubr.bf16.gmra.mrb[0].mxu0 %v3161
    %v5289 = vpop.f32.mrb[0].mxu0
    %v5290 = vadd.f32 %v5249, %v5289
    %v5291 = vpop.f32.mrb[0].mxu0
    %v5292 = vadd.f32 %v5251, %v5291
    %v5293 = vpop.f32.mrb[0].mxu0
    %v5294 = vpop.f32.mrb[0].mxu0
    %5295 = vdwg.mxu0
    %5296 = vmatprep.subr.bf16.mxu0 0
    %5297 = vmatpush1.bf16.msra.mxu0 %v4261
    %5298 = vmatprep.subr.bf16.mxu0 0
    %5299 = vmatpush1.bf16.msra.mxu0 %v4268
    %5300 = vmatprep.subr.bf16.mxu0 0
    %5301 = vmatpush1.bf16.msra.mxu0 %v4275
    %5302 = vmatprep.subr.bf16.mxu0 0
    %5303 = vmatpush1.bf16.msra.mxu0 %v4282
    %5304 = vmatprep.subr.bf16.mxu0 0
    %5305 = vmatpush1.bf16.msra.mxu0 %v4289
    %5306 = vmatprep.subr.bf16.mxu0 0
    %5307 = vmatpush1.bf16.msra.mxu0 %v4296
    %5308 = vmatprep.subr.bf16.mxu0 0
    %5309 = vmatpush1.bf16.msra.mxu0 %v4303
    %5310 = vmatprep.subr.bf16.mxu0 0
    %5311 = vmatpush1.bf16.msra.mxu0 %v4310
    %5312 = vmatprep.subr.bf16.mxu0 0
    %5313 = vmatpush1.bf16.msra.mxu0 %v4317
    %5314 = vmatprep.subr.bf16.mxu0 0
    %5315 = vmatpush1.bf16.msra.mxu0 %v4324
    %5316 = vmatprep.subr.bf16.mxu0 0
    %5317 = vmatpush1.bf16.msra.mxu0 %v4331
    %5318 = vmatprep.subr.bf16.mxu0 0
    %5319 = vmatpush1.bf16.msra.mxu0 %v4338
    %5320 = vmatprep.subr.bf16.mxu0 0
    %5321 = vmatpush1.bf16.msra.mxu0 %v4345
    %5322 = vmatprep.subr.bf16.mxu0 0
    %5323 = vmatpush1.bf16.msra.mxu0 %v4352
    %5324 = vmatprep.subr.bf16.mxu0 0
    %5325 = vmatpush1.bf16.msra.mxu0 %v4359
    %5326 = vmatprep.subr.bf16.mxu0 0
    %5327 = vmatpush1.bf16.msra.mxu0 %v4366
    %5328 = vmatprep.mubr.bf16.mxu0 %v3158
    %5329 = vmatmul.mubr.bf16.gmra.mrb[0].mxu0 %v3157
    %v5330 = vpop.f32.mrb[0].mxu0
    %v5331 = vadd.f32 %v3191, %v5330
    %v5332 = vpop.f32.mrb[0].mxu0
    %v5333 = vpop.f32.mrb[0].mxu0
    %v5334 = vpop.f32.mrb[0].mxu0
    %5335 = vdwg.mxu0
    %5336 = vmatprep.subr.bf16.mxu0 0
    %5337 = vmatpush1.bf16.msra.mxu0 %v4373
    %5338 = vmatprep.subr.bf16.mxu0 0
    %5339 = vmatpush1.bf16.msra.mxu0 %v4380
    %5340 = vmatprep.subr.bf16.mxu0 0
    %5341 = vmatpush1.bf16.msra.mxu0 %v4387
    %5342 = vmatprep.subr.bf16.mxu0 0
    %5343 = vmatpush1.bf16.msra.mxu0 %v4394
    %5344 = vmatprep.subr.bf16.mxu0 0
    %5345 = vmatpush1.bf16.msra.mxu0 %v4401
    %5346 = vmatprep.subr.bf16.mxu0 0
    %5347 = vmatpush1.bf16.msra.mxu0 %v4408
    %5348 = vmatprep.subr.bf16.mxu0 0
    %5349 = vmatpush1.bf16.msra.mxu0 %v4415
    %5350 = vmatprep.subr.bf16.mxu0 0
    %5351 = vmatpush1.bf16.msra.mxu0 %v4422
    %5352 = vmatprep.subr.bf16.mxu0 0
    %5353 = vmatpush1.bf16.msra.mxu0 %v4429
    %5354 = vmatprep.subr.bf16.mxu0 0
    %5355 = vmatpush1.bf16.msra.mxu0 %v4436
    %5356 = vmatprep.subr.bf16.mxu0 0
    %5357 = vmatpush1.bf16.msra.mxu0 %v4443
    %5358 = vmatprep.subr.bf16.mxu0 0
    %5359 = vmatpush1.bf16.msra.mxu0 %v4450
    %5360 = vmatprep.subr.bf16.mxu0 0
    %5361 = vmatpush1.bf16.msra.mxu0 %v4457
    %5362 = vmatprep.subr.bf16.mxu0 0
    %5363 = vmatpush1.bf16.msra.mxu0 %v4464
    %5364 = vmatprep.subr.bf16.mxu0 0
    %5365 = vmatpush1.bf16.msra.mxu0 %v4471
    %5366 = vmatprep.subr.bf16.mxu0 0
    %5367 = vmatpush1.bf16.msra.mxu0 %v4478
    %5368 = vmatprep.mubr.bf16.mxu0 %v3160
    %5369 = vmatmul.mubr.bf16.gmra.mrb[0].mxu0 %v3159
    %v5370 = vpop.f32.mrb[0].mxu0
    %v5371 = vadd.f32 %v5331, %v5370
    %v5372 = vpop.f32.mrb[0].mxu0
    %v5373 = vpop.f32.mrb[0].mxu0
    %v5374 = vpop.f32.mrb[0].mxu0
    %5375 = vdwg.mxu0
    %5376 = vmatprep.subr.bf16.mxu0 0
    %5377 = vmatpush1.bf16.msra.mxu0 %v4485
    %5378 = vmatprep.subr.bf16.mxu0 0
    %5379 = vmatpush1.bf16.msra.mxu0 %v4492
    %5380 = vmatprep.subr.bf16.mxu0 0
    %5381 = vmatpush1.bf16.msra.mxu0 %v4499
    %5382 = vmatprep.subr.bf16.mxu0 0
    %5383 = vmatpush1.bf16.msra.mxu0 %v4506
    %5384 = vmatprep.subr.bf16.mxu0 0
    %5385 = vmatpush1.bf16.msra.mxu0 %v4513
    %5386 = vmatprep.subr.bf16.mxu0 0
    %5387 = vmatpush1.bf16.msra.mxu0 %v4520
    %5388 = vmatprep.subr.bf16.mxu0 0
    %5389 = vmatpush1.bf16.msra.mxu0 %v4527
    %5390 = vmatprep.subr.bf16.mxu0 0
    %5391 = vmatpush1.bf16.msra.mxu0 %v4534
    %5392 = vmatprep.subr.bf16.mxu0 0
    %5393 = vmatpush1.bf16.msra.mxu0 %v4541
    %5394 = vmatprep.subr.bf16.mxu0 0
    %5395 = vmatpush1.bf16.msra.mxu0 %v4548
    %5396 = vmatprep.subr.bf16.mxu0 0
    %5397 = vmatpush1.bf16.msra.mxu0 %v4555
    %5398 = vmatprep.subr.bf16.mxu0 0
    %5399 = vmatpush1.bf16.msra.mxu0 %v4562
    %5400 = vmatprep.subr.bf16.mxu0 0
    %5401 = vmatpush1.bf16.msra.mxu0 %v4569
    %5402 = vmatprep.subr.bf16.mxu0 0
    %5403 = vmatpush1.bf16.msra.mxu0 %v4576
    %5404 = vmatprep.subr.bf16.mxu0 0
    %5405 = vmatpush1.bf16.msra.mxu0 %v4583
    %5406 = vmatprep.subr.bf16.mxu0 0
    %5407 = vmatpush1.bf16.msra.mxu0 %v4590
    %5408 = vmatprep.mubr.bf16.mxu0 %v3162
    %5409 = vmatmul.mubr.bf16.gmra.mrb[0].mxu0 %v3161
    %v5410 = vpop.f32.mrb[0].mxu0
    %v5411 = vadd.f32 %v5371, %v5410
    %v5412 = vpop.f32.mrb[0].mxu0
    %v5413 = vpop.f32.mrb[0].mxu0
    %v5414 = vpop.f32.mrb[0].mxu0
    %5415 = vdwg.mxu0
    %v5416 = vld [vmem:[%s11] sm:$0x1]
    %v5417 = vld [vmem:[%s12] sm:$0x1]
    %v5418 = vsel %vm293, %v5044, 0.0
    %v5419 = vrot.slane %v5418, 4
    %v5420 = vadd.f32 %v5418, %v5419
    %v5421 = vrot.slane %v5420, 2
    %v5422 = vadd.f32 %v5420, %v5421
    %v5423 = vrot.slane %v5422, 1
    %v5424 = vadd.f32 %v5422, %v5423
    %v5425 = vsel %vm293, %v5046, 0.0
    %v5426 = vrot.slane %v5425, 4
    %v5427 = vadd.f32 %v5425, %v5426
    %v5428 = vrot.slane %v5427, 2
    %v5429 = vadd.f32 %v5427, %v5428
    %v5430 = vrot.slane %v5429, 1
    %v5431 = vadd.f32 %v5429, %v5430
    %v5432 = vsel %vm293, %v5167, 0.0
    %v5433 = vrot.slane %v5432, 4
    %v5434 = vadd.f32 %v5432, %v5433
    %v5435 = vrot.slane %v5434, 2
    %v5436 = vadd.f32 %v5434, %v5435
    %v5437 = vrot.slane %v5436, 1
    %v5438 = vadd.f32 %v5436, %v5437
    %v5439 = vsel %vm293, %v5169, 0.0
    %v5440 = vrot.slane %v5439, 4
    %v5441 = vadd.f32 %v5439, %v5440
    %v5442 = vrot.slane %v5441, 2
    %v5443 = vadd.f32 %v5441, %v5442
    %v5444 = vrot.slane %v5443, 1
    %v5445 = vadd.f32 %v5443, %v5444
    %v5446 = vsel %vm293, %v5290, 0.0
    %v5447 = vrot.slane %v5446, 4
    %v5448 = vadd.f32 %v5446, %v5447
    %v5449 = vrot.slane %v5448, 2
    %v5450 = vadd.f32 %v5448, %v5449
    %v5451 = vrot.slane %v5450, 1
    %v5452 = vadd.f32 %v5450, %v5451
    %v5453 = vsel %vm293, %v5292, 0.0
    %v5454 = vrot.slane %v5453, 4
    %v5455 = vadd.f32 %v5453, %v5454
    %v5456 = vrot.slane %v5455, 2
    %v5457 = vadd.f32 %v5455, %v5456
    %v5458 = vrot.slane %v5457, 1
    %v5459 = vadd.f32 %v5457, %v5458
    %vm5460 = vcmask 517120
    %v5461 = vsel %vm5460, %v5411, 0.0
    %v5462 = vrot.slane %v5461, 4
    %v5463 = vadd.f32 %v5461, %v5462
    %v5464 = vrot.slane %v5463, 2
    %v5465 = vadd.f32 %v5463, %v5464
    %v5466 = vrot.slane %v5465, 1
    %v5467 = vadd.f32 %v5465, %v5466
    %v5468 = vmul.f32 %v5044, %v5044
    %v5469 = vmul.f32 %v5046, %v5046
    %v5470 = vmul.f32 %v5167, %v5167
    %v5471 = vmul.f32 %v5169, %v5169
    %v5472 = vmul.f32 %v5290, %v5290
    %v5473 = vmul.f32 %v5292, %v5292
    %v5474 = vmul.f32 %v5411, %v5411
    %v5475 = vsel %vm293, %v5468, 0.0
    %v5476 = vrot.slane %v5475, 4
    %v5477 = vadd.f32 %v5475, %v5476
    %v5478 = vrot.slane %v5477, 2
    %v5479 = vadd.f32 %v5477, %v5478
    %v5480 = vrot.slane %v5479, 1
    %v5481 = vadd.f32 %v5479, %v5480
    %v5482 = vsel %vm293, %v5469, 0.0
    %v5483 = vrot.slane %v5482, 4
    %v5484 = vadd.f32 %v5482, %v5483
    %v5485 = vrot.slane %v5484, 2
    %v5486 = vadd.f32 %v5484, %v5485
    %v5487 = vrot.slane %v5486, 1
    %v5488 = vadd.f32 %v5486, %v5487
    %v5489 = vsel %vm293, %v5470, 0.0
    %v5490 = vrot.slane %v5489, 4
    %v5491 = vadd.f32 %v5489, %v5490
    %v5492 = vrot.slane %v5491, 2
    %v5493 = vadd.f32 %v5491, %v5492
    %v5494 = vrot.slane %v5493, 1
    %v5495 = vadd.f32 %v5493, %v5494
    %v5496 = vsel %vm293, %v5471, 0.0
    %v5497 = vrot.slane %v5496, 4
    %v5498 = vadd.f32 %v5496, %v5497
    %v5499 = vrot.slane %v5498, 2
    %v5500 = vadd.f32 %v5498, %v5499
    %v5501 = vrot.slane %v5500, 1
    %v5502 = vadd.f32 %v5500, %v5501
    %v5503 = vsel %vm293, %v5472, 0.0
    %v5504 = vrot.slane %v5503, 4
    %v5505 = vadd.f32 %v5503, %v5504
    %v5506 = vrot.slane %v5505, 2
    %v5507 = vadd.f32 %v5505, %v5506
    %v5508 = vrot.slane %v5507, 1
    %v5509 = vadd.f32 %v5507, %v5508
    %v5510 = vsel %vm293, %v5473, 0.0
    %v5511 = vrot.slane %v5510, 4
    %v5512 = vadd.f32 %v5510, %v5511
    %v5513 = vrot.slane %v5512, 2
    %v5514 = vadd.f32 %v5512, %v5513
    %v5515 = vrot.slane %v5514, 1
    %v5516 = vadd.f32 %v5514, %v5515
    %v5517 = vsel %vm5460, %v5474, 0.0
    %v5518 = vrot.slane %v5517, 4
    %v5519 = vadd.f32 %v5517, %v5518
    %v5520 = vrot.slane %v5519, 2
    %v5521 = vadd.f32 %v5519, %v5520
    %v5522 = vrot.slane %v5521, 1
    %v5523 = vadd.f32 %v5521, %v5522
    %v5524 = vld [vmem:[%s13] sm:$0xf]
    %v5525 = vld [vmem:[%s13 + $0x4] sm:$0xf]
    %v5526 = vld [vmem:[%s13 + $0x8] sm:$0xf]
    %v5527 = vld [vmem:[%s13 + $0xc] sm:$0xf]
    %v5528 = vld [vmem:[%s13 + $0x10] sm:$0xf]
    %v5529 = vld [vmem:[%s13 + $0x14] sm:$0xf]
    %v5530 = vld [vmem:[%s13 + $0x18] sm:$0xf]
    %v5531 = vld [vmem:[%s13 + $0x1c] sm:$0xf]
    %v5532 = vld [vmem:[%s13 + $0x20] sm:$0xf]
    %v5533 = vld [vmem:[%s13 + $0x24] sm:$0xf]
    %v5534 = vld [vmem:[%s13 + $0x28] sm:$0xf]
    %v5535 = vld [vmem:[%s13 + $0x2c] sm:$0xf]
    %v5536 = vld [vmem:[%s13 + $0x30] sm:$0xf]
    %v5537 = vld [vmem:[%s13 + $0x34] sm:$0xf]
    %v5538 = vld [vmem:[%s13 + $0x38] sm:$0xf]
    %v5539 = vld [vmem:[%s13 + $0x3c] sm:$0xf]
    %v5540 = vld [vmem:[%s13 + $0x40] sm:$0xf]
    %v5541 = vld [vmem:[%s13 + $0x44] sm:$0xf]
    %v5542 = vld [vmem:[%s13 + $0x48] sm:$0xf]
    %v5543 = vld [vmem:[%s13 + $0x4c] sm:$0xf]
    %v5544 = vld [vmem:[%s13 + $0x50] sm:$0xf]
    %v5545 = vld [vmem:[%s13 + $0x54] sm:$0xf]
    %v5546 = vld [vmem:[%s13 + $0x58] sm:$0xf]
    %v5547 = vld [vmem:[%s13 + $0x5c] sm:$0xf]
    %v5548 = vld [vmem:[%s13 + $0x60] sm:$0xf]
    %v5549 = vld [vmem:[%s13 + $0x64] sm:$0xf]
    %v5550 = vld [vmem:[%s13 + $0x68] sm:$0xf]
    %v5551 = vld [vmem:[%s13 + $0x6c] sm:$0xf]
    %v5552 = vld [vmem:[%s13 + $0x70] sm:$0xf]
    %v5553 = vld [vmem:[%s13 + $0x74] sm:$0xf]
    %v5554 = vld [vmem:[%s13 + $0x78] sm:$0xf]
    %v5555 = vld [vmem:[%s13 + $0x7c] sm:$0xf]
    %v5556 = vld [vmem:[%s13 + $0x80] sm:$0xf]
    %v5557 = vld [vmem:[%s13 + $0x84] sm:$0xf]
    %v5558 = vld [vmem:[%s13 + $0x88] sm:$0xf]
    %v5559 = vld [vmem:[%s13 + $0x8c] sm:$0xf]
    %v5560 = vld [vmem:[%s13 + $0x90] sm:$0xf]
    %v5561 = vld [vmem:[%s13 + $0x94] sm:$0xf]
    %v5562 = vld [vmem:[%s13 + $0x98] sm:$0xf]
    %v5563 = vld [vmem:[%s13 + $0x9c] sm:$0xf]
    %v5564 = vld [vmem:[%s13 + $0xa0] sm:$0xf]
    %v5565 = vld [vmem:[%s13 + $0xa4] sm:$0xf]
    %v5566 = vld [vmem:[%s13 + $0xa8] sm:$0xf]
    %v5567 = vld [vmem:[%s13 + $0xac] sm:$0xf]
    %v5568 = vld [vmem:[%s13 + $0xb0] sm:$0xf]
    %v5569 = vld [vmem:[%s13 + $0xb4] sm:$0xf]
    %v5570 = vld [vmem:[%s13 + $0xb8] sm:$0xf]
    %v5571 = vld [vmem:[%s13 + $0xbc] sm:$0xf]
    %v5572 = vld [vmem:[%s13 + $0xc0] sm:$0xf]
    %v5573 = vld [vmem:[%s13 + $0xc4] sm:$0xf]
    %v5574 = vld [vmem:[%s13 + $0xc8] sm:$0xf]
    %v5575 = vld [vmem:[%s13 + $0xcc] sm:$0xf]
    %v5576 = vld [vmem:[%s13 + $0xd0] sm:$0xf]
    %v5577 = vld [vmem:[%s13 + $0xd4] sm:$0xf]
    %v5578 = vld [vmem:[%s13 + $0xd8] sm:$0xf]
    %v5579 = vld [vmem:[%s13 + $0xdc] sm:$0xf]
    %v5580 = vld [vmem:[%s13 + $0xe0] sm:$0xf]
    %v5581 = vld [vmem:[%s13 + $0xe4] sm:$0xf]
    %v5582 = vld [vmem:[%s13 + $0xe8] sm:$0xf]
    %v5583 = vld [vmem:[%s13 + $0xec] sm:$0xf]
    %v5584 = vld [vmem:[%s13 + $0xf0] sm:$0xf]
    %v5585 = vld [vmem:[%s13 + $0xf4] sm:$0xf]
    %v5586 = vld [vmem:[%s13 + $0xf8] sm:$0xf]
    %v5587 = vld [vmem:[%s13 + $0xfc] sm:$0xf]
    %v5588 = vld [vmem:[%s13 + $0x100] sm:$0xf]
    %v5589 = vld [vmem:[%s13 + $0x104] sm:$0xf]
    %v5590 = vld [vmem:[%s13 + $0x108] sm:$0xf]
    %v5591 = vld [vmem:[%s13 + $0x10c] sm:$0xf]
    %v5592 = vld [vmem:[%s13 + $0x110] sm:$0xf]
    %v5593 = vld [vmem:[%s13 + $0x114] sm:$0xf]
    %v5594 = vld [vmem:[%s13 + $0x118] sm:$0xf]
    %v5595 = vld [vmem:[%s13 + $0x11c] sm:$0xf]
    %v5596 = vld [vmem:[%s13 + $0x120] sm:$0xf]
    %v5597 = vld [vmem:[%s13 + $0x124] sm:$0xf]
    %v5598 = vld [vmem:[%s13 + $0x128] sm:$0xf]
    %v5599 = vld [vmem:[%s13 + $0x12c] sm:$0xf]
    %v5600 = vld [vmem:[%s13 + $0x130] sm:$0xf]
    %v5601 = vld [vmem:[%s13 + $0x134] sm:$0xf]
    %v5602 = vld [vmem:[%s13 + $0x138] sm:$0xf]
    %v5603 = vld [vmem:[%s13 + $0x13c] sm:$0xf]
    %v5604 = vld [vmem:[%s13 + $0x140] sm:$0xf]
    %v5605 = vld [vmem:[%s13 + $0x144] sm:$0xf]
    %v5606 = vld [vmem:[%s13 + $0x148] sm:$0xf]
    %v5607 = vld [vmem:[%s13 + $0x14c] sm:$0xf]
    %v5608 = vld [vmem:[%s13 + $0x150] sm:$0xf]
    %v5609 = vld [vmem:[%s13 + $0x154] sm:$0xf]
    %v5610 = vld [vmem:[%s13 + $0x158] sm:$0xf]
    %v5611 = vld [vmem:[%s13 + $0x15c] sm:$0xf]
    %v5612 = vld [vmem:[%s13 + $0x160] sm:$0xf]
    %v5613 = vld [vmem:[%s13 + $0x164] sm:$0xf]
    %v5614 = vld [vmem:[%s13 + $0x168] sm:$0xf]
    %v5615 = vld [vmem:[%s13 + $0x16c] sm:$0xf]
    %v5616 = vld [vmem:[%s13 + $0x170] sm:$0xf]
    %v5617 = vld [vmem:[%s13 + $0x174] sm:$0xf]
    %v5618 = vld [vmem:[%s13 + $0x178] sm:$0xf]
    %v5619 = vld [vmem:[%s13 + $0x17c] sm:$0xf]
    %v5620 = vld [vmem:[%s13 + $0x180] sm:$0xf]
    %v5621 = vld [vmem:[%s13 + $0x184] sm:$0xf]
    %v5622 = vld [vmem:[%s13 + $0x188] sm:$0xf]
    %v5623 = vld [vmem:[%s13 + $0x18c] sm:$0xf]
    %v5624 = vld [vmem:[%s13 + $0x190] sm:$0xf]
    %v5625 = vld [vmem:[%s13 + $0x194] sm:$0xf]
    %v5626 = vld [vmem:[%s13 + $0x198] sm:$0xf]
    %v5627 = vld [vmem:[%s13 + $0x19c] sm:$0xf]
    %v5628 = vunpack.c.l.bf16 %v5524
    %v5629 = vunpack.c.l.bf16 %v5525
    %v5630 = vunpack.c.l.bf16 %v5526
    %v5631 = vunpack.c.l.bf16 %v5527
    %v5632 = vunpack.c.l.bf16 %v5528
    %v5633 = vunpack.c.l.bf16 %v5529
    %v5634 = vunpack.c.l.bf16 %v5530
    %v5635 = vunpack.c.l.bf16 %v5531
    %v5636 = vunpack.c.l.bf16 %v5532
    %v5637 = vunpack.c.l.bf16 %v5533
    %v5638 = vunpack.c.l.bf16 %v5534
    %v5639 = vunpack.c.l.bf16 %v5535
    %v5640 = vunpack.c.l.bf16 %v5536
    %v5641 = vunpack.c.l.bf16 %v5537
    %v5642 = vunpack.c.l.bf16 %v5538
    %v5643 = vunpack.c.l.bf16 %v5539
    %v5644 = vunpack.c.l.bf16 %v5540
    %v5645 = vunpack.c.l.bf16 %v5541
    %v5646 = vunpack.c.l.bf16 %v5542
    %v5647 = vunpack.c.l.bf16 %v5543
    %v5648 = vunpack.c.l.bf16 %v5544
    %v5649 = vunpack.c.l.bf16 %v5545
    %v5650 = vunpack.c.l.bf16 %v5546
    %v5651 = vunpack.c.l.bf16 %v5547
    %v5652 = vunpack.c.l.bf16 %v5548
    %v5653 = vunpack.c.l.bf16 %v5549
    %v5654 = vunpack.c.l.bf16 %v5550
    %v5655 = vunpack.c.l.bf16 %v5551
    %v5656 = vunpack.c.l.bf16 %v5552
    %v5657 = vunpack.c.l.bf16 %v5553
    %v5658 = vunpack.c.l.bf16 %v5554
    %v5659 = vunpack.c.l.bf16 %v5555
    %v5660 = vunpack.c.l.bf16 %v5556
    %v5661 = vunpack.c.l.bf16 %v5557
    %v5662 = vunpack.c.l.bf16 %v5558
    %v5663 = vunpack.c.l.bf16 %v5559
    %v5664 = vunpack.c.l.bf16 %v5560
    %v5665 = vunpack.c.l.bf16 %v5561
    %v5666 = vunpack.c.l.bf16 %v5562
    %v5667 = vunpack.c.l.bf16 %v5563
    %v5668 = vunpack.c.l.bf16 %v5564
    %v5669 = vunpack.c.l.bf16 %v5565
    %v5670 = vunpack.c.l.bf16 %v5566
    %v5671 = vunpack.c.l.bf16 %v5567
    %v5672 = vunpack.c.l.bf16 %v5568
    %v5673 = vunpack.c.l.bf16 %v5569
    %v5674 = vunpack.c.l.bf16 %v5570
    %v5675 = vunpack.c.l.bf16 %v5571
    %v5676 = vunpack.c.l.bf16 %v5572
    %v5677 = vunpack.c.l.bf16 %v5573
    %v5678 = vunpack.c.l.bf16 %v5574
    %v5679 = vunpack.c.l.bf16 %v5575
    %v5680 = vunpack.c.l.bf16 %v5576
    %v5681 = vunpack.c.l.bf16 %v5577
    %v5682 = vunpack.c.l.bf16 %v5578
    %v5683 = vunpack.c.l.bf16 %v5579
    %v5684 = vunpack.c.l.bf16 %v5580
    %v5685 = vunpack.c.l.bf16 %v5581
    %v5686 = vunpack.c.l.bf16 %v5582
    %v5687 = vunpack.c.l.bf16 %v5583
    %v5688 = vunpack.c.l.bf16 %v5584
    %v5689 = vunpack.c.l.bf16 %v5585
    %v5690 = vunpack.c.l.bf16 %v5586
    %v5691 = vunpack.c.l.bf16 %v5587
    %v5692 = vunpack.c.l.bf16 %v5588
    %v5693 = vunpack.c.l.bf16 %v5589
    %v5694 = vunpack.c.l.bf16 %v5590
    %v5695 = vunpack.c.l.bf16 %v5591
    %v5696 = vunpack.c.l.bf16 %v5592
    %v5697 = vunpack.c.l.bf16 %v5593
    %v5698 = vunpack.c.l.bf16 %v5594
    %v5699 = vunpack.c.l.bf16 %v5595
    %v5700 = vunpack.c.l.bf16 %v5596
    %v5701 = vunpack.c.l.bf16 %v5597
    %v5702 = vunpack.c.l.bf16 %v5598
    %v5703 = vunpack.c.l.bf16 %v5599
    %v5704 = vunpack.c.l.bf16 %v5600
    %v5705 = vunpack.c.l.bf16 %v5601
    %v5706 = vunpack.c.l.bf16 %v5602
    %v5707 = vunpack.c.l.bf16 %v5603
    %v5708 = vunpack.c.l.bf16 %v5604
    %v5709 = vunpack.c.l.bf16 %v5605
    %v5710 = vunpack.c.l.bf16 %v5606
    %v5711 = vunpack.c.l.bf16 %v5607
    %v5712 = vunpack.c.l.bf16 %v5608
    %v5713 = vunpack.c.l.bf16 %v5609
    %v5714 = vunpack.c.l.bf16 %v5610
    %v5715 = vunpack.c.l.bf16 %v5611
    %v5716 = vunpack.c.l.bf16 %v5612
    %v5717 = vunpack.c.l.bf16 %v5613
    %v5718 = vunpack.c.l.bf16 %v5614
    %v5719 = vunpack.c.l.bf16 %v5615
    %v5720 = vunpack.c.l.bf16 %v5616
    %v5721 = vunpack.c.l.bf16 %v5617
    %v5722 = vunpack.c.l.bf16 %v5618
    %v5723 = vunpack.c.l.bf16 %v5619
    %v5724 = vunpack.c.l.bf16 %v5620
    %v5725 = vunpack.c.l.bf16 %v5621
    %v5726 = vunpack.c.l.bf16 %v5622
    %v5727 = vunpack.c.l.bf16 %v5623
    %v5728 = vunpack.c.l.bf16 %v5624
    %v5729 = vunpack.c.l.bf16 %v5625
    %v5730 = vunpack.c.l.bf16 %v5626
    %v5731 = vunpack.c.l.bf16 %v5627
    %v5732 = vld [vmem:[%s14] sm:$0xff]
    %v5733 = vld [vmem:[%s14 + $0x8] sm:$0xff]
    %v5734 = vld [vmem:[%s14 + $0x10] sm:$0xff]
    %v5735 = vld [vmem:[%s14 + $0x18] sm:$0xf]
    %v5736 = vld [vmem:[%s14 + $0x1c] sm:$0xff]
    %v5737 = vld [vmem:[%s14 + $0x24] sm:$0xff]
    %v5738 = vld [vmem:[%s14 + $0x2c] sm:$0xff]
    %v5739 = vld [vmem:[%s14 + $0x34] sm:$0xf]
    %v5740 = vld [vmem:[%s14 + $0x38] sm:$0xff]
    %v5741 = vld [vmem:[%s14 + $0x40] sm:$0xff]
    %v5742 = vld [vmem:[%s14 + $0x48] sm:$0xff]
    %v5743 = vld [vmem:[%s14 + $0x50] sm:$0xf]
    %v5744 = vld [vmem:[%s14 + $0x54] sm:$0xff]
    %v5745 = vld [vmem:[%s14 + $0x5c] sm:$0xff]
    %v5746 = vld [vmem:[%s14 + $0x64] sm:$0xff]
    %v5747 = vld [vmem:[%s14 + $0x6c] sm:$0xf]
    %v5748 = vld [vmem:[%s14 + $0x70] sm:$0xff]
    %v5749 = vld [vmem:[%s14 + $0x78] sm:$0xff]
    %v5750 = vld [vmem:[%s14 + $0x80] sm:$0xff]
    %v5751 = vld [vmem:[%s14 + $0x88] sm:$0xf]
    %v5752 = vld [vmem:[%s14 + $0x8c] sm:$0xff]
    %v5753 = vld [vmem:[%s14 + $0x94] sm:$0xff]
    %v5754 = vld [vmem:[%s14 + $0x9c] sm:$0xff]
    %v5755 = vld [vmem:[%s14 + $0xa4] sm:$0xf]
    %v5756 = vld [vmem:[%s14 + $0xa8] sm:$0xff]
    %v5757 = vld [vmem:[%s14 + $0xb0] sm:$0xff]
    %v5758 = vld [vmem:[%s14 + $0xb8] sm:$0xff]
    %v5759 = vld [vmem:[%s14 + $0xc0] sm:$0xf]
    %v5760 = vld [vmem:[%s14 + $0xc4] sm:$0xff]
    %v5761 = vld [vmem:[%s14 + $0xcc] sm:$0xff]
    %v5762 = vld [vmem:[%s14 + $0xd4] sm:$0xff]
    %v5763 = vld [vmem:[%s14 + $0xdc] sm:$0xf]
    %v5764 = vunpack.c.l.bf16 %v5732
    %v5765 = vunpack.c.h.bf16 %v5732
    %v5766 = vunpack.c.l.bf16 %v5733
    %v5767 = vunpack.c.h.bf16 %v5733
    %v5768 = vunpack.c.l.bf16 %v5734
    %v5769 = vunpack.c.h.bf16 %v5734
    %v5770 = vunpack.c.l.bf16 %v5735
    %v5771 = vunpack.c.l.bf16 %v5736
    %v5772 = vunpack.c.h.bf16 %v5736
    %v5773 = vunpack.c.l.bf16 %v5737
    %v5774 = vunpack.c.h.bf16 %v5737
    %v5775 = vunpack.c.l.bf16 %v5738
    %v5776 = vunpack.c.h.bf16 %v5738
    %v5777 = vunpack.c.l.bf16 %v5739
    %v5778 = vunpack.c.l.bf16 %v5740
    %v5779 = vunpack.c.h.bf16 %v5740
    %v5780 = vunpack.c.l.bf16 %v5741
    %v5781 = vunpack.c.h.bf16 %v5741
    %v5782 = vunpack.c.l.bf16 %v5742
    %v5783 = vunpack.c.h.bf16 %v5742
    %v5784 = vunpack.c.l.bf16 %v5743
    %v5785 = vunpack.c.l.bf16 %v5744
    %v5786 = vunpack.c.h.bf16 %v5744
    %v5787 = vunpack.c.l.bf16 %v5745
    %v5788 = vunpack.c.h.bf16 %v5745
    %v5789 = vunpack.c.l.bf16 %v5746
    %v5790 = vunpack.c.h.bf16 %v5746
    %v5791 = vunpack.c.l.bf16 %v5747
    %v5792 = vunpack.c.l.bf16 %v5748
    %v5793 = vunpack.c.h.bf16 %v5748
    %v5794 = vunpack.c.l.bf16 %v5749
    %v5795 = vunpack.c.h.bf16 %v5749
    %v5796 = vunpack.c.l.bf16 %v5750
    %v5797 = vunpack.c.h.bf16 %v5750
    %v5798 = vunpack.c.l.bf16 %v5751
    %v5799 = vunpack.c.l.bf16 %v5752
    %v5800 = vunpack.c.h.bf16 %v5752
    %v5801 = vunpack.c.l.bf16 %v5753
    %v5802 = vunpack.c.h.bf16 %v5753
    %v5803 = vunpack.c.l.bf16 %v5754
    %v5804 = vunpack.c.h.bf16 %v5754
    %v5805 = vunpack.c.l.bf16 %v5755
    %v5806 = vunpack.c.l.bf16 %v5756
    %v5807 = vunpack.c.h.bf16 %v5756
    %v5808 = vunpack.c.l.bf16 %v5757
    %v5809 = vunpack.c.h.bf16 %v5757
    %v5810 = vunpack.c.l.bf16 %v5758
    %v5811 = vunpack.c.h.bf16 %v5758
    %v5812 = vunpack.c.l.bf16 %v5759
    %v5813 = vunpack.c.l.bf16 %v5760
    %v5814 = vunpack.c.h.bf16 %v5760
    %v5815 = vunpack.c.l.bf16 %v5761
    %v5816 = vunpack.c.h.bf16 %v5761
    %v5817 = vunpack.c.l.bf16 %v5762
    %v5818 = vunpack.c.h.bf16 %v5762
    %v5819 = vunpack.c.l.bf16 %v5763
    %vm5820 = vcmask 1040384
    %v5821 = vsel %vm5820, %v5424, %v5481
    %v5822 = vsel %vm5820, %v5431, %v5488
    %v5823 = vsel %vm5820, %v5438, %v5495
    %v5824 = vsel %vm5820, %v5445, %v5502
    %v5825 = vsel %vm5820, %v5452, %v5509
    %v5826 = vsel %vm5820, %v5459, %v5516
    %v5827 = vsel %vm5820, %v5467, %v5523
    %vm5828 = vcmask 523264
    %v5830 = vsel %vm5828, %v5827, 0
    %5832 = vmatprep.subr.mxu0 0.0
    %5833 = vmatpush1.msra.mxu0 %v5628
    %5834 = vmatprep.subr.mxu0 0.0
    %5835 = vmatpush1.msra.mxu0 %v5629
    %5836 = vmatprep.subr.mxu0 0.0
    %5837 = vmatpush1.msra.mxu0 %v5630
    %5838 = vmatprep.subr.mxu0 0.0
    %5839 = vmatpush1.msra.mxu0 %v5631
    %5840 = vmatprep.subr.mxu0 0.0
    %5841 = vmatpush1.msra.mxu0 %v5632
    %5842 = vmatprep.subr.mxu0 0.0
    %5843 = vmatpush1.msra.mxu0 %v5633
    %5844 = vmatprep.subr.mxu0 0.0
    %5845 = vmatpush1.msra.mxu0 %v5634
    %5846 = vmatprep.subr.mxu0 0.0
    %5847 = vmatpush1.msra.mxu0 %v5635
    %5848 = vmatprep.subr.mxu0 0.0
    %5849 = vmatpush1.msra.mxu0 %v5636
    %5850 = vmatprep.subr.mxu0 0.0
    %5851 = vmatpush1.msra.mxu0 %v5637
    %5852 = vmatprep.subr.mxu0 0.0
    %5853 = vmatpush1.msra.mxu0 %v5638
    %5854 = vmatprep.subr.mxu0 0.0
    %5855 = vmatpush1.msra.mxu0 %v5639
    %5856 = vmatprep.subr.mxu0 0.0
    %5857 = vmatpush1.msra.mxu0 %v5640
    %5858 = vmatprep.subr.mxu0 0.0
    %5859 = vmatpush1.msra.mxu0 %v5641
    %5860 = vmatprep.subr.mxu0 0.0
    %5861 = vmatpush1.msra.mxu0 %v5642
    %5862 = vmatprep.subr.mxu0 0.0
    %5863 = vmatpush1.msra.mxu0 %v5643
    %5864 = vmatprep.subr.mxu0 0.0
    %5865 = vmatpush1.msra.mxu0 %v5644
    %5866 = vmatprep.subr.mxu0 0.0
    %5867 = vmatpush1.msra.mxu0 %v5645
    %5868 = vmatprep.subr.mxu0 0.0
    %5869 = vmatpush1.msra.mxu0 %v5646
    %5870 = vmatprep.subr.mxu0 0.0
    %5871 = vmatpush1.msra.mxu0 %v5647
    %5872 = vmatprep.subr.mxu0 0.0
    %5873 = vmatpush1.msra.mxu0 %v5648
    %5874 = vmatprep.subr.mxu0 0.0
    %5875 = vmatpush1.msra.mxu0 %v5649
    %5876 = vmatprep.subr.mxu0 0.0
    %5877 = vmatpush1.msra.mxu0 %v5650
    %5878 = vmatprep.subr.mxu0 0.0
    %5879 = vmatpush1.msra.mxu0 %v5651
    %5880 = vmatprep.subr.mxu0 0.0
    %5881 = vmatpush1.msra.mxu0 %v5652
    %5882 = vmatprep.subr.mxu0 0.0
    %5883 = vmatpush1.msra.mxu0 %v5653
    %5884 = vmatprep.subr.mxu0 0.0
    %5885 = vmatpush1.msra.mxu0 %v5654
    %5886 = vmatprep.subr.mxu0 0.0
    %5887 = vmatpush1.msra.mxu0 %v5655
    %5888 = vmatprep.subr.mxu0 0.0
    %5889 = vmatpush1.msra.mxu0 %v5656
    %5890 = vmatprep.subr.mxu0 0.0
    %5891 = vmatpush1.msra.mxu0 %v5657
    %5892 = vmatprep.subr.mxu0 0.0
    %5893 = vmatpush1.msra.mxu0 %v5658
    %5894 = vmatprep.subr.mxu0 0.0
    %5895 = vmatpush1.msra.mxu0 %v5659
    %5896 = vmatprep.mubr.f32.mxu0 %v5822
    %5897 = vmatmul.mubr.f32.gmra.mrb[0].mxu0 %v5821
    %v5898 = vpop.f32.mrb[0].mxu0
    %v5899 = vadd.f32 0.0, %v5898
    %v5900 = vpop.f32.mrb[0].mxu0
    %5901 = vdwg.mxu0
    %5902 = vmatprep.subr.mxu0 0.0
    %5903 = vmatpush1.msra.mxu0 %v5660
    %5904 = vmatprep.subr.mxu0 0.0
    %5905 = vmatpush1.msra.mxu0 %v5661
    %5906 = vmatprep.subr.mxu0 0.0
    %5907 = vmatpush1.msra.mxu0 %v5662
    %5908 = vmatprep.subr.mxu0 0.0
    %5909 = vmatpush1.msra.mxu0 %v5663
    %5910 = vmatprep.subr.mxu0 0.0
    %5911 = vmatpush1.msra.mxu0 %v5664
    %5912 = vmatprep.subr.mxu0 0.0
    %5913 = vmatpush1.msra.mxu0 %v5665
    %5914 = vmatprep.subr.mxu0 0.0
    %5915 = vmatpush1.msra.mxu0 %v5666
    %5916 = vmatprep.subr.mxu0 0.0
    %5917 = vmatpush1.msra.mxu0 %v5667
    %5918 = vmatprep.subr.mxu0 0.0
    %5919 = vmatpush1.msra.mxu0 %v5668
    %5920 = vmatprep.subr.mxu0 0.0
    %5921 = vmatpush1.msra.mxu0 %v5669
    %5922 = vmatprep.subr.mxu0 0.0
    %5923 = vmatpush1.msra.mxu0 %v5670
    %5924 = vmatprep.subr.mxu0 0.0
    %5925 = vmatpush1.msra.mxu0 %v5671
    %5926 = vmatprep.subr.mxu0 0.0
    %5927 = vmatpush1.msra.mxu0 %v5672
    %5928 = vmatprep.subr.mxu0 0.0
    %5929 = vmatpush1.msra.mxu0 %v5673
    %5930 = vmatprep.subr.mxu0 0.0
    %5931 = vmatpush1.msra.mxu0 %v5674
    %5932 = vmatprep.subr.mxu0 0.0
    %5933 = vmatpush1.msra.mxu0 %v5675
    %5934 = vmatprep.subr.mxu0 0.0
    %5935 = vmatpush1.msra.mxu0 %v5676
    %5936 = vmatprep.subr.mxu0 0.0
    %5937 = vmatpush1.msra.mxu0 %v5677
    %5938 = vmatprep.subr.mxu0 0.0
    %5939 = vmatpush1.msra.mxu0 %v5678
    %5940 = vmatprep.subr.mxu0 0.0
    %5941 = vmatpush1.msra.mxu0 %v5679
    %5942 = vmatprep.subr.mxu0 0.0
    %5943 = vmatpush1.msra.mxu0 %v5680
    %5944 = vmatprep.subr.mxu0 0.0
    %5945 = vmatpush1.msra.mxu0 %v5681
    %5946 = vmatprep.subr.mxu0 0.0
    %5947 = vmatpush1.msra.mxu0 %v5682
    %5948 = vmatprep.subr.mxu0 0.0
    %5949 = vmatpush1.msra.mxu0 %v5683
    %5950 = vmatprep.subr.mxu0 0.0
    %5951 = vmatpush1.msra.mxu0 %v5684
    %5952 = vmatprep.subr.mxu0 0.0
    %5953 = vmatpush1.msra.mxu0 %v5685
    %5954 = vmatprep.subr.mxu0 0.0
    %5955 = vmatpush1.msra.mxu0 %v5686
    %5956 = vmatprep.subr.mxu0 0.0
    %5957 = vmatpush1.msra.mxu0 %v5687
    %5958 = vmatprep.subr.mxu0 0.0
    %5959 = vmatpush1.msra.mxu0 %v5688
    %5960 = vmatprep.subr.mxu0 0.0
    %5961 = vmatpush1.msra.mxu0 %v5689
    %5962 = vmatprep.subr.mxu0 0.0
    %5963 = vmatpush1.msra.mxu0 %v5690
    %5964 = vmatprep.subr.mxu0 0.0
    %5965 = vmatpush1.msra.mxu0 %v5691
    %5966 = vmatprep.mubr.f32.mxu0 %v5824
    %5967 = vmatmul.mubr.f32.gmra.mrb[0].mxu0 %v5823
    %v5968 = vpop.f32.mrb[0].mxu0
    %v5969 = vadd.f32 %v5899, %v5968
    %v5970 = vpop.f32.mrb[0].mxu0
    %5971 = vdwg.mxu0
    %5972 = vmatprep.subr.mxu0 0.0
    %5973 = vmatpush1.msra.mxu0 %v5692
    %5974 = vmatprep.subr.mxu0 0.0
    %5975 = vmatpush1.msra.mxu0 %v5693
    %5976 = vmatprep.subr.mxu0 0.0
    %5977 = vmatpush1.msra.mxu0 %v5694
    %5978 = vmatprep.subr.mxu0 0.0
    %5979 = vmatpush1.msra.mxu0 %v5695
    %5980 = vmatprep.subr.mxu0 0.0
    %5981 = vmatpush1.msra.mxu0 %v5696
    %5982 = vmatprep.subr.mxu0 0.0
    %5983 = vmatpush1.msra.mxu0 %v5697
    %5984 = vmatprep.subr.mxu0 0.0
    %5985 = vmatpush1.msra.mxu0 %v5698
    %5986 = vmatprep.subr.mxu0 0.0
    %5987 = vmatpush1.msra.mxu0 %v5699
    %5988 = vmatprep.subr.mxu0 0.0
    %5989 = vmatpush1.msra.mxu0 %v5700
    %5990 = vmatprep.subr.mxu0 0.0
    %5991 = vmatpush1.msra.mxu0 %v5701
    %5992 = vmatprep.subr.mxu0 0.0
    %5993 = vmatpush1.msra.mxu0 %v5702
    %5994 = vmatprep.subr.mxu0 0.0
    %5995 = vmatpush1.msra.mxu0 %v5703
    %5996 = vmatprep.subr.mxu0 0.0
    %5997 = vmatpush1.msra.mxu0 %v5704
    %5998 = vmatprep.subr.mxu0 0.0
    %5999 = vmatpush1.msra.mxu0 %v5705
    %6000 = vmatprep.subr.mxu0 0.0
    %6001 = vmatpush1.msra.mxu0 %v5706
    %6002 = vmatprep.subr.mxu0 0.0
    %6003 = vmatpush1.msra.mxu0 %v5707
    %6004 = vmatprep.subr.mxu0 0.0
    %6005 = vmatpush1.msra.mxu0 %v5708
    %6006 = vmatprep.subr.mxu0 0.0
    %6007 = vmatpush1.msra.mxu0 %v5709
    %6008 = vmatprep.subr.mxu0 0.0
    %6009 = vmatpush1.msra.mxu0 %v5710
    %6010 = vmatprep.subr.mxu0 0.0
    %6011 = vmatpush1.msra.mxu0 %v5711
    %6012 = vmatprep.subr.mxu0 0.0
    %6013 = vmatpush1.msra.mxu0 %v5712
    %6014 = vmatprep.subr.mxu0 0.0
    %6015 = vmatpush1.msra.mxu0 %v5713
    %6016 = vmatprep.subr.mxu0 0.0
    %6017 = vmatpush1.msra.mxu0 %v5714
    %6018 = vmatprep.subr.mxu0 0.0
    %6019 = vmatpush1.msra.mxu0 %v5715
    %6020 = vmatprep.subr.mxu0 0.0
    %6021 = vmatpush1.msra.mxu0 %v5716
    %6022 = vmatprep.subr.mxu0 0.0
    %6023 = vmatpush1.msra.mxu0 %v5717
    %6024 = vmatprep.subr.mxu0 0.0
    %6025 = vmatpush1.msra.mxu0 %v5718
    %6026 = vmatprep.subr.mxu0 0.0
    %6027 = vmatpush1.msra.mxu0 %v5719
    %6028 = vmatprep.subr.mxu0 0.0
    %6029 = vmatpush1.msra.mxu0 %v5720
    %6030 = vmatprep.subr.mxu0 0.0
    %6031 = vmatpush1.msra.mxu0 %v5721
    %6032 = vmatprep.subr.mxu0 0.0
    %6033 = vmatpush1.msra.mxu0 %v5722
    %6034 = vmatprep.subr.mxu0 0.0
    %6035 = vmatpush1.msra.mxu0 %v5723
    %6036 = vmatprep.mubr.f32.mxu0 %v5826
    %6037 = vmatmul.mubr.f32.gmra.mrb[0].mxu0 %v5825
    %v6038 = vpop.f32.mrb[0].mxu0
    %v6039 = vadd.f32 %v5969, %v6038
    %v6040 = vpop.f32.mrb[0].mxu0
    %6041 = vdwg.mxu0
    %6042 = vmatprep.subr.mxu0 0.0
    %6043 = vmatpush1.msra.mxu0 %v5724
    %6044 = vmatprep.subr.mxu0 0.0
    %6045 = vmatpush1.msra.mxu0 %v5725
    %6046 = vmatprep.subr.mxu0 0.0
    %6047 = vmatpush1.msra.mxu0 %v5726
    %6048 = vmatprep.subr.mxu0 0.0
    %6049 = vmatpush1.msra.mxu0 %v5727
    %6050 = vmatprep.subr.mxu0 0.0
    %6051 = vmatpush1.msra.mxu0 %v5728
    %6052 = vmatprep.subr.mxu0 0.0
    %6053 = vmatpush1.msra.mxu0 %v5729
    %6054 = vmatprep.subr.mxu0 0.0
    %6055 = vmatpush1.msra.mxu0 %v5730
    %6056 = vmatprep.subr.mxu0 0.0
    %6057 = vmatpush1.msra.mxu0 %v5731
    %6058 = vmatprep.subr.mxu0 0.0
    %6059 = vmatpush1.msra.mxu0 0.0
    %6060 = vmatprep.subr.mxu0 0.0
    %6061 = vmatpush1.msra.mxu0 0.0
    %6062 = vmatprep.subr.mxu0 0.0
    %6063 = vmatpush1.msra.mxu0 0.0
    %6064 = vmatprep.subr.mxu0 0.0
    %6065 = vmatpush1.msra.mxu0 0.0
    %6066 = vmatprep.subr.mxu0 0.0
    %6067 = vmatpush1.msra.mxu0 0.0
    %6068 = vmatprep.subr.mxu0 0.0
    %6069 = vmatpush1.msra.mxu0 0.0
    %6070 = vmatprep.subr.mxu0 0.0
    %6071 = vmatpush1.msra.mxu0 0.0
    %6072 = vmatprep.subr.mxu0 0.0
    %6073 = vmatpush1.msra.mxu0 0.0
    %6074 = vmatprep.subr.mxu0 0.0
    %6075 = vmatpush1.msra.mxu0 0.0
    %6076 = vmatprep.subr.mxu0 0.0
    %6077 = vmatpush1.msra.mxu0 0.0
    %6078 = vmatprep.subr.mxu0 0.0
    %6079 = vmatpush1.msra.mxu0 0.0
    %6080 = vmatprep.subr.mxu0 0.0
    %6081 = vmatpush1.msra.mxu0 0.0
    %6082 = vmatprep.subr.mxu0 0.0
    %6083 = vmatpush1.msra.mxu0 0.0
    %6084 = vmatprep.subr.mxu0 0.0
    %6085 = vmatpush1.msra.mxu0 0.0
    %6086 = vmatprep.subr.mxu0 0.0
    %6087 = vmatpush1.msra.mxu0 0.0
    %6088 = vmatprep.subr.mxu0 0.0
    %6089 = vmatpush1.msra.mxu0 0.0
    %6090 = vmatprep.subr.mxu0 0.0
    %6091 = vmatpush1.msra.mxu0 0.0
    %6092 = vmatprep.subr.mxu0 0.0
    %6093 = vmatpush1.msra.mxu0 0.0
    %6094 = vmatprep.subr.mxu0 0.0
    %6095 = vmatpush1.msra.mxu0 0.0
    %6096 = vmatprep.subr.mxu0 0.0
    %6097 = vmatpush1.msra.mxu0 0.0
    %6098 = vmatprep.subr.mxu0 0.0
    %6099 = vmatpush1.msra.mxu0 0.0
    %6100 = vmatprep.subr.mxu0 0.0
    %6101 = vmatpush1.msra.mxu0 0.0
    %6102 = vmatprep.subr.mxu0 0.0
    %6103 = vmatpush1.msra.mxu0 0.0
    %6104 = vmatprep.subr.mxu0 0.0
    %6105 = vmatpush1.msra.mxu0 0.0
    %6106 = vmatprep.mubr.f32.mxu0 0.0
    %6107 = vmatmul.mubr.f32.gmra.mrb[0].mxu0 %v5830
    %v6108 = vpop.f32.mrb[0].mxu0
    %v6109 = vadd.f32 %v6039, %v6108
    %v6110 = vpop.f32.mrb[0].mxu0
    %6111 = vdwg.mxu0
    %v6112 = vmul.f32 %v6109, 0.03846154
    %v6113 = vmul.f32 %v6112, %v6112
    %v6115 = vrot.slane %v6113, 7
    %v6117 = vsub.f32 %v6112, %v6115
    %v6118 = vadd.f32 %v6117, 1e-05
    %v6119 = vrsqrt.pop %v6118
    %v6122 = vunpack.c.l.s4 1966171168
    %v6123 = vunpack.c.0.s8 %v6122
    %v6124 = vlaneseq
    %v6125 = vshrl.u32 %v6124, 7
    %v6126 = vsub.s32 %v6123, %v6125
    %v6127 = vrot.slane %v6119, %v6126
    %v6128 = vcombine.high %v6127, %v6127
    %v6130 = vunpack.c.l.s4 1966171168
    %v6131 = vunpack.c.0.s8 %v6130
    %v6132 = vlaneseq
    %v6133 = vshrl.u32 %v6132, 7
    %v6134 = vsub.s32 %v6131, %v6133
    %v6135 = vrot.slane %v6128, %v6134
    %v6137 = vmul.f32 %v5416, %v6135
    %v6138 = vmul.f32 %v6112, %v6137
    %v6139 = vsub.f32 %v5417, %v6138
    %v6141 = vlaneseq
    %v6142 = vshrl.u32 %v6141, 7
    %v6143 = vsub.s32 0, %v6142
    %v6144 = vrot.slane %v6139, %v6143
    %v6146 = vsel %vm5820, %v6137, %v6144
    %v6148 = vsel %vm5828, %v6146, 0
    %6150 = vmatprep.subr.mxu0 %v5765
    %6151 = vmatpush1.msra.mxu0 %v5764
    %6152 = vmatprep.subr.mxu0 %v5772
    %6153 = vmatpush1.msra.mxu0 %v5771
    %6154 = vmatprep.subr.mxu0 %v5779
    %6155 = vmatpush1.msra.mxu0 %v5778
    %6156 = vmatprep.subr.mxu0 %v5786
    %6157 = vmatpush1.msra.mxu0 %v5785
    %6158 = vmatprep.subr.mxu0 %v5793
    %6159 = vmatpush1.msra.mxu0 %v5792
    %6160 = vmatprep.subr.mxu0 %v5800
    %6161 = vmatpush1.msra.mxu0 %v5799
    %6162 = vmatprep.subr.mxu0 %v5807
    %6163 = vmatpush1.msra.mxu0 %v5806
    %6164 = vmatprep.subr.mxu0 %v5814
    %6165 = vmatpush1.msra.mxu0 %v5813
    %6166 = vmatprep.subr.mxu0 0.0
    %6167 = vmatpush1.msra.mxu0 0.0
    %6168 = vmatprep.subr.mxu0 0.0
    %6169 = vmatpush1.msra.mxu0 0.0
    %6170 = vmatprep.subr.mxu0 0.0
    %6171 = vmatpush1.msra.mxu0 0.0
    %6172 = vmatprep.subr.mxu0 0.0
    %6173 = vmatpush1.msra.mxu0 0.0
    %6174 = vmatprep.subr.mxu0 0.0
    %6175 = vmatpush1.msra.mxu0 0.0
    %6176 = vmatprep.subr.mxu0 0.0
    %6177 = vmatpush1.msra.mxu0 0.0
    %6178 = vmatprep.subr.mxu0 0.0
    %6179 = vmatpush1.msra.mxu0 0.0
    %6180 = vmatprep.subr.mxu0 0.0
    %6181 = vmatpush1.msra.mxu0 0.0
    %6182 = vmatprep.subr.mxu0 0.0
    %6183 = vmatpush1.msra.mxu0 0.0
    %6184 = vmatprep.subr.mxu0 0.0
    %6185 = vmatpush1.msra.mxu0 0.0
    %6186 = vmatprep.subr.mxu0 0.0
    %6187 = vmatpush1.msra.mxu0 0.0
    %6188 = vmatprep.subr.mxu0 0.0
    %6189 = vmatpush1.msra.mxu0 0.0
    %6190 = vmatprep.subr.mxu0 0.0
    %6191 = vmatpush1.msra.mxu0 0.0
    %6192 = vmatprep.subr.mxu0 0.0
    %6193 = vmatpush1.msra.mxu0 0.0
    %6194 = vmatprep.subr.mxu0 0.0
    %6195 = vmatpush1.msra.mxu0 0.0
    %6196 = vmatprep.subr.mxu0 0.0
    %6197 = vmatpush1.msra.mxu0 0.0
    %6198 = vmatprep.subr.mxu0 0.0
    %6199 = vmatpush1.msra.mxu0 0.0
    %6200 = vmatprep.subr.mxu0 0.0
    %6201 = vmatpush1.msra.mxu0 0.0
    %6202 = vmatprep.subr.mxu0 0.0
    %6203 = vmatpush1.msra.mxu0 0.0
    %6204 = vmatprep.subr.mxu0 0.0
    %6205 = vmatpush1.msra.mxu0 0.0
    %6206 = vmatprep.subr.mxu0 0.0
    %6207 = vmatpush1.msra.mxu0 0.0
    %6208 = vmatprep.subr.mxu0 0.0
    %6209 = vmatpush1.msra.mxu0 0.0
    %6210 = vmatprep.subr.mxu0 0.0
    %6211 = vmatpush1.msra.mxu0 0.0
    %6212 = vmatprep.subr.mxu0 0.0
    %6213 = vmatpush1.msra.mxu0 0.0
    %6214 = vmatprep.mubr.f32.mxu0 0.0
    %6215 = vmatmul.mubr.f32.gmra.mrb[0].mxu0 %v6148
    %v6216 = vpop.f32.mrb[0].mxu0
    %v6217 = vadd.f32 0.0, %v6216
    %v6218 = vpop.f32.mrb[0].mxu0
    %v6219 = vadd.f32 0.0, %v6218
    %6220 = vdwg.mxu0
    %6221 = vmatprep.subr.mxu0 %v5767
    %6222 = vmatpush1.msra.mxu0 %v5766
    %6223 = vmatprep.subr.mxu0 %v5774
    %6224 = vmatpush1.msra.mxu0 %v5773
    %6225 = vmatprep.subr.mxu0 %v5781
    %6226 = vmatpush1.msra.mxu0 %v5780
    %6227 = vmatprep.subr.mxu0 %v5788
    %6228 = vmatpush1.msra.mxu0 %v5787
    %6229 = vmatprep.subr.mxu0 %v5795
    %6230 = vmatpush1.msra.mxu0 %v5794
    %6231 = vmatprep.subr.mxu0 %v5802
    %6232 = vmatpush1.msra.mxu0 %v5801
    %6233 = vmatprep.subr.mxu0 %v5809
    %6234 = vmatpush1.msra.mxu0 %v5808
    %6235 = vmatprep.subr.mxu0 %v5816
    %6236 = vmatpush1.msra.mxu0 %v5815
    %6237 = vmatprep.subr.mxu0 0.0
    %6238 = vmatpush1.msra.mxu0 0.0
    %6239 = vmatprep.subr.mxu0 0.0
    %6240 = vmatpush1.msra.mxu0 0.0
    %6241 = vmatprep.subr.mxu0 0.0
    %6242 = vmatpush1.msra.mxu0 0.0
    %6243 = vmatprep.subr.mxu0 0.0
    %6244 = vmatpush1.msra.mxu0 0.0
    %6245 = vmatprep.subr.mxu0 0.0
    %6246 = vmatpush1.msra.mxu0 0.0
    %6247 = vmatprep.subr.mxu0 0.0
    %6248 = vmatpush1.msra.mxu0 0.0
    %6249 = vmatprep.subr.mxu0 0.0
    %6250 = vmatpush1.msra.mxu0 0.0
    %6251 = vmatprep.subr.mxu0 0.0
    %6252 = vmatpush1.msra.mxu0 0.0
    %6253 = vmatprep.subr.mxu0 0.0
    %6254 = vmatpush1.msra.mxu0 0.0
    %6255 = vmatprep.subr.mxu0 0.0
    %6256 = vmatpush1.msra.mxu0 0.0
    %6257 = vmatprep.subr.mxu0 0.0
    %6258 = vmatpush1.msra.mxu0 0.0
    %6259 = vmatprep.subr.mxu0 0.0
    %6260 = vmatpush1.msra.mxu0 0.0
    %6261 = vmatprep.subr.mxu0 0.0
    %6262 = vmatpush1.msra.mxu0 0.0
    %6263 = vmatprep.subr.mxu0 0.0
    %6264 = vmatpush1.msra.mxu0 0.0
    %6265 = vmatprep.subr.mxu0 0.0
    %6266 = vmatpush1.msra.mxu0 0.0
    %6267 = vmatprep.subr.mxu0 0.0
    %6268 = vmatpush1.msra.mxu0 0.0
    %6269 = vmatprep.subr.mxu0 0.0
    %6270 = vmatpush1.msra.mxu0 0.0
    %6271 = vmatprep.subr.mxu0 0.0
    %6272 = vmatpush1.msra.mxu0 0.0
    %6273 = vmatprep.subr.mxu0 0.0
    %6274 = vmatpush1.msra.mxu0 0.0
    %6275 = vmatprep.subr.mxu0 0.0
    %6276 = vmatpush1.msra.mxu0 0.0
    %6277 = vmatprep.subr.mxu0 0.0
    %6278 = vmatpush1.msra.mxu0 0.0
    %6279 = vmatprep.subr.mxu0 0.0
    %6280 = vmatpush1.msra.mxu0 0.0
    %6281 = vmatprep.subr.mxu0 0.0
    %6282 = vmatpush1.msra.mxu0 0.0
    %6283 = vmatprep.subr.mxu0 0.0
    %6284 = vmatpush1.msra.mxu0 0.0
    %6285 = vmatprep.mubr.f32.mxu0 0.0
    %6286 = vmatmul.mubr.f32.gmra.mrb[0].mxu0 %v6148
    %v6287 = vpop.f32.mrb[0].mxu0
    %v6288 = vadd.f32 0.0, %v6287
    %v6289 = vpop.f32.mrb[0].mxu0
    %v6290 = vadd.f32 0.0, %v6289
    %6291 = vdwg.mxu0
    %6292 = vmatprep.subr.mxu0 %v5769
    %6293 = vmatpush1.msra.mxu0 %v5768
    %6294 = vmatprep.subr.mxu0 %v5776
    %6295 = vmatpush1.msra.mxu0 %v5775
    %6296 = vmatprep.subr.mxu0 %v5783
    %6297 = vmatpush1.msra.mxu0 %v5782
    %6298 = vmatprep.subr.mxu0 %v5790
    %6299 = vmatpush1.msra.mxu0 %v5789
    %6300 = vmatprep.subr.mxu0 %v5797
    %6301 = vmatpush1.msra.mxu0 %v5796
    %6302 = vmatprep.subr.mxu0 %v5804
    %6303 = vmatpush1.msra.mxu0 %v5803
    %6304 = vmatprep.subr.mxu0 %v5811
    %6305 = vmatpush1.msra.mxu0 %v5810
    %6306 = vmatprep.subr.mxu0 %v5818
    %6307 = vmatpush1.msra.mxu0 %v5817
    %6308 = vmatprep.subr.mxu0 0.0
    %6309 = vmatpush1.msra.mxu0 0.0
    %6310 = vmatprep.subr.mxu0 0.0
    %6311 = vmatpush1.msra.mxu0 0.0
    %6312 = vmatprep.subr.mxu0 0.0
    %6313 = vmatpush1.msra.mxu0 0.0
    %6314 = vmatprep.subr.mxu0 0.0
    %6315 = vmatpush1.msra.mxu0 0.0
    %6316 = vmatprep.subr.mxu0 0.0
    %6317 = vmatpush1.msra.mxu0 0.0
    %6318 = vmatprep.subr.mxu0 0.0
    %6319 = vmatpush1.msra.mxu0 0.0
    %6320 = vmatprep.subr.mxu0 0.0
    %6321 = vmatpush1.msra.mxu0 0.0
    %6322 = vmatprep.subr.mxu0 0.0
    %6323 = vmatpush1.msra.mxu0 0.0
    %6324 = vmatprep.subr.mxu0 0.0
    %6325 = vmatpush1.msra.mxu0 0.0
    %6326 = vmatprep.subr.mxu0 0.0
    %6327 = vmatpush1.msra.mxu0 0.0
    %6328 = vmatprep.subr.mxu0 0.0
    %6329 = vmatpush1.msra.mxu0 0.0
    %6330 = vmatprep.subr.mxu0 0.0
    %6331 = vmatpush1.msra.mxu0 0.0
    %6332 = vmatprep.subr.mxu0 0.0
    %6333 = vmatpush1.msra.mxu0 0.0
    %6334 = vmatprep.subr.mxu0 0.0
    %6335 = vmatpush1.msra.mxu0 0.0
    %6336 = vmatprep.subr.mxu0 0.0
    %6337 = vmatpush1.msra.mxu0 0.0
    %6338 = vmatprep.subr.mxu0 0.0
    %6339 = vmatpush1.msra.mxu0 0.0
    %6340 = vmatprep.subr.mxu0 0.0
    %6341 = vmatpush1.msra.mxu0 0.0
    %6342 = vmatprep.subr.mxu0 0.0
    %6343 = vmatpush1.msra.mxu0 0.0
    %6344 = vmatprep.subr.mxu0 0.0
    %6345 = vmatpush1.msra.mxu0 0.0
    %6346 = vmatprep.subr.mxu0 0.0
    %6347 = vmatpush1.msra.mxu0 0.0
    %6348 = vmatprep.subr.mxu0 0.0
    %6349 = vmatpush1.msra.mxu0 0.0
    %6350 = vmatprep.subr.mxu0 0.0
    %6351 = vmatpush1.msra.mxu0 0.0
    %6352 = vmatprep.subr.mxu0 0.0
    %6353 = vmatpush1.msra.mxu0 0.0
    %6354 = vmatprep.subr.mxu0 0.0
    %6355 = vmatpush1.msra.mxu0 0.0
    %6356 = vmatprep.mubr.f32.mxu0 0.0
    %6357 = vmatmul.mubr.f32.gmra.mrb[0].mxu0 %v6148
    %v6358 = vpop.f32.mrb[0].mxu0
    %v6359 = vadd.f32 0.0, %v6358
    %v6360 = vpop.f32.mrb[0].mxu0
    %v6361 = vadd.f32 0.0, %v6360
    %6362 = vdwg.mxu0
    %6363 = vmatprep.subr.mxu0 0.0
    %6364 = vmatpush1.msra.mxu0 %v5770
    %6365 = vmatprep.subr.mxu0 0.0
    %6366 = vmatpush1.msra.mxu0 %v5777
    %6367 = vmatprep.subr.mxu0 0.0
    %6368 = vmatpush1.msra.mxu0 %v5784
    %6369 = vmatprep.subr.mxu0 0.0
    %6370 = vmatpush1.msra.mxu0 %v5791
    %6371 = vmatprep.subr.mxu0 0.0
    %6372 = vmatpush1.msra.mxu0 %v5798
    %6373 = vmatprep.subr.mxu0 0.0
    %6374 = vmatpush1.msra.mxu0 %v5805
    %6375 = vmatprep.subr.mxu0 0.0
    %6376 = vmatpush1.msra.mxu0 %v5812
    %6377 = vmatprep.subr.mxu0 0.0
    %6378 = vmatpush1.msra.mxu0 %v5819
    %6379 = vmatprep.subr.mxu0 0.0
    %6380 = vmatpush1.msra.mxu0 0.0
    %6381 = vmatprep.subr.mxu0 0.0
    %6382 = vmatpush1.msra.mxu0 0.0
    %6383 = vmatprep.subr.mxu0 0.0
    %6384 = vmatpush1.msra.mxu0 0.0
    %6385 = vmatprep.subr.mxu0 0.0
    %6386 = vmatpush1.msra.mxu0 0.0
    %6387 = vmatprep.subr.mxu0 0.0
    %6388 = vmatpush1.msra.mxu0 0.0
    %6389 = vmatprep.subr.mxu0 0.0
    %6390 = vmatpush1.msra.mxu0 0.0
    %6391 = vmatprep.subr.mxu0 0.0
    %6392 = vmatpush1.msra.mxu0 0.0
    %6393 = vmatprep.subr.mxu0 0.0
    %6394 = vmatpush1.msra.mxu0 0.0
    %6395 = vmatprep.subr.mxu0 0.0
    %6396 = vmatpush1.msra.mxu0 0.0
    %6397 = vmatprep.subr.mxu0 0.0
    %6398 = vmatpush1.msra.mxu0 0.0
    %6399 = vmatprep.subr.mxu0 0.0
    %6400 = vmatpush1.msra.mxu0 0.0
    %6401 = vmatprep.subr.mxu0 0.0
    %6402 = vmatpush1.msra.mxu0 0.0
    %6403 = vmatprep.subr.mxu0 0.0
    %6404 = vmatpush1.msra.mxu0 0.0
    %6405 = vmatprep.subr.mxu0 0.0
    %6406 = vmatpush1.msra.mxu0 0.0
    %6407 = vmatprep.subr.mxu0 0.0
    %6408 = vmatpush1.msra.mxu0 0.0
    %6409 = vmatprep.subr.mxu0 0.0
    %6410 = vmatpush1.msra.mxu0 0.0
    %6411 = vmatprep.subr.mxu0 0.0
    %6412 = vmatpush1.msra.mxu0 0.0
    %6413 = vmatprep.subr.mxu0 0.0
    %6414 = vmatpush1.msra.mxu0 0.0
    %6415 = vmatprep.subr.mxu0 0.0
    %6416 = vmatpush1.msra.mxu0 0.0
    %6417 = vmatprep.subr.mxu0 0.0
    %6418 = vmatpush1.msra.mxu0 0.0
    %6419 = vmatprep.subr.mxu0 0.0
    %6420 = vmatpush1.msra.mxu0 0.0
    %6421 = vmatprep.subr.mxu0 0.0
    %6422 = vmatpush1.msra.mxu0 0.0
    %6423 = vmatprep.subr.mxu0 0.0
    %6424 = vmatpush1.msra.mxu0 0.0
    %6425 = vmatprep.subr.mxu0 0.0
    %6426 = vmatpush1.msra.mxu0 0.0
    %6427 = vmatprep.mubr.f32.mxu0 0.0
    %6428 = vmatmul.mubr.f32.gmra.mrb[0].mxu0 %v6148
    %v6429 = vpop.f32.mrb[0].mxu0
    %v6430 = vadd.f32 0.0, %v6429
    %v6431 = vpop.f32.mrb[0].mxu0
    %6432 = vdwg.mxu0
    %v6433 = vlaneseq
    %v6434 = vshrl.u32 %v6433, 7
    %v6435 = vsub.s32 0, %v6434
    %v6436 = vrot.slane %v6217, %v6435
    %v6437 = vlaneseq
    %v6438 = vshrl.u32 %v6437, 7
    %v6439 = vsub.s32 0, %v6438
    %v6440 = vrot.slane %v6219, %v6439
    %v6441 = vlaneseq
    %v6442 = vshrl.u32 %v6441, 7
    %v6443 = vsub.s32 0, %v6442
    %v6444 = vrot.slane %v6288, %v6443
    %v6445 = vlaneseq
    %v6446 = vshrl.u32 %v6445, 7
    %v6447 = vsub.s32 0, %v6446
    %v6448 = vrot.slane %v6290, %v6447
    %v6449 = vlaneseq
    %v6450 = vshrl.u32 %v6449, 7
    %v6451 = vsub.s32 0, %v6450
    %v6452 = vrot.slane %v6359, %v6451
    %v6453 = vlaneseq
    %v6454 = vshrl.u32 %v6453, 7
    %v6455 = vsub.s32 0, %v6454
    %v6456 = vrot.slane %v6361, %v6455
    %v6457 = vlaneseq
    %v6458 = vshrl.u32 %v6457, 7
    %v6459 = vsub.s32 0, %v6458
    %v6460 = vrot.slane %v6430, %v6459
    %v6461 = vmul.f32 %v5044, %v6436
    %v6462 = vmul.f32 %v5046, %v6440
    %v6463 = vmul.f32 %v5167, %v6444
    %v6464 = vmul.f32 %v5169, %v6448
    %v6465 = vmul.f32 %v5290, %v6452
    %v6466 = vmul.f32 %v5292, %v6456
    %v6467 = vmul.f32 %v5411, %v6460
    %v6468 = vlaneseq
    %v6469 = vshrl.u32 %v6468, 7
    %v6470 = vsub.s32 1, %v6469
    %v6471 = vrot.slane %v6217, %v6470
    %v6472 = vlaneseq
    %v6473 = vshrl.u32 %v6472, 7
    %v6474 = vsub.s32 1, %v6473
    %v6475 = vrot.slane %v6219, %v6474
    %v6476 = vlaneseq
    %v6477 = vshrl.u32 %v6476, 7
    %v6478 = vsub.s32 1, %v6477
    %v6479 = vrot.slane %v6288, %v6478
    %v6480 = vlaneseq
    %v6481 = vshrl.u32 %v6480, 7
    %v6482 = vsub.s32 1, %v6481
    %v6483 = vrot.slane %v6290, %v6482
    %v6484 = vlaneseq
    %v6485 = vshrl.u32 %v6484, 7
    %v6486 = vsub.s32 1, %v6485
    %v6487 = vrot.slane %v6359, %v6486
    %v6488 = vlaneseq
    %v6489 = vshrl.u32 %v6488, 7
    %v6490 = vsub.s32 1, %v6489
    %v6491 = vrot.slane %v6361, %v6490
    %v6492 = vlaneseq
    %v6493 = vshrl.u32 %v6492, 7
    %v6494 = vsub.s32 1, %v6493
    %v6495 = vrot.slane %v6430, %v6494
    %v6496 = vadd.f32 %v6461, %v6471
    %v6497 = vadd.f32 %v6462, %v6475
    %v6498 = vadd.f32 %v6463, %v6479
    %v6499 = vadd.f32 %v6464, %v6483
    %v6500 = vadd.f32 %v6465, %v6487
    %v6501 = vadd.f32 %v6466, %v6491
    %v6502 = vadd.f32 %v6467, %v6495
    %v6503 = vmax.f32 %v6496, 0.0
    %v6504 = vmax.f32 %v6497, 0.0
    %v6505 = vmax.f32 %v6498, 0.0
    %v6506 = vmax.f32 %v6499, 0.0
    %v6507 = vmax.f32 %v6500, 0.0
    %v6508 = vmax.f32 %v6501, 0.0
    %v6509 = vmax.f32 %v6502, 0.0
    %v6510 = vld [vmem:[%s15] sm:$0xf]
    %v6511 = vld [vmem:[%s15 + $0x4] sm:$0xf]
    %v6512 = vld [vmem:[%s15 + $0x8] sm:$0xf]
    %v6513 = vld [vmem:[%s15 + $0xc] sm:$0xf]
    %v6514 = vld [vmem:[%s15 + $0x10] sm:$0xf]
    %v6515 = vld [vmem:[%s15 + $0x14] sm:$0xf]
    %v6516 = vld [vmem:[%s15 + $0x18] sm:$0xf]
    %v6517 = vld [vmem:[%s15 + $0x1c] sm:$0xf]
    %v6518 = vld [vmem:[%s15 + $0x20] sm:$0xf]
    %v6519 = vld [vmem:[%s15 + $0x24] sm:$0xf]
    %v6520 = vld [vmem:[%s15 + $0x28] sm:$0xf]
    %v6521 = vld [vmem:[%s15 + $0x2c] sm:$0xf]
    %v6522 = vld [vmem:[%s15 + $0x30] sm:$0xf]
    %v6523 = vld [vmem:[%s15 + $0x34] sm:$0xf]
    %v6524 = vld [vmem:[%s15 + $0x38] sm:$0xf]
    %v6525 = vld [vmem:[%s15 + $0x3c] sm:$0xf]
    %v6526 = vld [vmem:[%s15 + $0x40] sm:$0xf]
    %v6527 = vld [vmem:[%s15 + $0x44] sm:$0xf]
    %v6528 = vld [vmem:[%s15 + $0x48] sm:$0xf]
    %v6529 = vld [vmem:[%s15 + $0x4c] sm:$0xf]
    %v6530 = vld [vmem:[%s15 + $0x50] sm:$0xf]
    %v6531 = vld [vmem:[%s15 + $0x54] sm:$0xf]
    %v6532 = vld [vmem:[%s15 + $0x58] sm:$0xf]
    %v6533 = vld [vmem:[%s15 + $0x5c] sm:$0xf]
    %v6534 = vld [vmem:[%s15 + $0x60] sm:$0xf]
    %v6535 = vld [vmem:[%s15 + $0x64] sm:$0xf]
    %v6536 = vld [vmem:[%s15 + $0x68] sm:$0xf]
    %v6537 = vld [vmem:[%s15 + $0x6c] sm:$0xf]
    %v6538 = vld [vmem:[%s15 + $0x70] sm:$0xf]
    %v6539 = vld [vmem:[%s15 + $0x74] sm:$0xf]
    %v6540 = vld [vmem:[%s15 + $0x78] sm:$0xf]
    %v6541 = vld [vmem:[%s15 + $0x7c] sm:$0xf]
    %v6542 = vld [vmem:[%s15 + $0x80] sm:$0xf]
    %v6543 = vld [vmem:[%s15 + $0x84] sm:$0xf]
    %v6544 = vld [vmem:[%s15 + $0x88] sm:$0xf]
    %v6545 = vld [vmem:[%s15 + $0x8c] sm:$0xf]
    %v6546 = vld [vmem:[%s15 + $0x90] sm:$0xf]
    %v6547 = vld [vmem:[%s15 + $0x94] sm:$0xf]
    %v6548 = vld [vmem:[%s15 + $0x98] sm:$0xf]
    %v6549 = vld [vmem:[%s15 + $0x9c] sm:$0xf]
    %v6550 = vld [vmem:[%s15 + $0xa0] sm:$0xf]
    %v6551 = vld [vmem:[%s15 + $0xa4] sm:$0xf]
    %v6552 = vld [vmem:[%s15 + $0xa8] sm:$0xf]
    %v6553 = vld [vmem:[%s15 + $0xac] sm:$0xf]
    %v6554 = vld [vmem:[%s15 + $0xb0] sm:$0xf]
    %v6555 = vld [vmem:[%s15 + $0xb4] sm:$0xf]
    %v6556 = vld [vmem:[%s15 + $0xb8] sm:$0xf]
    %v6557 = vld [vmem:[%s15 + $0xbc] sm:$0xf]
    %v6558 = vld [vmem:[%s15 + $0xc0] sm:$0xf]
    %v6559 = vld [vmem:[%s15 + $0xc4] sm:$0xf]
    %v6560 = vld [vmem:[%s15 + $0xc8] sm:$0xf]
    %v6561 = vld [vmem:[%s15 + $0xcc] sm:$0xf]
    %v6562 = vld [vmem:[%s15 + $0xd0] sm:$0xf]
    %v6563 = vld [vmem:[%s15 + $0xd4] sm:$0xf]
    %v6564 = vld [vmem:[%s15 + $0xd8] sm:$0xf]
    %v6565 = vld [vmem:[%s15 + $0xdc] sm:$0xf]
    %v6566 = vld [vmem:[%s15 + $0xe0] sm:$0xf]
    %v6567 = vld [vmem:[%s15 + $0xe4] sm:$0xf]
    %v6568 = vld [vmem:[%s15 + $0xe8] sm:$0xf]
    %v6569 = vld [vmem:[%s15 + $0xec] sm:$0xf]
    %v6570 = vld [vmem:[%s15 + $0xf0] sm:$0xf]
    %v6571 = vld [vmem:[%s15 + $0xf4] sm:$0xf]
    %v6572 = vld [vmem:[%s15 + $0xf8] sm:$0xf]
    %v6573 = vld [vmem:[%s15 + $0xfc] sm:$0xf]
    %v6574 = vld [vmem:[%s15 + $0x100] sm:$0xf]
    %v6575 = vld [vmem:[%s15 + $0x104] sm:$0xf]
    %v6576 = vld [vmem:[%s15 + $0x108] sm:$0xf]
    %v6577 = vld [vmem:[%s15 + $0x10c] sm:$0xf]
    %v6578 = vld [vmem:[%s15 + $0x110] sm:$0xf]
    %v6579 = vld [vmem:[%s15 + $0x114] sm:$0xf]
    %v6580 = vld [vmem:[%s15 + $0x118] sm:$0xf]
    %v6581 = vld [vmem:[%s15 + $0x11c] sm:$0xf]
    %v6582 = vld [vmem:[%s15 + $0x120] sm:$0xf]
    %v6583 = vld [vmem:[%s15 + $0x124] sm:$0xf]
    %v6584 = vld [vmem:[%s15 + $0x128] sm:$0xf]
    %v6585 = vld [vmem:[%s15 + $0x12c] sm:$0xf]
    %v6586 = vld [vmem:[%s15 + $0x130] sm:$0xf]
    %v6587 = vld [vmem:[%s15 + $0x134] sm:$0xf]
    %v6588 = vld [vmem:[%s15 + $0x138] sm:$0xf]
    %v6589 = vld [vmem:[%s15 + $0x13c] sm:$0xf]
    %v6590 = vld [vmem:[%s15 + $0x140] sm:$0xf]
    %v6591 = vld [vmem:[%s15 + $0x144] sm:$0xf]
    %v6592 = vld [vmem:[%s15 + $0x148] sm:$0xf]
    %v6593 = vld [vmem:[%s15 + $0x14c] sm:$0xf]
    %v6594 = vld [vmem:[%s15 + $0x150] sm:$0xf]
    %v6595 = vld [vmem:[%s15 + $0x154] sm:$0xf]
    %v6596 = vld [vmem:[%s15 + $0x158] sm:$0xf]
    %v6597 = vld [vmem:[%s15 + $0x15c] sm:$0xf]
    %v6598 = vld [vmem:[%s15 + $0x160] sm:$0xf]
    %v6599 = vld [vmem:[%s15 + $0x164] sm:$0xf]
    %v6600 = vld [vmem:[%s15 + $0x168] sm:$0xf]
    %v6601 = vld [vmem:[%s15 + $0x16c] sm:$0xf]
    %v6602 = vld [vmem:[%s15 + $0x170] sm:$0xf]
    %v6603 = vld [vmem:[%s15 + $0x174] sm:$0xf]
    %v6604 = vld [vmem:[%s15 + $0x178] sm:$0xf]
    %v6605 = vld [vmem:[%s15 + $0x17c] sm:$0xf]
    %v6606 = vld [vmem:[%s15 + $0x180] sm:$0xf]
    %v6607 = vld [vmem:[%s15 + $0x184] sm:$0xf]
    %v6608 = vld [vmem:[%s15 + $0x188] sm:$0xf]
    %v6609 = vld [vmem:[%s15 + $0x18c] sm:$0xf]
    %v6610 = vld [vmem:[%s15 + $0x190] sm:$0xf]
    %v6611 = vld [vmem:[%s15 + $0x194] sm:$0xf]
    %v6612 = vld [vmem:[%s15 + $0x198] sm:$0xf]
    %v6613 = vld [vmem:[%s15 + $0x19c] sm:$0xf]
    %v6614 = vld [vmem:[%s16] sm:$0x1]
    %v6615 = vpack.c.bf16 %v6503, %v6503
    %v6616 = vpack.c.bf16 %v6504, %v6504
    %v6617 = vpack.c.bf16 %v6505, %v6505
    %v6618 = vpack.c.bf16 %v6506, %v6506
    %v6619 = vpack.c.bf16 %v6507, %v6507
    %v6620 = vpack.c.bf16 %v6508, %v6508
    %v6621 = vpack.c.bf16 %v6509, %v6509
    %v6623 = vlaneseq
    %v6624 = vshrl.u32 %v6623, 7
    %v6625 = vsub.s32 0, %v6624
    %v6626 = vrot.slane %v6614, %v6625
    %v6732 = vunpack.c.l.b16 %v6510
    %v6733 = vunpack.c.l.b16 %v6511
    %v6734 = vunpack.c.l.b16 %v6512
    %v6735 = vunpack.c.l.b16 %v6513
    %v6736 = vunpack.c.l.b16 %v6514
    %v6737 = vunpack.c.l.b16 %v6515
    %v6738 = vunpack.c.l.b16 %v6516
    %v6739 = vunpack.c.l.b16 %v6517
    %v6740 = vunpack.c.l.b16 %v6518
    %v6741 = vunpack.c.l.b16 %v6519
    %v6742 = vunpack.c.l.b16 %v6520
    %v6743 = vunpack.c.l.b16 %v6521
    %v6744 = vunpack.c.l.b16 %v6522
    %v6745 = vunpack.c.l.b16 %v6523
    %v6746 = vunpack.c.l.b16 %v6524
    %v6747 = vunpack.c.l.b16 %v6525
    %v6748 = vunpack.c.l.b16 %v6526
    %v6749 = vunpack.c.l.b16 %v6527
    %v6750 = vunpack.c.l.b16 %v6528
    %v6751 = vunpack.c.l.b16 %v6529
    %v6752 = vunpack.c.l.b16 %v6530
    %v6753 = vunpack.c.l.b16 %v6531
    %v6754 = vunpack.c.l.b16 %v6532
    %v6755 = vunpack.c.l.b16 %v6533
    %v6756 = vunpack.c.l.b16 %v6534
    %v6757 = vunpack.c.l.b16 %v6535
    %v6758 = vunpack.c.l.b16 %v6536
    %v6759 = vunpack.c.l.b16 %v6537
    %v6760 = vunpack.c.l.b16 %v6538
    %v6761 = vunpack.c.l.b16 %v6539
    %v6762 = vunpack.c.l.b16 %v6540
    %v6763 = vunpack.c.l.b16 %v6541
    %v6764 = vunpack.c.l.b16 %v6542
    %v6765 = vunpack.c.l.b16 %v6543
    %v6766 = vunpack.c.l.b16 %v6544
    %v6767 = vunpack.c.l.b16 %v6545
    %v6768 = vunpack.c.l.b16 %v6546
    %v6769 = vunpack.c.l.b16 %v6547
    %v6770 = vunpack.c.l.b16 %v6548
    %v6771 = vunpack.c.l.b16 %v6549
    %v6772 = vunpack.c.l.b16 %v6550
    %v6773 = vunpack.c.l.b16 %v6551
    %v6774 = vunpack.c.l.b16 %v6552
    %v6775 = vunpack.c.l.b16 %v6553
    %v6776 = vunpack.c.l.b16 %v6554
    %v6777 = vunpack.c.l.b16 %v6555
    %v6778 = vunpack.c.l.b16 %v6556
    %v6779 = vunpack.c.l.b16 %v6557
    %v6780 = vunpack.c.l.b16 %v6558
    %v6781 = vunpack.c.l.b16 %v6559
    %v6782 = vunpack.c.l.b16 %v6560
    %v6783 = vunpack.c.l.b16 %v6561
    %v6784 = vunpack.c.l.b16 %v6562
    %v6785 = vunpack.c.l.b16 %v6563
    %v6786 = vunpack.c.l.b16 %v6564
    %v6787 = vunpack.c.l.b16 %v6565
    %v6788 = vunpack.c.l.b16 %v6566
    %v6789 = vunpack.c.l.b16 %v6567
    %v6790 = vunpack.c.l.b16 %v6568
    %v6791 = vunpack.c.l.b16 %v6569
    %v6792 = vunpack.c.l.b16 %v6570
    %v6793 = vunpack.c.l.b16 %v6571
    %v6794 = vunpack.c.l.b16 %v6572
    %v6795 = vunpack.c.l.b16 %v6573
    %v6796 = vunpack.c.l.b16 %v6574
    %v6797 = vunpack.c.l.b16 %v6575
    %v6798 = vunpack.c.l.b16 %v6576
    %v6799 = vunpack.c.l.b16 %v6577
    %v6800 = vunpack.c.l.b16 %v6578
    %v6801 = vunpack.c.l.b16 %v6579
    %v6802 = vunpack.c.l.b16 %v6580
    %v6803 = vunpack.c.l.b16 %v6581
    %v6804 = vunpack.c.l.b16 %v6582
    %v6805 = vunpack.c.l.b16 %v6583
    %v6806 = vunpack.c.l.b16 %v6584
    %v6807 = vunpack.c.l.b16 %v6585
    %v6808 = vunpack.c.l.b16 %v6586
    %v6809 = vunpack.c.l.b16 %v6587
    %v6810 = vunpack.c.l.b16 %v6588
    %v6811 = vunpack.c.l.b16 %v6589
    %v6812 = vunpack.c.l.b16 %v6590
    %v6813 = vunpack.c.l.b16 %v6591
    %v6814 = vunpack.c.l.b16 %v6592
    %v6815 = vunpack.c.l.b16 %v6593
    %v6816 = vunpack.c.l.b16 %v6594
    %v6817 = vunpack.c.l.b16 %v6595
    %v6818 = vunpack.c.l.b16 %v6596
    %v6819 = vunpack.c.l.b16 %v6597
    %v6820 = vunpack.c.l.b16 %v6598
    %v6821 = vunpack.c.l.b16 %v6599
    %v6822 = vunpack.c.l.b16 %v6600
    %v6823 = vunpack.c.l.b16 %v6601
    %v6824 = vunpack.c.l.b16 %v6602
    %v6825 = vunpack.c.l.b16 %v6603
    %v6826 = vunpack.c.l.b16 %v6604
    %v6827 = vunpack.c.l.b16 %v6605
    %v6828 = vunpack.c.l.b16 %v6606
    %v6829 = vunpack.c.l.b16 %v6607
    %v6830 = vunpack.c.l.b16 %v6608
    %v6831 = vunpack.c.l.b16 %v6609
    %v6832 = vunpack.c.l.b16 %v6610
    %v6833 = vunpack.c.l.b16 %v6611
    %v6834 = vunpack.c.l.b16 %v6612
    %v6835 = vunpack.c.l.b16 %v6613
    %v6836 = vpack.c.b16 %v6733, %v6732
    %v6837 = vpack.c.b16 %v6735, %v6734
    %v6838 = vpack.c.b16 %v6737, %v6736
    %v6839 = vpack.c.b16 %v6739, %v6738
    %v6840 = vpack.c.b16 %v6741, %v6740
    %v6841 = vpack.c.b16 %v6743, %v6742
    %v6842 = vpack.c.b16 %v6745, %v6744
    %v6843 = vpack.c.b16 %v6747, %v6746
    %v6844 = vpack.c.b16 %v6749, %v6748
    %v6845 = vpack.c.b16 %v6751, %v6750
    %v6846 = vpack.c.b16 %v6753, %v6752
    %v6847 = vpack.c.b16 %v6755, %v6754
    %v6848 = vpack.c.b16 %v6757, %v6756
    %v6849 = vpack.c.b16 %v6759, %v6758
    %v6850 = vpack.c.b16 %v6761, %v6760
    %v6851 = vpack.c.b16 %v6763, %v6762
    %v6852 = vpack.c.b16 %v6765, %v6764
    %v6853 = vpack.c.b16 %v6767, %v6766
    %v6854 = vpack.c.b16 %v6769, %v6768
    %v6855 = vpack.c.b16 %v6771, %v6770
    %v6856 = vpack.c.b16 %v6773, %v6772
    %v6857 = vpack.c.b16 %v6775, %v6774
    %v6858 = vpack.c.b16 %v6777, %v6776
    %v6859 = vpack.c.b16 %v6779, %v6778
    %v6860 = vpack.c.b16 %v6781, %v6780
    %v6861 = vpack.c.b16 %v6783, %v6782
    %v6862 = vpack.c.b16 %v6785, %v6784
    %v6863 = vpack.c.b16 %v6787, %v6786
    %v6864 = vpack.c.b16 %v6789, %v6788
    %v6865 = vpack.c.b16 %v6791, %v6790
    %v6866 = vpack.c.b16 %v6793, %v6792
    %v6867 = vpack.c.b16 %v6795, %v6794
    %v6868 = vpack.c.b16 %v6797, %v6796
    %v6869 = vpack.c.b16 %v6799, %v6798
    %v6870 = vpack.c.b16 %v6801, %v6800
    %v6871 = vpack.c.b16 %v6803, %v6802
    %v6872 = vpack.c.b16 %v6805, %v6804
    %v6873 = vpack.c.b16 %v6807, %v6806
    %v6874 = vpack.c.b16 %v6809, %v6808
    %v6875 = vpack.c.b16 %v6811, %v6810
    %v6876 = vpack.c.b16 %v6813, %v6812
    %v6877 = vpack.c.b16 %v6815, %v6814
    %v6878 = vpack.c.b16 %v6817, %v6816
    %v6879 = vpack.c.b16 %v6819, %v6818
    %v6880 = vpack.c.b16 %v6821, %v6820
    %v6881 = vpack.c.b16 %v6823, %v6822
    %v6882 = vpack.c.b16 %v6825, %v6824
    %v6883 = vpack.c.b16 %v6827, %v6826
    %v6884 = vpack.c.b16 %v6829, %v6828
    %v6885 = vpack.c.b16 %v6831, %v6830
    %v6886 = vpack.c.b16 %v6833, %v6832
    %v6887 = vpack.c.b16 %v6835, %v6834
    %v6941 = vsel %vm5828, %v6621, 0
    %6943 = vmatprep.subr.bf16.mxu0 0
    %6944 = vmatpush1.bf16.msra.mxu0 %v6836
    %6945 = vmatprep.subr.bf16.mxu0 0
    %6946 = vmatpush1.bf16.msra.mxu0 %v6837
    %6947 = vmatprep.subr.bf16.mxu0 0
    %6948 = vmatpush1.bf16.msra.mxu0 %v6838
    %6949 = vmatprep.subr.bf16.mxu0 0
    %6950 = vmatpush1.bf16.msra.mxu0 %v6839
    %6951 = vmatprep.subr.bf16.mxu0 0
    %6952 = vmatpush1.bf16.msra.mxu0 %v6840
    %6953 = vmatprep.subr.bf16.mxu0 0
    %6954 = vmatpush1.bf16.msra.mxu0 %v6841
    %6955 = vmatprep.subr.bf16.mxu0 0
    %6956 = vmatpush1.bf16.msra.mxu0 %v6842
    %6957 = vmatprep.subr.bf16.mxu0 0
    %6958 = vmatpush1.bf16.msra.mxu0 %v6843
    %6959 = vmatprep.subr.bf16.mxu0 0
    %6960 = vmatpush1.bf16.msra.mxu0 %v6844
    %6961 = vmatprep.subr.bf16.mxu0 0
    %6962 = vmatpush1.bf16.msra.mxu0 %v6845
    %6963 = vmatprep.subr.bf16.mxu0 0
    %6964 = vmatpush1.bf16.msra.mxu0 %v6846
    %6965 = vmatprep.subr.bf16.mxu0 0
    %6966 = vmatpush1.bf16.msra.mxu0 %v6847
    %6967 = vmatprep.subr.bf16.mxu0 0
    %6968 = vmatpush1.bf16.msra.mxu0 %v6848
    %6969 = vmatprep.subr.bf16.mxu0 0
    %6970 = vmatpush1.bf16.msra.mxu0 %v6849
    %6971 = vmatprep.subr.bf16.mxu0 0
    %6972 = vmatpush1.bf16.msra.mxu0 %v6850
    %6973 = vmatprep.subr.bf16.mxu0 0
    %6974 = vmatpush1.bf16.msra.mxu0 %v6851
    %6975 = vmatprep.mubr.bf16.mxu0 %v6616
    %6976 = vmatmul.mubr.bf16.gmra.mrb[0].mxu0 %v6615
    %v6977 = vpop.f32.mrb[0].mxu0
    %v6978 = vadd.f32 %v6626, %v6977
    %v6979 = vpop.f32.mrb[0].mxu0
    %v6980 = vpop.f32.mrb[0].mxu0
    %v6981 = vpop.f32.mrb[0].mxu0
    %6982 = vdwg.mxu0
    %6983 = vmatprep.subr.bf16.mxu0 0
    %6984 = vmatpush1.bf16.msra.mxu0 %v6852
    %6985 = vmatprep.subr.bf16.mxu0 0
    %6986 = vmatpush1.bf16.msra.mxu0 %v6853
    %6987 = vmatprep.subr.bf16.mxu0 0
    %6988 = vmatpush1.bf16.msra.mxu0 %v6854
    %6989 = vmatprep.subr.bf16.mxu0 0
    %6990 = vmatpush1.bf16.msra.mxu0 %v6855
    %6991 = vmatprep.subr.bf16.mxu0 0
    %6992 = vmatpush1.bf16.msra.mxu0 %v6856
    %6993 = vmatprep.subr.bf16.mxu0 0
    %6994 = vmatpush1.bf16.msra.mxu0 %v6857
    %6995 = vmatprep.subr.bf16.mxu0 0
    %6996 = vmatpush1.bf16.msra.mxu0 %v6858
    %6997 = vmatprep.subr.bf16.mxu0 0
    %6998 = vmatpush1.bf16.msra.mxu0 %v6859
    %6999 = vmatprep.subr.bf16.mxu0 0
    %7000 = vmatpush1.bf16.msra.mxu0 %v6860
    %7001 = vmatprep.subr.bf16.mxu0 0
    %7002 = vmatpush1.bf16.msra.mxu0 %v6861
    %7003 = vmatprep.subr.bf16.mxu0 0
    %7004 = vmatpush1.bf16.msra.mxu0 %v6862
    %7005 = vmatprep.subr.bf16.mxu0 0
    %7006 = vmatpush1.bf16.msra.mxu0 %v6863
    %7007 = vmatprep.subr.bf16.mxu0 0
    %7008 = vmatpush1.bf16.msra.mxu0 %v6864
    %7009 = vmatprep.subr.bf16.mxu0 0
    %7010 = vmatpush1.bf16.msra.mxu0 %v6865
    %7011 = vmatprep.subr.bf16.mxu0 0
    %7012 = vmatpush1.bf16.msra.mxu0 %v6866
    %7013 = vmatprep.subr.bf16.mxu0 0
    %7014 = vmatpush1.bf16.msra.mxu0 %v6867
    %7015 = vmatprep.mubr.bf16.mxu0 %v6618
    %7016 = vmatmul.mubr.bf16.gmra.mrb[0].mxu0 %v6617
    %v7017 = vpop.f32.mrb[0].mxu0
    %v7018 = vadd.f32 %v6978, %v7017
    %v7019 = vpop.f32.mrb[0].mxu0
    %v7020 = vpop.f32.mrb[0].mxu0
    %v7021 = vpop.f32.mrb[0].mxu0
    %7022 = vdwg.mxu0
    %7023 = vmatprep.subr.bf16.mxu0 0
    %7024 = vmatpush1.bf16.msra.mxu0 %v6868
    %7025 = vmatprep.subr.bf16.mxu0 0
    %7026 = vmatpush1.bf16.msra.mxu0 %v6869
    %7027 = vmatprep.subr.bf16.mxu0 0
    %7028 = vmatpush1.bf16.msra.mxu0 %v6870
    %7029 = vmatprep.subr.bf16.mxu0 0
    %7030 = vmatpush1.bf16.msra.mxu0 %v6871
    %7031 = vmatprep.subr.bf16.mxu0 0
    %7032 = vmatpush1.bf16.msra.mxu0 %v6872
    %7033 = vmatprep.subr.bf16.mxu0 0
    %7034 = vmatpush1.bf16.msra.mxu0 %v6873
    %7035 = vmatprep.subr.bf16.mxu0 0
    %7036 = vmatpush1.bf16.msra.mxu0 %v6874
    %7037 = vmatprep.subr.bf16.mxu0 0
    %7038 = vmatpush1.bf16.msra.mxu0 %v6875
    %7039 = vmatprep.subr.bf16.mxu0 0
    %7040 = vmatpush1.bf16.msra.mxu0 %v6876
    %7041 = vmatprep.subr.bf16.mxu0 0
    %7042 = vmatpush1.bf16.msra.mxu0 %v6877
    %7043 = vmatprep.subr.bf16.mxu0 0
    %7044 = vmatpush1.bf16.msra.mxu0 %v6878
    %7045 = vmatprep.subr.bf16.mxu0 0
    %7046 = vmatpush1.bf16.msra.mxu0 %v6879
    %7047 = vmatprep.subr.bf16.mxu0 0
    %7048 = vmatpush1.bf16.msra.mxu0 %v6880
    %7049 = vmatprep.subr.bf16.mxu0 0
    %7050 = vmatpush1.bf16.msra.mxu0 %v6881
    %7051 = vmatprep.subr.bf16.mxu0 0
    %7052 = vmatpush1.bf16.msra.mxu0 %v6882
    %7053 = vmatprep.subr.bf16.mxu0 0
    %7054 = vmatpush1.bf16.msra.mxu0 %v6883
    %7055 = vmatprep.mubr.bf16.mxu0 %v6620
    %7056 = vmatmul.mubr.bf16.gmra.mrb[0].mxu0 %v6619
    %v7057 = vpop.f32.mrb[0].mxu0
    %v7058 = vadd.f32 %v7018, %v7057
    %v7059 = vpop.f32.mrb[0].mxu0
    %v7060 = vpop.f32.mrb[0].mxu0
    %v7061 = vpop.f32.mrb[0].mxu0
    %7062 = vdwg.mxu0
    %7063 = vmatprep.subr.bf16.mxu0 0
    %7064 = vmatpush1.bf16.msra.mxu0 %v6884
    %7065 = vmatprep.subr.bf16.mxu0 0
    %7066 = vmatpush1.bf16.msra.mxu0 %v6885
    %7067 = vmatprep.subr.bf16.mxu0 0
    %7068 = vmatpush1.bf16.msra.mxu0 %v6886
    %7069 = vmatprep.subr.bf16.mxu0 0
    %7070 = vmatpush1.bf16.msra.mxu0 %v6887
    %7071 = vmatprep.subr.bf16.mxu0 0
    %7072 = vmatpush1.bf16.msra.mxu0 0
    %7073 = vmatprep.subr.bf16.mxu0 0
    %7074 = vmatpush1.bf16.msra.mxu0 0
    %7075 = vmatprep.subr.bf16.mxu0 0
    %7076 = vmatpush1.bf16.msra.mxu0 0
    %7077 = vmatprep.subr.bf16.mxu0 0
    %7078 = vmatpush1.bf16.msra.mxu0 0
    %7079 = vmatprep.subr.bf16.mxu0 0
    %7080 = vmatpush1.bf16.msra.mxu0 0
    %7081 = vmatprep.subr.bf16.mxu0 0
    %7082 = vmatpush1.bf16.msra.mxu0 0
    %7083 = vmatprep.subr.bf16.mxu0 0
    %7084 = vmatpush1.bf16.msra.mxu0 0
    %7085 = vmatprep.subr.bf16.mxu0 0
    %7086 = vmatpush1.bf16.msra.mxu0 0
    %7087 = vmatprep.subr.bf16.mxu0 0
    %7088 = vmatpush1.bf16.msra.mxu0 0
    %7089 = vmatprep.subr.bf16.mxu0 0
    %7090 = vmatpush1.bf16.msra.mxu0 0
    %7091 = vmatprep.subr.bf16.mxu0 0
    %7092 = vmatpush1.bf16.msra.mxu0 0
    %7093 = vmatprep.subr.bf16.mxu0 0
    %7094 = vmatpush1.bf16.msra.mxu0 0
    %7095 = vmatprep.mubr.bf16.mxu0 0
    %7096 = vmatmul.mubr.bf16.gmra.mrb[0].mxu0 %v6941
    %v7097 = vpop.f32.mrb[0].mxu0
    %v7098 = vadd.f32 %v7058, %v7097
    %v7099 = vpop.f32.mrb[0].mxu0
    %v7100 = vpop.f32.mrb[0].mxu0
    %v7101 = vpop.f32.mrb[0].mxu0
    %7102 = vdwg.mxu0
    %vm7103 = vcmask 222208
    %7104 = vst.msk [vmem:[#allocation2] sm:$0x3] %vm7103, %v7098
    // Predicated region
    $region70: #{tpu_custom_call.1} parent=1 // pred_check
      _
    $region71: #{tpu_custom_call.1} parent=1 // pred_check_branch
      %7106 = sbr.rel (0) target = $region73
    $region72: #{tpu_custom_call.1} parent=1 // pred_region
      %s7108 = ssub.s32 32, 32
      %7109 = vsyncadd [#allocation3], %s7108
      %s7111 = sshll.u32 [#allocation2], 4
      %s7112 = int_to_ptr.vmem [resolvable:$true] %s7111
      %7114 = dma.vmem_to_hbm [thread:$0]  %s7112, 32, %s17, [#allocation3]
    $region73: #{tpu_custom_call.1} parent=1 // pred_fallthru
      _
    // Predicated region
    $region74: #{tpu_custom_call.1} parent=1 // pred_check
      _
    $region75: #{tpu_custom_call.1} parent=1 // pred_check_branch
      %7116 = sbr.rel (0) target = $region77
    $region76: #{tpu_custom_call.1} parent=1 // pred_region
      %7117 = dma.done [#allocation3], 32
    $region77: #{tpu_custom_call.1} parent=1 // pred_fallthru
      _
    %7118 = vsyncpa [#allocation3], 1

</llo_original>
